<compile_context>
chip_gen: v7x
topology: tpu7x:2x2x1
jax: 0.10.0
libtpu: 0.0.40
codegen_flags: <defaults>
</compile_context>

<pallas_src>
import numpy as np

import jax
import jax.numpy as jnp
from jax.experimental import pallas as pl
from jax.experimental.pallas import tpu as pltpu


# ----------------------------------------------------------------------------
# One-time parameter packing (pure JAX/numpy, runs once outside the hot path)
# ----------------------------------------------------------------------------
def pack_params(p):
    f32 = jnp.float32
    K = 5
    w1 = p["conv1_w"].astype(f32)   # (6, 3, 5, 5)
    w2 = p["conv2_w"].astype(f32)   # (16, 6, 5, 5)
    fc1_w = p["fc1_w"].astype(f32)  # (120, 400)

    # conv1 banded weights: (5, 96, 168). row = c*32 + (w + kj), col = o*28 + w
    c, o, w, kj = np.meshgrid(np.arange(3), np.arange(6), np.arange(28),
                              np.arange(K), indexing="ij")
    w1b = jnp.zeros((K, 3 * 32, 6 * 28), f32)
    for ki in range(K):
        w1b = w1b.at[ki, c * 32 + w + kj, o * 28 + w].set(w1[o, c, ki, kj])

    # conv2 banded weights: (5, 84, 160). row = ci*14 + (w + kj), col = co*10 + w
    ci, co, w2i, kj2 = np.meshgrid(np.arange(6), np.arange(16), np.arange(10),
                                   np.arange(K), indexing="ij")
    w2b = jnp.zeros((K, 6 * 14, 16 * 10), f32)
    for ki in range(K):
        w2b = w2b.at[ki, ci * 14 + w2i + kj2, co * 10 + w2i].set(
            w2[co, ci, ki, kj2])

    # fc1 weights split per pooled row hp; torch flatten order (C, H, W).
    oc, wp, n = np.meshgrid(np.arange(16), np.arange(5), np.arange(120),
                            indexing="ij")
    wf1b = jnp.zeros((5, 16 * 5, 120), f32)
    for hp in range(5):
        wf1b = wf1b.at[hp, oc * 5 + wp, n].set(fc1_w[n, oc * 25 + hp * 5 + wp])

    # 0/1 selection matrices implementing the 2x2 stride-2 max-pool on the MXU.
    def row_select(rows_out):
        s = np.zeros((2, rows_out, 2 * rows_out), np.float32)
        r = np.arange(rows_out)
        s[0, r, 2 * r] = 1.0
        s[1, r, 2 * r + 1] = 1.0
        return jnp.asarray(s)

    def lane_select(channels, width_in):
        wo = width_in // 2
        s = np.zeros((2, channels * width_in, channels * wo), np.float32)
        wpp = np.arange(wo)
        for ch in range(channels):
            s[0, ch * width_in + 2 * wpp, ch * wo + wpp] = 1.0
            s[1, ch * width_in + 2 * wpp + 1, ch * wo + wpp] = 1.0
        return jnp.asarray(s)

    s1h = row_select(14)          # (2, 14, 28)
    s1w = lane_select(6, 28)      # (2, 168, 84)
    s2h = row_select(5)           # (2, 5, 10)
    s2w = lane_select(16, 10)     # (2, 160, 80)

    b1v = jnp.repeat(p["conv1_b"].astype(f32), 28).reshape(1, 168)
    b2v = jnp.repeat(p["conv2_b"].astype(f32), 10).reshape(1, 160)
    bf1 = p["fc1_b"].astype(f32).reshape(1, 120)
    bf2 = p["fc2_b"].astype(f32).reshape(1, 84)
    bf3 = p["fc3_b"].astype(f32).reshape(1, 10)
    wf2 = p["fc2_w"].astype(f32).T   # (120, 84)
    wf3 = p["fc3_w"].astype(f32).T   # (84, 10)

    return (w1b, b1v, s1h, s1w, w2b, b2v, s2h, s2w, wf1b, bf1, wf2, bf2, wf3, bf3)


# ----------------------------------------------------------------------------
# The fused kernel: one grid step = one image, everything stays in VMEM.
# ----------------------------------------------------------------------------
def _simple_cnn_kernel(x_ref, w1_ref, b1_ref, s1h_ref, s1w_ref,
                       w2_ref, b2_ref, s2h_ref, s2w_ref,
                       wf1_ref, bf1_ref, wf2_ref, bf2_ref, wf3_ref, bf3_ref,
                       o_ref, p1_scr, q2_scr):
    f32 = jnp.float32

    def mm(a, b):
        return jnp.dot(a, b, preferred_element_type=f32)

    # conv1 (3->6, 5x5, valid) as 5 banded matmuls on the VMEM-resident image.
    # x_ref: (32, 96), rows = h, lanes = c*32 + w.  Output rows = h, lanes = o*28 + w.
    acc1 = mm(x_ref[pl.ds(0, 28), :], w1_ref[0])
    for ki in range(1, 5):
        acc1 = acc1 + mm(x_ref[pl.ds(ki, 28), :], w1_ref[ki])
    y1 = jnp.maximum(acc1 + b1_ref[...], 0.0)                            # (28, 168)

    # maxpool1 2x2/2: rows via left 0/1-selection matmuls, lanes via right ones.
    ph = jnp.maximum(mm(s1h_ref[0], y1), mm(s1h_ref[1], y1))             # (14, 168)
    p1_scr[...] = jnp.maximum(mm(ph, s1w_ref[0]), mm(ph, s1w_ref[1]))    # (14, 84)

    # conv2 (6->16, 5x5, valid): rows = h2, lanes = oc*10 + w2.
    acc2 = mm(p1_scr[pl.ds(0, 10), :], w2_ref[0])
    for ki in range(1, 5):
        acc2 = acc2 + mm(p1_scr[pl.ds(ki, 10), :], w2_ref[ki])
    y2 = jnp.maximum(acc2 + b2_ref[...], 0.0)                            # (10, 160)

    # maxpool2 2x2/2.
    qh = jnp.maximum(mm(s2h_ref[0], y2), mm(s2h_ref[1], y2))             # (5, 160)
    q2_scr[...] = jnp.maximum(mm(qh, s2w_ref[0]), mm(qh, s2w_ref[1]))    # (5, 80)

    # Classifier; torch's view(-1, 400) flatten order is folded into wf1.
    f = mm(q2_scr[pl.ds(0, 1), :], wf1_ref[0])
    for hp in range(1, 5):
        f = f + mm(q2_scr[pl.ds(hp, 1), :], wf1_ref[hp])
    h1 = jnp.maximum(f + bf1_ref[...], 0.0)                              # (1, 120)
    h2 = jnp.maximum(mm(h1, wf2_ref[...]) + bf2_ref[...], 0.0)           # (1, 84)
    o_ref[0] = (mm(h2, wf3_ref[...]) + bf3_ref[...]).astype(o_ref.dtype)  # (1, 10)


def simple_cnn_forward(packed, x_nchw):
    B, C, H, W = x_nchw.shape
    assert (C, H, W) == (3, 32, 32), "SimpleCNN expects (B, 3, 32, 32) input"
    # Tiny input relayout in XLA: (B, 3, 32, 32) -> rows (b, h), lanes (c, w).
    x2d = jnp.transpose(x_nchw, (0, 2, 1, 3)).reshape(B * 32, 96).astype(jnp.float32)

    def const_spec(a):
        nd = a.ndim
        return pl.BlockSpec(a.shape, lambda b, nd=nd: (0,) * nd)

    in_specs = [pl.BlockSpec((32, 96), lambda b: (b, 0))]
    in_specs += [const_spec(a) for a in packed]

    out = pl.pallas_call(
        _simple_cnn_kernel,
        out_shape=jax.ShapeDtypeStruct((B, 1, 10), jnp.float32),
        grid=(B,),
        in_specs=in_specs,
        out_specs=pl.BlockSpec((1, 1, 10), lambda b: (b, 0, 0)),
        scratch_shapes=[
            pltpu.VMEM((14, 84), jnp.float32),   # pooled conv1 activations
            pltpu.VMEM((5, 80), jnp.float32),    # pooled conv2 activations
        ],
        compiler_params=pltpu.CompilerParams(
            dimension_semantics=("parallel",)),
    )(x2d, *packed)
    return out.reshape(B, 10)


# ----------------------------------------------------------------------------
# Plain-JAX reference (mirrors the PyTorch module exactly)
# ----------------------------------------------------------------------------
def _im2col(x_bhwc, k):
    B, H, W, C = x_bhwc.shape
    Ho, Wo = H - k + 1, W - k + 1
    cols = jnp.stack(
        [x_bhwc[:, i: i + Ho, j: j + Wo, :] for i in range(k) for j in range(k)],
        axis=3,
    )
    return cols.reshape(B * Ho * Wo, k * k * C), (B, Ho, Wo)


def _ref_linear(x, w, b, relu):
    y = x @ w + b
    return jnp.maximum(y, 0.0) if relu else y


def _ref_conv(x_bhwc, w_oikk, b, relu):
    O, I, kH, kW = w_oikk.shape
    cols, (B, Ho, Wo) = _im2col(x_bhwc, kH)
    w_mat = w_oikk.transpose(2, 3, 1, 0).reshape(kH * kW * I, O)
    return _ref_linear(cols, w_mat, b, relu).reshape(B, Ho, Wo, O)


def _ref_pool(x_bhwc):
    B, H, W, C = x_bhwc.shape
    return x_bhwc.reshape(B, H // 2, 2, W // 2, 2, C).max(axis=(2, 4))


def simple_cnn_reference(params, x_nchw):
    x = jnp.transpose(x_nchw, (0, 2, 3, 1))
    x = _ref_conv(x, params["conv1_w"], params["conv1_b"], True)
    x = _ref_pool(x)
    x = _ref_conv(x, params["conv2_w"], params["conv2_b"], True)
    x = _ref_pool(x)
    B = x.shape[0]
    x = jnp.transpose(x, (0, 3, 1, 2)).reshape(B, -1)
    x = _ref_linear(x, params["fc1_w"].T, params["fc1_b"], True)
    x = _ref_linear(x, params["fc2_w"].T, params["fc2_b"], True)
    x = _ref_linear(x, params["fc3_w"].T, params["fc3_b"], False)
    return x


def init_params(key, input_dim=400, hidden_dims=(120, 84), output_dim=10):
    ks = jax.random.split(key, 10)
    s = 0.1
    return {
        "conv1_w": s * jax.random.normal(ks[0], (6, 3, 5, 5), jnp.float32),
        "conv1_b": s * jax.random.normal(ks[1], (6,), jnp.float32),
        "conv2_w": s * jax.random.normal(ks[2], (16, 6, 5, 5), jnp.float32),
        "conv2_b": s * jax.random.normal(ks[3], (16,), jnp.float32),
        "fc1_w": s * jax.random.normal(ks[4], (hidden_dims[0], input_dim), jnp.float32),
        "fc1_b": s * jax.random.normal(ks[5], (hidden_dims[0],), jnp.float32),
        "fc2_w": s * jax.random.normal(ks[6], (hidden_dims[1], hidden_dims[0]), jnp.float32),
        "fc2_b": s * jax.random.normal(ks[7], (hidden_dims[1],), jnp.float32),
        "fc3_w": s * jax.random.normal(ks[8], (output_dim, hidden_dims[1]), jnp.float32),
        "fc3_b": s * jax.random.normal(ks[9], (output_dim,), jnp.float32),
    }


if __name__ == "__main__":
    key = jax.random.PRNGKey(0)
    pkey, xkey = jax.random.split(key)
    params = init_params(pkey, input_dim=16 * 5 * 5, hidden_dims=(120, 84), output_dim=10)

    # CIFAR-like input implied by the module: (B, 3, 32, 32) NCHW.
    x = jax.random.normal(xkey, (2, 3, 32, 32), jnp.float32)

    packed = pack_params(params)          # one-time weight packing
    fwd = jax.jit(simple_cnn_forward)
    out = jax.block_until_ready(fwd(packed, x))
    assert out.shape == (2, 10), out.shape

    ref = jax.block_until_ready(simple_cnn_reference(params, x))
    err = float(jnp.max(jnp.abs(out - ref)))
    assert jnp.allclose(out, ref, atol=1e-2, rtol=1e-2), f"max abs err = {err}"

    print("KERNEL_OK")
</pallas_src>

<mosaic_0001>
module attributes {stable_mosaic.version = 11 : i64} {
  func.func @_simple_cnn_kernel(%arg0: i32, %arg1: memref<32x96xf32, #tpu.memory_space<vmem>>, %arg2: memref<5x96x168xf32, #tpu.memory_space<vmem>>, %arg3: memref<1x168xf32, #tpu.memory_space<vmem>>, %arg4: memref<2x14x28xf32, #tpu.memory_space<vmem>>, %arg5: memref<2x168x84xf32, #tpu.memory_space<vmem>>, %arg6: memref<5x84x160xf32, #tpu.memory_space<vmem>>, %arg7: memref<1x160xf32, #tpu.memory_space<vmem>>, %arg8: memref<2x5x10xf32, #tpu.memory_space<vmem>>, %arg9: memref<2x160x80xf32, #tpu.memory_space<vmem>>, %arg10: memref<5x80x120xf32, #tpu.memory_space<vmem>>, %arg11: memref<1x120xf32, #tpu.memory_space<vmem>>, %arg12: memref<120x84xf32, #tpu.memory_space<vmem>>, %arg13: memref<1x84xf32, #tpu.memory_space<vmem>>, %arg14: memref<84x10xf32, #tpu.memory_space<vmem>>, %arg15: memref<1x10xf32, #tpu.memory_space<vmem>>, %arg16: memref<1x1x10xf32, #tpu.memory_space<vmem>>, %arg17: memref<14x84xf32, #tpu.memory_space<vmem>>, %arg18: memref<5x80xf32, #tpu.memory_space<vmem>>) attributes {dimension_semantics = [#tpu.dimension_semantics<parallel>], iteration_bounds = array<i64: 2>, scalar_prefetch = 0 : i64, scratch_operands = 2 : i64, tpu.core_type = #tpu.core_type<tc>, window_params = [{transform_indices = @transform_0, window_bounds = array<i64: 32, 96>}, {pipeline_mode = #tpu.pipeline_mode<synchronous>, transform_indices = @transform_1, window_bounds = array<i64: 5, 96, 168>}, {pipeline_mode = #tpu.pipeline_mode<synchronous>, transform_indices = @transform_2, window_bounds = array<i64: 1, 168>}, {pipeline_mode = #tpu.pipeline_mode<synchronous>, transform_indices = @transform_3, window_bounds = array<i64: 2, 14, 28>}, {pipeline_mode = #tpu.pipeline_mode<synchronous>, transform_indices = @transform_4, window_bounds = array<i64: 2, 168, 84>}, {pipeline_mode = #tpu.pipeline_mode<synchronous>, transform_indices = @transform_5, window_bounds = array<i64: 5, 84, 160>}, {pipeline_mode = #tpu.pipeline_mode<synchronous>, transform_indices = @transform_6, window_bounds = array<i64: 1, 160>}, {pipeline_mode = #tpu.pipeline_mode<synchronous>, transform_indices = @transform_7, window_bounds = array<i64: 2, 5, 10>}, {pipeline_mode = #tpu.pipeline_mode<synchronous>, transform_indices = @transform_8, window_bounds = array<i64: 2, 160, 80>}, {pipeline_mode = #tpu.pipeline_mode<synchronous>, transform_indices = @transform_9, window_bounds = array<i64: 5, 80, 120>}, {pipeline_mode = #tpu.pipeline_mode<synchronous>, transform_indices = @transform_10, window_bounds = array<i64: 1, 120>}, {pipeline_mode = #tpu.pipeline_mode<synchronous>, transform_indices = @transform_11, window_bounds = array<i64: 120, 84>}, {pipeline_mode = #tpu.pipeline_mode<synchronous>, transform_indices = @transform_12, window_bounds = array<i64: 1, 84>}, {pipeline_mode = #tpu.pipeline_mode<synchronous>, transform_indices = @transform_13, window_bounds = array<i64: 84, 10>}, {pipeline_mode = #tpu.pipeline_mode<synchronous>, transform_indices = @transform_14, window_bounds = array<i64: 1, 10>}, {transform_indices = @transform_15, window_bounds = array<i64: 1, 1, 10>}]} {
    %c0 = arith.constant 0 : index
    %c0_0 = arith.constant 0 : index
    %0 = vector.load %arg1[%c0, %c0_0] : memref<32x96xf32, #tpu.memory_space<vmem>>, vector<28x96xf32>
    %c0_1 = arith.constant 0 : index
    %c0_2 = arith.constant 0 : index
    %c0_3 = arith.constant 0 : index
    %1 = vector.load %arg2[%c0_1, %c0_2, %c0_3] : memref<5x96x168xf32, #tpu.memory_space<vmem>>, vector<1x96x168xf32>
    %2 = vector.shape_cast %1 : vector<1x96x168xf32> to vector<96x168xf32>
    %cst = arith.constant dense<0.000000e+00> : vector<28x168xf32>
    %3 = tpu.matmul %0, %2, %cst {dimension_numbers = #tpu.dot_dimension_numbers<[1], [0], [0], [1], [0, 0, 1, 1], [], []>} : vector<28x96xf32>, vector<96x168xf32>, vector<28x168xf32> -> vector<28x168xf32>
    %c1 = arith.constant 1 : index
    %c0_4 = arith.constant 0 : index
    %4 = vector.load %arg1[%c1, %c0_4] : memref<32x96xf32, #tpu.memory_space<vmem>>, vector<28x96xf32>
    %c1_5 = arith.constant 1 : index
    %c0_6 = arith.constant 0 : index
    %c0_7 = arith.constant 0 : index
    %5 = vector.load %arg2[%c1_5, %c0_6, %c0_7] : memref<5x96x168xf32, #tpu.memory_space<vmem>>, vector<1x96x168xf32>
    %6 = vector.shape_cast %5 : vector<1x96x168xf32> to vector<96x168xf32>
    %cst_8 = arith.constant dense<0.000000e+00> : vector<28x168xf32>
    %7 = tpu.matmul %4, %6, %cst_8 {dimension_numbers = #tpu.dot_dimension_numbers<[1], [0], [0], [1], [0, 0, 1, 1], [], []>} : vector<28x96xf32>, vector<96x168xf32>, vector<28x168xf32> -> vector<28x168xf32>
    %8 = arith.addf %3, %7 : vector<28x168xf32>
    %c2 = arith.constant 2 : index
    %c0_9 = arith.constant 0 : index
    %9 = vector.load %arg1[%c2, %c0_9] : memref<32x96xf32, #tpu.memory_space<vmem>>, vector<28x96xf32>
    %c2_10 = arith.constant 2 : index
    %c0_11 = arith.constant 0 : index
    %c0_12 = arith.constant 0 : index
    %10 = vector.load %arg2[%c2_10, %c0_11, %c0_12] : memref<5x96x168xf32, #tpu.memory_space<vmem>>, vector<1x96x168xf32>
    %11 = vector.shape_cast %10 : vector<1x96x168xf32> to vector<96x168xf32>
    %cst_13 = arith.constant dense<0.000000e+00> : vector<28x168xf32>
    %12 = tpu.matmul %9, %11, %cst_13 {dimension_numbers = #tpu.dot_dimension_numbers<[1], [0], [0], [1], [0, 0, 1, 1], [], []>} : vector<28x96xf32>, vector<96x168xf32>, vector<28x168xf32> -> vector<28x168xf32>
    %13 = arith.addf %8, %12 : vector<28x168xf32>
    %c3 = arith.constant 3 : index
    %c0_14 = arith.constant 0 : index
    %14 = vector.load %arg1[%c3, %c0_14] : memref<32x96xf32, #tpu.memory_space<vmem>>, vector<28x96xf32>
    %c3_15 = arith.constant 3 : index
    %c0_16 = arith.constant 0 : index
    %c0_17 = arith.constant 0 : index
    %15 = vector.load %arg2[%c3_15, %c0_16, %c0_17] : memref<5x96x168xf32, #tpu.memory_space<vmem>>, vector<1x96x168xf32>
    %16 = vector.shape_cast %15 : vector<1x96x168xf32> to vector<96x168xf32>
    %cst_18 = arith.constant dense<0.000000e+00> : vector<28x168xf32>
    %17 = tpu.matmul %14, %16, %cst_18 {dimension_numbers = #tpu.dot_dimension_numbers<[1], [0], [0], [1], [0, 0, 1, 1], [], []>} : vector<28x96xf32>, vector<96x168xf32>, vector<28x168xf32> -> vector<28x168xf32>
    %18 = arith.addf %13, %17 : vector<28x168xf32>
    %c4 = arith.constant 4 : index
    %c0_19 = arith.constant 0 : index
    %19 = vector.load %arg1[%c4, %c0_19] : memref<32x96xf32, #tpu.memory_space<vmem>>, vector<28x96xf32>
    %c4_20 = arith.constant 4 : index
    %c0_21 = arith.constant 0 : index
    %c0_22 = arith.constant 0 : index
    %20 = vector.load %arg2[%c4_20, %c0_21, %c0_22] : memref<5x96x168xf32, #tpu.memory_space<vmem>>, vector<1x96x168xf32>
    %21 = vector.shape_cast %20 : vector<1x96x168xf32> to vector<96x168xf32>
    %cst_23 = arith.constant dense<0.000000e+00> : vector<28x168xf32>
    %22 = tpu.matmul %19, %21, %cst_23 {dimension_numbers = #tpu.dot_dimension_numbers<[1], [0], [0], [1], [0, 0, 1, 1], [], []>} : vector<28x96xf32>, vector<96x168xf32>, vector<28x168xf32> -> vector<28x168xf32>
    %23 = arith.addf %18, %22 : vector<28x168xf32>
    %c0_24 = arith.constant 0 : index
    %c0_25 = arith.constant 0 : index
    %24 = vector.load %arg3[%c0_24, %c0_25] : memref<1x168xf32, #tpu.memory_space<vmem>>, vector<1x168xf32>
    %25 = vector.broadcast %24 : vector<1x168xf32> to vector<28x168xf32>
    %26 = arith.addf %23, %25 : vector<28x168xf32>
    %cst_26 = arith.constant 0.000000e+00 : f32
    %27 = vector.broadcast %cst_26 : f32 to vector<28x168xf32>
    %28 = arith.maximumf %26, %27 : vector<28x168xf32>
    %c0_27 = arith.constant 0 : index
    %c0_28 = arith.constant 0 : index
    %c0_29 = arith.constant 0 : index
    %29 = vector.load %arg4[%c0_27, %c0_28, %c0_29] : memref<2x14x28xf32, #tpu.memory_space<vmem>>, vector<1x14x28xf32>
    %30 = vector.shape_cast %29 : vector<1x14x28xf32> to vector<14x28xf32>
    %cst_30 = arith.constant dense<0.000000e+00> : vector<14x168xf32>
    %31 = tpu.matmul %30, %28, %cst_30 {dimension_numbers = #tpu.dot_dimension_numbers<[1], [0], [0], [1], [0, 0, 1, 1], [], []>} : vector<14x28xf32>, vector<28x168xf32>, vector<14x168xf32> -> vector<14x168xf32>
    %c1_31 = arith.constant 1 : index
    %c0_32 = arith.constant 0 : index
    %c0_33 = arith.constant 0 : index
    %32 = vector.load %arg4[%c1_31, %c0_32, %c0_33] : memref<2x14x28xf32, #tpu.memory_space<vmem>>, vector<1x14x28xf32>
    %33 = vector.shape_cast %32 : vector<1x14x28xf32> to vector<14x28xf32>
    %cst_34 = arith.constant dense<0.000000e+00> : vector<14x168xf32>
    %34 = tpu.matmul %33, %28, %cst_34 {dimension_numbers = #tpu.dot_dimension_numbers<[1], [0], [0], [1], [0, 0, 1, 1], [], []>} : vector<14x28xf32>, vector<28x168xf32>, vector<14x168xf32> -> vector<14x168xf32>
    %35 = arith.maximumf %31, %34 : vector<14x168xf32>
    %c0_35 = arith.constant 0 : index
    %c0_36 = arith.constant 0 : index
    %c0_37 = arith.constant 0 : index
    %36 = vector.load %arg5[%c0_35, %c0_36, %c0_37] : memref<2x168x84xf32, #tpu.memory_space<vmem>>, vector<1x168x84xf32>
    %37 = vector.shape_cast %36 : vector<1x168x84xf32> to vector<168x84xf32>
    %cst_38 = arith.constant dense<0.000000e+00> : vector<14x84xf32>
    %38 = tpu.matmul %35, %37, %cst_38 {dimension_numbers = #tpu.dot_dimension_numbers<[1], [0], [0], [1], [0, 0, 1, 1], [], []>} : vector<14x168xf32>, vector<168x84xf32>, vector<14x84xf32> -> vector<14x84xf32>
    %c1_39 = arith.constant 1 : index
    %c0_40 = arith.constant 0 : index
    %c0_41 = arith.constant 0 : index
    %39 = vector.load %arg5[%c1_39, %c0_40, %c0_41] : memref<2x168x84xf32, #tpu.memory_space<vmem>>, vector<1x168x84xf32>
    %40 = vector.shape_cast %39 : vector<1x168x84xf32> to vector<168x84xf32>
    %cst_42 = arith.constant dense<0.000000e+00> : vector<14x84xf32>
    %41 = tpu.matmul %35, %40, %cst_42 {dimension_numbers = #tpu.dot_dimension_numbers<[1], [0], [0], [1], [0, 0, 1, 1], [], []>} : vector<14x168xf32>, vector<168x84xf32>, vector<14x84xf32> -> vector<14x84xf32>
    %42 = arith.maximumf %38, %41 : vector<14x84xf32>
    %c0_43 = arith.constant 0 : index
    %c0_44 = arith.constant 0 : index
    %43 = vector.load %arg17[%c0_43, %c0_44] : memref<14x84xf32, #tpu.memory_space<vmem>>, vector<14x84xf32>
    tpu.vector_store %arg17[%c0_43, %c0_44], %42 {strides = array<i32>} : memref<14x84xf32, #tpu.memory_space<vmem>>, vector<14x84xf32>,
    %c0_45 = arith.constant 0 : index
    %c0_46 = arith.constant 0 : index
    %44 = vector.load %arg17[%c0_45, %c0_46] : memref<14x84xf32, #tpu.memory_space<vmem>>, vector<10x84xf32>
    %c0_47 = arith.constant 0 : index
    %c0_48 = arith.constant 0 : index
    %c0_49 = arith.constant 0 : index
    %45 = vector.load %arg6[%c0_47, %c0_48, %c0_49] : memref<5x84x160xf32, #tpu.memory_space<vmem>>, vector<1x84x160xf32>
    %46 = vector.shape_cast %45 : vector<1x84x160xf32> to vector<84x160xf32>
    %cst_50 = arith.constant dense<0.000000e+00> : vector<10x160xf32>
    %47 = tpu.matmul %44, %46, %cst_50 {dimension_numbers = #tpu.dot_dimension_numbers<[1], [0], [0], [1], [0, 0, 1, 1], [], []>} : vector<10x84xf32>, vector<84x160xf32>, vector<10x160xf32> -> vector<10x160xf32>
    %c1_51 = arith.constant 1 : index
    %c0_52 = arith.constant 0 : index
    %48 = vector.load %arg17[%c1_51, %c0_52] : memref<14x84xf32, #tpu.memory_space<vmem>>, vector<10x84xf32>
    %c1_53 = arith.constant 1 : index
    %c0_54 = arith.constant 0 : index
    %c0_55 = arith.constant 0 : index
    %49 = vector.load %arg6[%c1_53, %c0_54, %c0_55] : memref<5x84x160xf32, #tpu.memory_space<vmem>>, vector<1x84x160xf32>
    %50 = vector.shape_cast %49 : vector<1x84x160xf32> to vector<84x160xf32>
    %cst_56 = arith.constant dense<0.000000e+00> : vector<10x160xf32>
    %51 = tpu.matmul %48, %50, %cst_56 {dimension_numbers = #tpu.dot_dimension_numbers<[1], [0], [0], [1], [0, 0, 1, 1], [], []>} : vector<10x84xf32>, vector<84x160xf32>, vector<10x160xf32> -> vector<10x160xf32>
    %52 = arith.addf %47, %51 : vector<10x160xf32>
    %c2_57 = arith.constant 2 : index
    %c0_58 = arith.constant 0 : index
    %53 = vector.load %arg17[%c2_57, %c0_58] : memref<14x84xf32, #tpu.memory_space<vmem>>, vector<10x84xf32>
    %c2_59 = arith.constant 2 : index
    %c0_60 = arith.constant 0 : index
    %c0_61 = arith.constant 0 : index
    %54 = vector.load %arg6[%c2_59, %c0_60, %c0_61] : memref<5x84x160xf32, #tpu.memory_space<vmem>>, vector<1x84x160xf32>
    %55 = vector.shape_cast %54 : vector<1x84x160xf32> to vector<84x160xf32>
    %cst_62 = arith.constant dense<0.000000e+00> : vector<10x160xf32>
    %56 = tpu.matmul %53, %55, %cst_62 {dimension_numbers = #tpu.dot_dimension_numbers<[1], [0], [0], [1], [0, 0, 1, 1], [], []>} : vector<10x84xf32>, vector<84x160xf32>, vector<10x160xf32> -> vector<10x160xf32>
    %57 = arith.addf %52, %56 : vector<10x160xf32>
    %c3_63 = arith.constant 3 : index
    %c0_64 = arith.constant 0 : index
    %58 = vector.load %arg17[%c3_63, %c0_64] : memref<14x84xf32, #tpu.memory_space<vmem>>, vector<10x84xf32>
    %c3_65 = arith.constant 3 : index
    %c0_66 = arith.constant 0 : index
    %c0_67 = arith.constant 0 : index
    %59 = vector.load %arg6[%c3_65, %c0_66, %c0_67] : memref<5x84x160xf32, #tpu.memory_space<vmem>>, vector<1x84x160xf32>
    %60 = vector.shape_cast %59 : vector<1x84x160xf32> to vector<84x160xf32>
    %cst_68 = arith.constant dense<0.000000e+00> : vector<10x160xf32>
    %61 = tpu.matmul %58, %60, %cst_68 {dimension_numbers = #tpu.dot_dimension_numbers<[1], [0], [0], [1], [0, 0, 1, 1], [], []>} : vector<10x84xf32>, vector<84x160xf32>, vector<10x160xf32> -> vector<10x160xf32>
    %62 = arith.addf %57, %61 : vector<10x160xf32>
    %c4_69 = arith.constant 4 : index
    %c0_70 = arith.constant 0 : index
    %63 = vector.load %arg17[%c4_69, %c0_70] : memref<14x84xf32, #tpu.memory_space<vmem>>, vector<10x84xf32>
    %c4_71 = arith.constant 4 : index
    %c0_72 = arith.constant 0 : index
    %c0_73 = arith.constant 0 : index
    %64 = vector.load %arg6[%c4_71, %c0_72, %c0_73] : memref<5x84x160xf32, #tpu.memory_space<vmem>>, vector<1x84x160xf32>
    %65 = vector.shape_cast %64 : vector<1x84x160xf32> to vector<84x160xf32>
    %cst_74 = arith.constant dense<0.000000e+00> : vector<10x160xf32>
    %66 = tpu.matmul %63, %65, %cst_74 {dimension_numbers = #tpu.dot_dimension_numbers<[1], [0], [0], [1], [0, 0, 1, 1], [], []>} : vector<10x84xf32>, vector<84x160xf32>, vector<10x160xf32> -> vector<10x160xf32>
    %67 = arith.addf %62, %66 : vector<10x160xf32>
    %c0_75 = arith.constant 0 : index
    %c0_76 = arith.constant 0 : index
    %68 = vector.load %arg7[%c0_75, %c0_76] : memref<1x160xf32, #tpu.memory_space<vmem>>, vector<1x160xf32>
    %69 = vector.broadcast %68 : vector<1x160xf32> to vector<10x160xf32>
    %70 = arith.addf %67, %69 : vector<10x160xf32>
    %cst_77 = arith.constant 0.000000e+00 : f32
    %71 = vector.broadcast %cst_77 : f32 to vector<10x160xf32>
    %72 = arith.maximumf %70, %71 : vector<10x160xf32>
    %c0_78 = arith.constant 0 : index
    %c0_79 = arith.constant 0 : index
    %c0_80 = arith.constant 0 : index
    %73 = vector.load %arg8[%c0_78, %c0_79, %c0_80] : memref<2x5x10xf32, #tpu.memory_space<vmem>>, vector<1x5x10xf32>
    %74 = vector.shape_cast %73 : vector<1x5x10xf32> to vector<5x10xf32>
    %cst_81 = arith.constant dense<0.000000e+00> : vector<5x160xf32>
    %75 = tpu.matmul %74, %72, %cst_81 {dimension_numbers = #tpu.dot_dimension_numbers<[1], [0], [0], [1], [0, 0, 1, 1], [], []>} : vector<5x10xf32>, vector<10x160xf32>, vector<5x160xf32> -> vector<5x160xf32>
    %c1_82 = arith.constant 1 : index
    %c0_83 = arith.constant 0 : index
    %c0_84 = arith.constant 0 : index
    %76 = vector.load %arg8[%c1_82, %c0_83, %c0_84] : memref<2x5x10xf32, #tpu.memory_space<vmem>>, vector<1x5x10xf32>
    %77 = vector.shape_cast %76 : vector<1x5x10xf32> to vector<5x10xf32>
    %cst_85 = arith.constant dense<0.000000e+00> : vector<5x160xf32>
    %78 = tpu.matmul %77, %72, %cst_85 {dimension_numbers = #tpu.dot_dimension_numbers<[1], [0], [0], [1], [0, 0, 1, 1], [], []>} : vector<5x10xf32>, vector<10x160xf32>, vector<5x160xf32> -> vector<5x160xf32>
    %79 = arith.maximumf %75, %78 : vector<5x160xf32>
    %c0_86 = arith.constant 0 : index
    %c0_87 = arith.constant 0 : index
    %c0_88 = arith.constant 0 : index
    %80 = vector.load %arg9[%c0_86, %c0_87, %c0_88] : memref<2x160x80xf32, #tpu.memory_space<vmem>>, vector<1x160x80xf32>
    %81 = vector.shape_cast %80 : vector<1x160x80xf32> to vector<160x80xf32>
    %cst_89 = arith.constant dense<0.000000e+00> : vector<5x80xf32>
    %82 = tpu.matmul %79, %81, %cst_89 {dimension_numbers = #tpu.dot_dimension_numbers<[1], [0], [0], [1], [0, 0, 1, 1], [], []>} : vector<5x160xf32>, vector<160x80xf32>, vector<5x80xf32> -> vector<5x80xf32>
    %c1_90 = arith.constant 1 : index
    %c0_91 = arith.constant 0 : index
    %c0_92 = arith.constant 0 : index
    %83 = vector.load %arg9[%c1_90, %c0_91, %c0_92] : memref<2x160x80xf32, #tpu.memory_space<vmem>>, vector<1x160x80xf32>
    %84 = vector.shape_cast %83 : vector<1x160x80xf32> to vector<160x80xf32>
    %cst_93 = arith.constant dense<0.000000e+00> : vector<5x80xf32>
    %85 = tpu.matmul %79, %84, %cst_93 {dimension_numbers = #tpu.dot_dimension_numbers<[1], [0], [0], [1], [0, 0, 1, 1], [], []>} : vector<5x160xf32>, vector<160x80xf32>, vector<5x80xf32> -> vector<5x80xf32>
    %86 = arith.maximumf %82, %85 : vector<5x80xf32>
    %c0_94 = arith.constant 0 : index
    %c0_95 = arith.constant 0 : index
    %87 = vector.load %arg18[%c0_94, %c0_95] : memref<5x80xf32, #tpu.memory_space<vmem>>, vector<5x80xf32>
    tpu.vector_store %arg18[%c0_94, %c0_95], %86 {strides = array<i32>} : memref<5x80xf32, #tpu.memory_space<vmem>>, vector<5x80xf32>,
    %c0_96 = arith.constant 0 : index
    %c0_97 = arith.constant 0 : index
    %88 = vector.load %arg18[%c0_96, %c0_97] : memref<5x80xf32, #tpu.memory_space<vmem>>, vector<1x80xf32>
    %c0_98 = arith.constant 0 : index
    %c0_99 = arith.constant 0 : index
    %c0_100 = arith.constant 0 : index
    %89 = vector.load %arg10[%c0_98, %c0_99, %c0_100] : memref<5x80x120xf32, #tpu.memory_space<vmem>>, vector<1x80x120xf32>
    %90 = vector.shape_cast %89 : vector<1x80x120xf32> to vector<80x120xf32>
    %cst_101 = arith.constant dense<0.000000e+00> : vector<1x120xf32>
    %91 = tpu.matmul %88, %90, %cst_101 {dimension_numbers = #tpu.dot_dimension_numbers<[1], [0], [0], [1], [0, 0, 1, 1], [], []>} : vector<1x80xf32>, vector<80x120xf32>, vector<1x120xf32> -> vector<1x120xf32>
    %c1_102 = arith.constant 1 : index
    %c0_103 = arith.constant 0 : index
    %92 = vector.load %arg18[%c1_102, %c0_103] : memref<5x80xf32, #tpu.memory_space<vmem>>, vector<1x80xf32>
    %c1_104 = arith.constant 1 : index
    %c0_105 = arith.constant 0 : index
    %c0_106 = arith.constant 0 : index
    %93 = vector.load %arg10[%c1_104, %c0_105, %c0_106] : memref<5x80x120xf32, #tpu.memory_space<vmem>>, vector<1x80x120xf32>
    %94 = vector.shape_cast %93 : vector<1x80x120xf32> to vector<80x120xf32>
    %cst_107 = arith.constant dense<0.000000e+00> : vector<1x120xf32>
    %95 = tpu.matmul %92, %94, %cst_107 {dimension_numbers = #tpu.dot_dimension_numbers<[1], [0], [0], [1], [0, 0, 1, 1], [], []>} : vector<1x80xf32>, vector<80x120xf32>, vector<1x120xf32> -> vector<1x120xf32>
    %96 = arith.addf %91, %95 : vector<1x120xf32>
    %c2_108 = arith.constant 2 : index
    %c0_109 = arith.constant 0 : index
    %97 = vector.load %arg18[%c2_108, %c0_109] : memref<5x80xf32, #tpu.memory_space<vmem>>, vector<1x80xf32>
    %c2_110 = arith.constant 2 : index
    %c0_111 = arith.constant 0 : index
    %c0_112 = arith.constant 0 : index
    %98 = vector.load %arg10[%c2_110, %c0_111, %c0_112] : memref<5x80x120xf32, #tpu.memory_space<vmem>>, vector<1x80x120xf32>
    %99 = vector.shape_cast %98 : vector<1x80x120xf32> to vector<80x120xf32>
    %cst_113 = arith.constant dense<0.000000e+00> : vector<1x120xf32>
    %100 = tpu.matmul %97, %99, %cst_113 {dimension_numbers = #tpu.dot_dimension_numbers<[1], [0], [0], [1], [0, 0, 1, 1], [], []>} : vector<1x80xf32>, vector<80x120xf32>, vector<1x120xf32> -> vector<1x120xf32>
    %101 = arith.addf %96, %100 : vector<1x120xf32>
    %c3_114 = arith.constant 3 : index
    %c0_115 = arith.constant 0 : index
    %102 = vector.load %arg18[%c3_114, %c0_115] : memref<5x80xf32, #tpu.memory_space<vmem>>, vector<1x80xf32>
    %c3_116 = arith.constant 3 : index
    %c0_117 = arith.constant 0 : index
    %c0_118 = arith.constant 0 : index
    %103 = vector.load %arg10[%c3_116, %c0_117, %c0_118] : memref<5x80x120xf32, #tpu.memory_space<vmem>>, vector<1x80x120xf32>
    %104 = vector.shape_cast %103 : vector<1x80x120xf32> to vector<80x120xf32>
    %cst_119 = arith.constant dense<0.000000e+00> : vector<1x120xf32>
    %105 = tpu.matmul %102, %104, %cst_119 {dimension_numbers = #tpu.dot_dimension_numbers<[1], [0], [0], [1], [0, 0, 1, 1], [], []>} : vector<1x80xf32>, vector<80x120xf32>, vector<1x120xf32> -> vector<1x120xf32>
    %106 = arith.addf %101, %105 : vector<1x120xf32>
    %c4_120 = arith.constant 4 : index
    %c0_121 = arith.constant 0 : index
    %107 = vector.load %arg18[%c4_120, %c0_121] : memref<5x80xf32, #tpu.memory_space<vmem>>, vector<1x80xf32>
    %c4_122 = arith.constant 4 : index
    %c0_123 = arith.constant 0 : index
    %c0_124 = arith.constant 0 : index
    %108 = vector.load %arg10[%c4_122, %c0_123, %c0_124] : memref<5x80x120xf32, #tpu.memory_space<vmem>>, vector<1x80x120xf32>
    %109 = vector.shape_cast %108 : vector<1x80x120xf32> to vector<80x120xf32>
    %cst_125 = arith.constant dense<0.000000e+00> : vector<1x120xf32>
    %110 = tpu.matmul %107, %109, %cst_125 {dimension_numbers = #tpu.dot_dimension_numbers<[1], [0], [0], [1], [0, 0, 1, 1], [], []>} : vector<1x80xf32>, vector<80x120xf32>, vector<1x120xf32> -> vector<1x120xf32>
    %111 = arith.addf %106, %110 : vector<1x120xf32>
    %c0_126 = arith.constant 0 : index
    %c0_127 = arith.constant 0 : index
    %112 = vector.load %arg11[%c0_126, %c0_127] : memref<1x120xf32, #tpu.memory_space<vmem>>, vector<1x120xf32>
    %113 = arith.addf %111, %112 : vector<1x120xf32>
    %cst_128 = arith.constant 0.000000e+00 : f32
    %114 = vector.broadcast %cst_128 : f32 to vector<1x120xf32>
    %115 = arith.maximumf %113, %114 : vector<1x120xf32>
    %c0_129 = arith.constant 0 : index
    %c0_130 = arith.constant 0 : index
    %116 = vector.load %arg12[%c0_129, %c0_130] : memref<120x84xf32, #tpu.memory_space<vmem>>, vector<120x84xf32>
    %cst_131 = arith.constant dense<0.000000e+00> : vector<1x84xf32>
    %117 = tpu.matmul %115, %116, %cst_131 {dimension_numbers = #tpu.dot_dimension_numbers<[1], [0], [0], [1], [0, 0, 1, 1], [], []>} : vector<1x120xf32>, vector<120x84xf32>, vector<1x84xf32> -> vector<1x84xf32>
    %c0_132 = arith.constant 0 : index
    %c0_133 = arith.constant 0 : index
    %118 = vector.load %arg13[%c0_132, %c0_133] : memref<1x84xf32, #tpu.memory_space<vmem>>, vector<1x84xf32>
    %119 = arith.addf %117, %118 : vector<1x84xf32>
    %cst_134 = arith.constant 0.000000e+00 : f32
    %120 = vector.broadcast %cst_134 : f32 to vector<1x84xf32>
    %121 = arith.maximumf %119, %120 : vector<1x84xf32>
    %c0_135 = arith.constant 0 : index
    %c0_136 = arith.constant 0 : index
    %122 = vector.load %arg14[%c0_135, %c0_136] : memref<84x10xf32, #tpu.memory_space<vmem>>, vector<84x10xf32>
    %cst_137 = arith.constant dense<0.000000e+00> : vector<1x10xf32>
    %123 = tpu.matmul %121, %122, %cst_137 {dimension_numbers = #tpu.dot_dimension_numbers<[1], [0], [0], [1], [0, 0, 1, 1], [], []>} : vector<1x84xf32>, vector<84x10xf32>, vector<1x10xf32> -> vector<1x10xf32>
    %c0_138 = arith.constant 0 : index
    %c0_139 = arith.constant 0 : index
    %124 = vector.load %arg15[%c0_138, %c0_139] : memref<1x10xf32, #tpu.memory_space<vmem>>, vector<1x10xf32>
    %125 = arith.addf %123, %124 : vector<1x10xf32>
    %c0_140 = arith.constant 0 : index
    %c0_141 = arith.constant 0 : index
    %c0_142 = arith.constant 0 : index
    %126 = vector.load %arg16[%c0_140, %c0_141, %c0_142] : memref<1x1x10xf32, #tpu.memory_space<vmem>>, vector<1x1x10xf32>
    %127 = vector.shape_cast %126 : vector<1x1x10xf32> to vector<1x10xf32>
    %128 = vector.shape_cast %125 : vector<1x10xf32> to vector<1x1x10xf32>
    tpu.vector_store %arg16[%c0_140, %c0_141, %c0_142], %128 {strides = array<i32>} : memref<1x1x10xf32, #tpu.memory_space<vmem>>, vector<1x1x10xf32>,
    return
  }
  func.func @transform_0(%arg0: i32) -> (i32, i32) {
    %c0_i32 = arith.constant 0 : i32
    %c0_i32_0 = arith.constant 0 : i32
    return %arg0, %c0_i32 : i32, i32
  }
  func.func @transform_1(%arg0: i32) -> (i32, i32, i32) {
    %c0_i32 = arith.constant 0 : i32
    %c0_i32_0 = arith.constant 0 : i32
    %c0_i32_1 = arith.constant 0 : i32
    %c0_i32_2 = arith.constant 0 : i32
    return %c0_i32, %c0_i32_0, %c0_i32_1 : i32, i32, i32
  }
  func.func @transform_2(%arg0: i32) -> (i32, i32) {
    %c0_i32 = arith.constant 0 : i32
    %c0_i32_0 = arith.constant 0 : i32
    %c0_i32_1 = arith.constant 0 : i32
    return %c0_i32, %c0_i32_0 : i32, i32
  }
  func.func @transform_3(%arg0: i32) -> (i32, i32, i32) {
    %c0_i32 = arith.constant 0 : i32
    %c0_i32_0 = arith.constant 0 : i32
    %c0_i32_1 = arith.constant 0 : i32
    %c0_i32_2 = arith.constant 0 : i32
    return %c0_i32, %c0_i32_0, %c0_i32_1 : i32, i32, i32
  }
  func.func @transform_4(%arg0: i32) -> (i32, i32, i32) {
    %c0_i32 = arith.constant 0 : i32
    %c0_i32_0 = arith.constant 0 : i32
    %c0_i32_1 = arith.constant 0 : i32
    %c0_i32_2 = arith.constant 0 : i32
    return %c0_i32, %c0_i32_0, %c0_i32_1 : i32, i32, i32
  }
  func.func @transform_5(%arg0: i32) -> (i32, i32, i32) {
    %c0_i32 = arith.constant 0 : i32
    %c0_i32_0 = arith.constant 0 : i32
    %c0_i32_1 = arith.constant 0 : i32
    %c0_i32_2 = arith.constant 0 : i32
    return %c0_i32, %c0_i32_0, %c0_i32_1 : i32, i32, i32
  }
  func.func @transform_6(%arg0: i32) -> (i32, i32) {
    %c0_i32 = arith.constant 0 : i32
    %c0_i32_0 = arith.constant 0 : i32
    %c0_i32_1 = arith.constant 0 : i32
    return %c0_i32, %c0_i32_0 : i32, i32
  }
  func.func @transform_7(%arg0: i32) -> (i32, i32, i32) {
    %c0_i32 = arith.constant 0 : i32
    %c0_i32_0 = arith.constant 0 : i32
    %c0_i32_1 = arith.constant 0 : i32
    %c0_i32_2 = arith.constant 0 : i32
    return %c0_i32, %c0_i32_0, %c0_i32_1 : i32, i32, i32
  }
  func.func @transform_8(%arg0: i32) -> (i32, i32, i32) {
    %c0_i32 = arith.constant 0 : i32
    %c0_i32_0 = arith.constant 0 : i32
    %c0_i32_1 = arith.constant 0 : i32
    %c0_i32_2 = arith.constant 0 : i32
    return %c0_i32, %c0_i32_0, %c0_i32_1 : i32, i32, i32
  }
  func.func @transform_9(%arg0: i32) -> (i32, i32, i32) {
    %c0_i32 = arith.constant 0 : i32
    %c0_i32_0 = arith.constant 0 : i32
    %c0_i32_1 = arith.constant 0 : i32
    %c0_i32_2 = arith.constant 0 : i32
    return %c0_i32, %c0_i32_0, %c0_i32_1 : i32, i32, i32
  }
  func.func @transform_10(%arg0: i32) -> (i32, i32) {
    %c0_i32 = arith.constant 0 : i32
    %c0_i32_0 = arith.constant 0 : i32
    %c0_i32_1 = arith.constant 0 : i32
    return %c0_i32, %c0_i32_0 : i32, i32
  }
  func.func @transform_11(%arg0: i32) -> (i32, i32) {
    %c0_i32 = arith.constant 0 : i32
    %c0_i32_0 = arith.constant 0 : i32
    %c0_i32_1 = arith.constant 0 : i32
    return %c0_i32, %c0_i32_0 : i32, i32
  }
  func.func @transform_12(%arg0: i32) -> (i32, i32) {
    %c0_i32 = arith.constant 0 : i32
    %c0_i32_0 = arith.constant 0 : i32
    %c0_i32_1 = arith.constant 0 : i32
    return %c0_i32, %c0_i32_0 : i32, i32
  }
  func.func @transform_13(%arg0: i32) -> (i32, i32) {
    %c0_i32 = arith.constant 0 : i32
    %c0_i32_0 = arith.constant 0 : i32
    %c0_i32_1 = arith.constant 0 : i32
    return %c0_i32, %c0_i32_0 : i32, i32
  }
  func.func @transform_14(%arg0: i32) -> (i32, i32) {
    %c0_i32 = arith.constant 0 : i32
    %c0_i32_0 = arith.constant 0 : i32
    %c0_i32_1 = arith.constant 0 : i32
    return %c0_i32, %c0_i32_0 : i32, i32
  }
  func.func @transform_15(%arg0: i32) -> (i32, i32, i32) {
    %c0_i32 = arith.constant 0 : i32
    %c0_i32_0 = arith.constant 0 : i32
    %c0_i32_1 = arith.constant 0 : i32
    return %arg0, %c0_i32, %c0_i32_0 : i32, i32, i32
  }
}

</mosaic_0001>

<llo_original>
// kernel: simple_cnn_forward.1
$region0: #{simple_cnn_forward.1}
  #allocation0 [shape = 'u32[]', space=smem, size = 0x4, offset = 0x4, fixed_abs, tag = 'smem constant byte address 0x4 - core index']
  #allocation1 [shape = 'u32[144,128]{1,0:T(1,128)}', space=vmem, size = 0x12000, scoped, tag = 'internal scratch']
  #allocation2 [shape = 'f32[14,84]{1,0:T(8,128)}', space=vmem, size = 0x2000, scoped, tag = 'scratch operand']
  #allocation3 [shape = 'f32[5,80]{1,0:T(8,128)}', space=vmem, size = 0x1000, scoped, tag = 'scratch operand']
  %s0 = inlined_call_operand.vmem [shape: f32[64,96], index: 0, kind: input, shape index: {}]
  %s1 = inlined_call_operand.vmem [shape: f32[5,96,168], index: 1, kind: input, shape index: {}]
  %s2 = inlined_call_operand.vmem [shape: f32[1,168], index: 2, kind: input, shape index: {}]
  %s3 = inlined_call_operand.vmem [shape: f32[2,14,28], index: 3, kind: input, shape index: {}]
  %s4 = inlined_call_operand.vmem [shape: f32[2,168,84], index: 4, kind: input, shape index: {}]
  %s5 = inlined_call_operand.vmem [shape: f32[5,84,160], index: 5, kind: input, shape index: {}]
  %s6 = inlined_call_operand.vmem [shape: f32[1,160], index: 6, kind: input, shape index: {}]
  %s7 = inlined_call_operand.vmem [shape: f32[2,5,10], index: 7, kind: input, shape index: {}]
  %s8 = inlined_call_operand.vmem [shape: f32[2,160,80], index: 8, kind: input, shape index: {}]
  %s9 = inlined_call_operand.vmem [shape: f32[5,80,120], index: 9, kind: input, shape index: {}]
  %s10 = inlined_call_operand.vmem [shape: f32[1,120], index: 10, kind: input, shape index: {}]
  %s11 = inlined_call_operand.vmem [shape: f32[120,84], index: 11, kind: input, shape index: {}]
  %s12 = inlined_call_operand.vmem [shape: f32[1,84], index: 12, kind: input, shape index: {}]
  %s13 = inlined_call_operand.vmem [shape: f32[84,10], index: 13, kind: input, shape index: {}]
  %s14 = inlined_call_operand.vmem [shape: f32[1,10], index: 14, kind: input, shape index: {}]
  %s15 = inlined_call_operand.hbm [shape: f32[2,1,10], index: 15, kind: output, shape index: {}]
  %s16 = sld [smem:[#allocation0]]
  $region93: #{simple_cnn_forward.1} parent=0
    _
  %s18 = ssub.s32 1, %s16
  %s19 = scalar_select 0, %s18, %s16
  $region1: #{simple_cnn_forward.1} parent=0
    #allocation4 [shape = 'u8[1024]{0}', space=vmem, size = 0x400, scoped, tag = 'output window, operand 0']
    #allocation5 [shape = 's32[2]{0}', space=sflag, size = 0x8, scoped, tag = 'scoped memory for simple_cnn_forward.1']
    %20 = vsyncpa [#allocation5], 0
    %s21 = scalar_lea.sflag [#allocation5], 1
    %22 = vsyncpa %s21, 0
    loop: start=0, step=1, limit=4
    $region2: #{simple_cnn_forward.1} parent=1 // loop_pre_header
      _
    $region3: #{simple_cnn_forward.1} parent=1 // loop_header
      %s24 = sphi 0, %s28
      %p25 = scmp.ge.s32.totalorder %s24, 4
      %s34 = sphi 0, %s36
      %s37 = sphi 0, %s34
      %s38 = sphi 0, %s37
      %s54 = sphi 0, %s38
      %s58 = sphi 0, %s58
      %s60 = sphi 0, %s58
      %s61 = sphi 0, %s60
      %s75 = sphi 0, %s61
      %s79 = sphi 0, %s79
      %s81 = sphi 0, %s79
      %s82 = sphi 0, %s81
      %s96 = sphi 0, %s82
      %s100 = sphi 0, %s100
      %s102 = sphi 0, %s100
      %s103 = sphi 0, %s102
      %s117 = sphi 0, %s103
      %s121 = sphi 0, %s121
      %s123 = sphi 0, %s121
      %s124 = sphi 0, %s123
      %s138 = sphi 0, %s124
      %s142 = sphi 0, %s142
      %s144 = sphi 0, %s142
      %s145 = sphi 0, %s144
      %s159 = sphi 0, %s145
      %s163 = sphi 0, %s163
      %s165 = sphi 0, %s163
      %s166 = sphi 0, %s165
      %s180 = sphi 0, %s166
      %s184 = sphi 0, %s184
      %s186 = sphi 0, %s184
      %s187 = sphi 0, %s186
      %s201 = sphi 0, %s187
      %s205 = sphi 0, %s205
      %s207 = sphi 0, %s205
      %s208 = sphi 0, %s207
      %s222 = sphi 0, %s208
      %s226 = sphi 0, %s226
      %s228 = sphi 0, %s226
      %s229 = sphi 0, %s228
      %s243 = sphi 0, %s229
      %s247 = sphi 0, %s247
      %s249 = sphi 0, %s247
      %s250 = sphi 0, %s249
      %s264 = sphi 0, %s250
      %s268 = sphi 0, %s268
      %s270 = sphi 0, %s268
      %s271 = sphi 0, %s270
      %s285 = sphi 0, %s271
      %s289 = sphi 0, %s289
      %s291 = sphi 0, %s289
      %s292 = sphi 0, %s291
      %s306 = sphi 0, %s292
      %s310 = sphi 0, %s310
      %s312 = sphi 0, %s310
      %s313 = sphi 0, %s312
      %s327 = sphi 0, %s313
      %s331 = sphi 0, %s331
      %s333 = sphi 0, %s331
      %s334 = sphi 0, %s333
      %s348 = sphi 0, %s334
      %s354 = sphi 0, %s356
      %s357 = sphi 0, %s354
      %s358 = sphi 0, %s357
      %s374 = sphi 0, %s358
    $region4: #{simple_cnn_forward.1} parent=1 // loop_header_branch
      %27 = sbr.rel (%p25) target = $region8
    $region5: #{simple_cnn_forward.1} parent=1 // loop_body
      %s29 = ssub.s32 %s24, 1
      %s30 = ssub.s32 %s24, 2
      %s31 = sadd.s32 %s24, 1
      %s32 = ssub.s32 %s24, %s31
      %p33 = scmp.eq.s32.totalorder %s32, 0
      %s35 = sadd.s32 %s34, 1
      %s36 = scalar_select %p33, %s34, %s35
      %p39 = pneg %p33
      %p40 = scmp.eq.s32.totalorder %s24, 1
      %p41 = por %p39, %p40
      %p42 = scmp.ne.s32.totalorder %s34, %s37
      %p43 = scmp.eq.s32.totalorder %s24, 0
      %p44 = por %p42, %p43
      %p45 = scmp.ne.s32.totalorder %s34, %s37
      %p46 = scmp.eq.s32.totalorder %s29, 1
      %p47 = por %p45, %p46
      %p48 = scmp.ne.s32.totalorder %s37, %s38
      %p49 = scmp.eq.s32.totalorder %s29, 0
      %p50 = por %p48, %p49
      %p51 = scmp.ne.s32.totalorder %s37, %s38
      %p52 = scmp.eq.s32.totalorder %s30, 1
      %p53 = por %p51, %p52
      %p55 = scmp.ne.s32.totalorder %s38, %s54
      %p56 = scmp.eq.s32.totalorder %s30, 0
      %p57 = por %p55, %p56
      %s59 = sadd.s32 %s58, 1
      %p62 = scmp.eq.s32.totalorder %s24, 1
      %p63 = scmp.ne.s32.totalorder %s58, %s60
      %p64 = scmp.eq.s32.totalorder %s24, 0
      %p65 = por %p63, %p64
      %p66 = scmp.ne.s32.totalorder %s58, %s60
      %p67 = scmp.eq.s32.totalorder %s29, 1
      %p68 = por %p66, %p67
      %p69 = scmp.ne.s32.totalorder %s60, %s61
      %p70 = scmp.eq.s32.totalorder %s29, 0
      %p71 = por %p69, %p70
      %p72 = scmp.ne.s32.totalorder %s60, %s61
      %p73 = scmp.eq.s32.totalorder %s30, 1
      %p74 = por %p72, %p73
      %p76 = scmp.ne.s32.totalorder %s61, %s75
      %p77 = scmp.eq.s32.totalorder %s30, 0
      %p78 = por %p76, %p77
      %s80 = sadd.s32 %s79, 1
      %p83 = scmp.eq.s32.totalorder %s24, 1
      %p84 = scmp.ne.s32.totalorder %s79, %s81
      %p85 = scmp.eq.s32.totalorder %s24, 0
      %p86 = por %p84, %p85
      %p87 = scmp.ne.s32.totalorder %s79, %s81
      %p88 = scmp.eq.s32.totalorder %s29, 1
      %p89 = por %p87, %p88
      %p90 = scmp.ne.s32.totalorder %s81, %s82
      %p91 = scmp.eq.s32.totalorder %s29, 0
      %p92 = por %p90, %p91
      %p93 = scmp.ne.s32.totalorder %s81, %s82
      %p94 = scmp.eq.s32.totalorder %s30, 1
      %p95 = por %p93, %p94
      %p97 = scmp.ne.s32.totalorder %s82, %s96
      %p98 = scmp.eq.s32.totalorder %s30, 0
      %p99 = por %p97, %p98
      %s101 = sadd.s32 %s100, 1
      %p104 = scmp.eq.s32.totalorder %s24, 1
      %p105 = scmp.ne.s32.totalorder %s100, %s102
      %p106 = scmp.eq.s32.totalorder %s24, 0
      %p107 = por %p105, %p106
      %p108 = scmp.ne.s32.totalorder %s100, %s102
      %p109 = scmp.eq.s32.totalorder %s29, 1
      %p110 = por %p108, %p109
      %p111 = scmp.ne.s32.totalorder %s102, %s103
      %p112 = scmp.eq.s32.totalorder %s29, 0
      %p113 = por %p111, %p112
      %p114 = scmp.ne.s32.totalorder %s102, %s103
      %p115 = scmp.eq.s32.totalorder %s30, 1
      %p116 = por %p114, %p115
      %p118 = scmp.ne.s32.totalorder %s103, %s117
      %p119 = scmp.eq.s32.totalorder %s30, 0
      %p120 = por %p118, %p119
      %s122 = sadd.s32 %s121, 1
      %p125 = scmp.eq.s32.totalorder %s24, 1
      %p126 = scmp.ne.s32.totalorder %s121, %s123
      %p127 = scmp.eq.s32.totalorder %s24, 0
      %p128 = por %p126, %p127
      %p129 = scmp.ne.s32.totalorder %s121, %s123
      %p130 = scmp.eq.s32.totalorder %s29, 1
      %p131 = por %p129, %p130
      %p132 = scmp.ne.s32.totalorder %s123, %s124
      %p133 = scmp.eq.s32.totalorder %s29, 0
      %p134 = por %p132, %p133
      %p135 = scmp.ne.s32.totalorder %s123, %s124
      %p136 = scmp.eq.s32.totalorder %s30, 1
      %p137 = por %p135, %p136
      %p139 = scmp.ne.s32.totalorder %s124, %s138
      %p140 = scmp.eq.s32.totalorder %s30, 0
      %p141 = por %p139, %p140
      %s143 = sadd.s32 %s142, 1
      %p146 = scmp.eq.s32.totalorder %s24, 1
      %p147 = scmp.ne.s32.totalorder %s142, %s144
      %p148 = scmp.eq.s32.totalorder %s24, 0
      %p149 = por %p147, %p148
      %p150 = scmp.ne.s32.totalorder %s142, %s144
      %p151 = scmp.eq.s32.totalorder %s29, 1
      %p152 = por %p150, %p151
      %p153 = scmp.ne.s32.totalorder %s144, %s145
      %p154 = scmp.eq.s32.totalorder %s29, 0
      %p155 = por %p153, %p154
      %p156 = scmp.ne.s32.totalorder %s144, %s145
      %p157 = scmp.eq.s32.totalorder %s30, 1
      %p158 = por %p156, %p157
      %p160 = scmp.ne.s32.totalorder %s145, %s159
      %p161 = scmp.eq.s32.totalorder %s30, 0
      %p162 = por %p160, %p161
      %s164 = sadd.s32 %s163, 1
      %p167 = scmp.eq.s32.totalorder %s24, 1
      %p168 = scmp.ne.s32.totalorder %s163, %s165
      %p169 = scmp.eq.s32.totalorder %s24, 0
      %p170 = por %p168, %p169
      %p171 = scmp.ne.s32.totalorder %s163, %s165
      %p172 = scmp.eq.s32.totalorder %s29, 1
      %p173 = por %p171, %p172
      %p174 = scmp.ne.s32.totalorder %s165, %s166
      %p175 = scmp.eq.s32.totalorder %s29, 0
      %p176 = por %p174, %p175
      %p177 = scmp.ne.s32.totalorder %s165, %s166
      %p178 = scmp.eq.s32.totalorder %s30, 1
      %p179 = por %p177, %p178
      %p181 = scmp.ne.s32.totalorder %s166, %s180
      %p182 = scmp.eq.s32.totalorder %s30, 0
      %p183 = por %p181, %p182
      %s185 = sadd.s32 %s184, 1
      %p188 = scmp.eq.s32.totalorder %s24, 1
      %p189 = scmp.ne.s32.totalorder %s184, %s186
      %p190 = scmp.eq.s32.totalorder %s24, 0
      %p191 = por %p189, %p190
      %p192 = scmp.ne.s32.totalorder %s184, %s186
      %p193 = scmp.eq.s32.totalorder %s29, 1
      %p194 = por %p192, %p193
      %p195 = scmp.ne.s32.totalorder %s186, %s187
      %p196 = scmp.eq.s32.totalorder %s29, 0
      %p197 = por %p195, %p196
      %p198 = scmp.ne.s32.totalorder %s186, %s187
      %p199 = scmp.eq.s32.totalorder %s30, 1
      %p200 = por %p198, %p199
      %p202 = scmp.ne.s32.totalorder %s187, %s201
      %p203 = scmp.eq.s32.totalorder %s30, 0
      %p204 = por %p202, %p203
      %s206 = sadd.s32 %s205, 1
      %p209 = scmp.eq.s32.totalorder %s24, 1
      %p210 = scmp.ne.s32.totalorder %s205, %s207
      %p211 = scmp.eq.s32.totalorder %s24, 0
      %p212 = por %p210, %p211
      %p213 = scmp.ne.s32.totalorder %s205, %s207
      %p214 = scmp.eq.s32.totalorder %s29, 1
      %p215 = por %p213, %p214
      %p216 = scmp.ne.s32.totalorder %s207, %s208
      %p217 = scmp.eq.s32.totalorder %s29, 0
      %p218 = por %p216, %p217
      %p219 = scmp.ne.s32.totalorder %s207, %s208
      %p220 = scmp.eq.s32.totalorder %s30, 1
      %p221 = por %p219, %p220
      %p223 = scmp.ne.s32.totalorder %s208, %s222
      %p224 = scmp.eq.s32.totalorder %s30, 0
      %p225 = por %p223, %p224
      %s227 = sadd.s32 %s226, 1
      %p230 = scmp.eq.s32.totalorder %s24, 1
      %p231 = scmp.ne.s32.totalorder %s226, %s228
      %p232 = scmp.eq.s32.totalorder %s24, 0
      %p233 = por %p231, %p232
      %p234 = scmp.ne.s32.totalorder %s226, %s228
      %p235 = scmp.eq.s32.totalorder %s29, 1
      %p236 = por %p234, %p235
      %p237 = scmp.ne.s32.totalorder %s228, %s229
      %p238 = scmp.eq.s32.totalorder %s29, 0
      %p239 = por %p237, %p238
      %p240 = scmp.ne.s32.totalorder %s228, %s229
      %p241 = scmp.eq.s32.totalorder %s30, 1
      %p242 = por %p240, %p241
      %p244 = scmp.ne.s32.totalorder %s229, %s243
      %p245 = scmp.eq.s32.totalorder %s30, 0
      %p246 = por %p244, %p245
      %s248 = sadd.s32 %s247, 1
      %p251 = scmp.eq.s32.totalorder %s24, 1
      %p252 = scmp.ne.s32.totalorder %s247, %s249
      %p253 = scmp.eq.s32.totalorder %s24, 0
      %p254 = por %p252, %p253
      %p255 = scmp.ne.s32.totalorder %s247, %s249
      %p256 = scmp.eq.s32.totalorder %s29, 1
      %p257 = por %p255, %p256
      %p258 = scmp.ne.s32.totalorder %s249, %s250
      %p259 = scmp.eq.s32.totalorder %s29, 0
      %p260 = por %p258, %p259
      %p261 = scmp.ne.s32.totalorder %s249, %s250
      %p262 = scmp.eq.s32.totalorder %s30, 1
      %p263 = por %p261, %p262
      %p265 = scmp.ne.s32.totalorder %s250, %s264
      %p266 = scmp.eq.s32.totalorder %s30, 0
      %p267 = por %p265, %p266
      %s269 = sadd.s32 %s268, 1
      %p272 = scmp.eq.s32.totalorder %s24, 1
      %p273 = scmp.ne.s32.totalorder %s268, %s270
      %p274 = scmp.eq.s32.totalorder %s24, 0
      %p275 = por %p273, %p274
      %p276 = scmp.ne.s32.totalorder %s268, %s270
      %p277 = scmp.eq.s32.totalorder %s29, 1
      %p278 = por %p276, %p277
      %p279 = scmp.ne.s32.totalorder %s270, %s271
      %p280 = scmp.eq.s32.totalorder %s29, 0
      %p281 = por %p279, %p280
      %p282 = scmp.ne.s32.totalorder %s270, %s271
      %p283 = scmp.eq.s32.totalorder %s30, 1
      %p284 = por %p282, %p283
      %p286 = scmp.ne.s32.totalorder %s271, %s285
      %p287 = scmp.eq.s32.totalorder %s30, 0
      %p288 = por %p286, %p287
      %s290 = sadd.s32 %s289, 1
      %p293 = scmp.eq.s32.totalorder %s24, 1
      %p294 = scmp.ne.s32.totalorder %s289, %s291
      %p295 = scmp.eq.s32.totalorder %s24, 0
      %p296 = por %p294, %p295
      %p297 = scmp.ne.s32.totalorder %s289, %s291
      %p298 = scmp.eq.s32.totalorder %s29, 1
      %p299 = por %p297, %p298
      %p300 = scmp.ne.s32.totalorder %s291, %s292
      %p301 = scmp.eq.s32.totalorder %s29, 0
      %p302 = por %p300, %p301
      %p303 = scmp.ne.s32.totalorder %s291, %s292
      %p304 = scmp.eq.s32.totalorder %s30, 1
      %p305 = por %p303, %p304
      %p307 = scmp.ne.s32.totalorder %s292, %s306
      %p308 = scmp.eq.s32.totalorder %s30, 0
      %p309 = por %p307, %p308
      %s311 = sadd.s32 %s310, 1
      %p314 = scmp.eq.s32.totalorder %s24, 1
      %p315 = scmp.ne.s32.totalorder %s310, %s312
      %p316 = scmp.eq.s32.totalorder %s24, 0
      %p317 = por %p315, %p316
      %p318 = scmp.ne.s32.totalorder %s310, %s312
      %p319 = scmp.eq.s32.totalorder %s29, 1
      %p320 = por %p318, %p319
      %p321 = scmp.ne.s32.totalorder %s312, %s313
      %p322 = scmp.eq.s32.totalorder %s29, 0
      %p323 = por %p321, %p322
      %p324 = scmp.ne.s32.totalorder %s312, %s313
      %p325 = scmp.eq.s32.totalorder %s30, 1
      %p326 = por %p324, %p325
      %p328 = scmp.ne.s32.totalorder %s313, %s327
      %p329 = scmp.eq.s32.totalorder %s30, 0
      %p330 = por %p328, %p329
      %s332 = sadd.s32 %s331, 1
      %p335 = scmp.eq.s32.totalorder %s24, 1
      %p336 = scmp.ne.s32.totalorder %s331, %s333
      %p337 = scmp.eq.s32.totalorder %s24, 0
      %p338 = por %p336, %p337
      %p339 = scmp.ne.s32.totalorder %s331, %s333
      %p340 = scmp.eq.s32.totalorder %s29, 1
      %p341 = por %p339, %p340
      %p342 = scmp.ne.s32.totalorder %s333, %s334
      %p343 = scmp.eq.s32.totalorder %s29, 0
      %p344 = por %p342, %p343
      %p345 = scmp.ne.s32.totalorder %s333, %s334
      %p346 = scmp.eq.s32.totalorder %s30, 1
      %p347 = por %p345, %p346
      %p349 = scmp.ne.s32.totalorder %s334, %s348
      %p350 = scmp.eq.s32.totalorder %s30, 0
      %p351 = por %p349, %p350
      %s352 = ssub.s32 %s24, %s31
      %p353 = scmp.eq.s32.totalorder %s352, 0
      %s355 = sadd.s32 %s354, 1
      %s356 = scalar_select %p353, %s354, %s355
      %p359 = pneg %p353
      %p360 = scmp.eq.s32.totalorder %s24, 1
      %p361 = por %p359, %p360
      %p362 = scmp.ne.s32.totalorder %s354, %s357
      %p363 = scmp.eq.s32.totalorder %s24, 0
      %p364 = por %p362, %p363
      %p365 = scmp.ne.s32.totalorder %s354, %s357
      %p366 = scmp.eq.s32.totalorder %s29, 1
      %p367 = por %p365, %p366
      %p368 = scmp.ne.s32.totalorder %s357, %s358
      %p369 = scmp.eq.s32.totalorder %s29, 0
      %p370 = por %p368, %p369
      %p371 = scmp.ne.s32.totalorder %s357, %s358
      %p372 = scmp.eq.s32.totalorder %s30, 1
      %p373 = por %p371, %p372
      %p375 = scmp.ne.s32.totalorder %s358, %s374
      %p376 = scmp.eq.s32.totalorder %s30, 0
      %p377 = por %p375, %p376
      %p378 = scmp.le.s32.totalorder 1, %s24
      %p379 = scmp.lt.s32.totalorder %s24, 3
      %p380 = pnand %p378, %p379
      %p381 = pneg %p380
      // Predicated region
      $region9: #{simple_cnn_forward.1} parent=5 // pred_check
        _
      $region10: #{simple_cnn_forward.1} parent=5 // pred_check_branch
        %383 = sbr.rel (%p380) target = $region12
      $region11: #{simple_cnn_forward.1} parent=5 // pred_region
        %s384 = ssub.s32 %s24, 1
        // Predicated region
        $region13: #{simple_cnn_forward.1} parent=11 // pred_check
          %p385 = pneg %p71
        $region14: #{simple_cnn_forward.1} parent=11 // pred_check_branch
          %387 = sbr.rel (%p385) target = $region16
        $region15: #{simple_cnn_forward.1} parent=11 // pred_region
          _
        $region16: #{simple_cnn_forward.1} parent=11 // pred_fallthru
          _
        // Predicated region
        $region17: #{simple_cnn_forward.1} parent=11 // pred_check
          %p388 = pneg %p92
        $region18: #{simple_cnn_forward.1} parent=11 // pred_check_branch
          %390 = sbr.rel (%p388) target = $region20
        $region19: #{simple_cnn_forward.1} parent=11 // pred_region
          _
        $region20: #{simple_cnn_forward.1} parent=11 // pred_fallthru
          _
        // Predicated region
        $region21: #{simple_cnn_forward.1} parent=11 // pred_check
          %p391 = pneg %p113
        $region22: #{simple_cnn_forward.1} parent=11 // pred_check_branch
          %393 = sbr.rel (%p391) target = $region24
        $region23: #{simple_cnn_forward.1} parent=11 // pred_region
          _
        $region24: #{simple_cnn_forward.1} parent=11 // pred_fallthru
          _
        // Predicated region
        $region25: #{simple_cnn_forward.1} parent=11 // pred_check
          %p394 = pneg %p134
        $region26: #{simple_cnn_forward.1} parent=11 // pred_check_branch
          %396 = sbr.rel (%p394) target = $region28
        $region27: #{simple_cnn_forward.1} parent=11 // pred_region
          _
        $region28: #{simple_cnn_forward.1} parent=11 // pred_fallthru
          _
        // Predicated region
        $region29: #{simple_cnn_forward.1} parent=11 // pred_check
          %p397 = pneg %p155
        $region30: #{simple_cnn_forward.1} parent=11 // pred_check_branch
          %399 = sbr.rel (%p397) target = $region32
        $region31: #{simple_cnn_forward.1} parent=11 // pred_region
          _
        $region32: #{simple_cnn_forward.1} parent=11 // pred_fallthru
          _
        // Predicated region
        $region33: #{simple_cnn_forward.1} parent=11 // pred_check
          %p400 = pneg %p176
        $region34: #{simple_cnn_forward.1} parent=11 // pred_check_branch
          %402 = sbr.rel (%p400) target = $region36
        $region35: #{simple_cnn_forward.1} parent=11 // pred_region
          _
        $region36: #{simple_cnn_forward.1} parent=11 // pred_fallthru
          _
        // Predicated region
        $region37: #{simple_cnn_forward.1} parent=11 // pred_check
          %p403 = pneg %p197
        $region38: #{simple_cnn_forward.1} parent=11 // pred_check_branch
          %405 = sbr.rel (%p403) target = $region40
        $region39: #{simple_cnn_forward.1} parent=11 // pred_region
          _
        $region40: #{simple_cnn_forward.1} parent=11 // pred_fallthru
          _
        // Predicated region
        $region41: #{simple_cnn_forward.1} parent=11 // pred_check
          %p406 = pneg %p218
        $region42: #{simple_cnn_forward.1} parent=11 // pred_check_branch
          %408 = sbr.rel (%p406) target = $region44
        $region43: #{simple_cnn_forward.1} parent=11 // pred_region
          _
        $region44: #{simple_cnn_forward.1} parent=11 // pred_fallthru
          _
        // Predicated region
        $region45: #{simple_cnn_forward.1} parent=11 // pred_check
          %p409 = pneg %p239
        $region46: #{simple_cnn_forward.1} parent=11 // pred_check_branch
          %411 = sbr.rel (%p409) target = $region48
        $region47: #{simple_cnn_forward.1} parent=11 // pred_region
          _
        $region48: #{simple_cnn_forward.1} parent=11 // pred_fallthru
          _
        // Predicated region
        $region49: #{simple_cnn_forward.1} parent=11 // pred_check
          %p412 = pneg %p260
        $region50: #{simple_cnn_forward.1} parent=11 // pred_check_branch
          %414 = sbr.rel (%p412) target = $region52
        $region51: #{simple_cnn_forward.1} parent=11 // pred_region
          _
        $region52: #{simple_cnn_forward.1} parent=11 // pred_fallthru
          _
        // Predicated region
        $region53: #{simple_cnn_forward.1} parent=11 // pred_check
          %p415 = pneg %p281
        $region54: #{simple_cnn_forward.1} parent=11 // pred_check_branch
          %417 = sbr.rel (%p415) target = $region56
        $region55: #{simple_cnn_forward.1} parent=11 // pred_region
          _
        $region56: #{simple_cnn_forward.1} parent=11 // pred_fallthru
          _
        // Predicated region
        $region57: #{simple_cnn_forward.1} parent=11 // pred_check
          %p418 = pneg %p302
        $region58: #{simple_cnn_forward.1} parent=11 // pred_check_branch
          %420 = sbr.rel (%p418) target = $region60
        $region59: #{simple_cnn_forward.1} parent=11 // pred_region
          _
        $region60: #{simple_cnn_forward.1} parent=11 // pred_fallthru
          _
        // Predicated region
        $region61: #{simple_cnn_forward.1} parent=11 // pred_check
          %p421 = pneg %p323
        $region62: #{simple_cnn_forward.1} parent=11 // pred_check_branch
          %423 = sbr.rel (%p421) target = $region64
        $region63: #{simple_cnn_forward.1} parent=11 // pred_region
          _
        $region64: #{simple_cnn_forward.1} parent=11 // pred_fallthru
          _
        // Predicated region
        $region65: #{simple_cnn_forward.1} parent=11 // pred_check
          %p424 = pneg %p344
        $region66: #{simple_cnn_forward.1} parent=11 // pred_check_branch
          %426 = sbr.rel (%p424) target = $region68
        $region67: #{simple_cnn_forward.1} parent=11 // pred_region
          _
        $region68: #{simple_cnn_forward.1} parent=11 // pred_fallthru
          _
      $region12: #{simple_cnn_forward.1} parent=5 // pred_fallthru
        _
      %p427 = scmp.lt.s32.totalorder %s24, 2
      // Predicated region
      $region69: #{simple_cnn_forward.1} parent=5 // pred_check
        %p428 = pneg %p427
      $region70: #{simple_cnn_forward.1} parent=5 // pred_check_branch
        %430 = sbr.rel (%p428) target = $region72
      $region71: #{simple_cnn_forward.1} parent=5 // pred_region
        // Predicated region
        $region73: #{simple_cnn_forward.1} parent=71 // pred_check
          %p431 = pneg %p44
        $region74: #{simple_cnn_forward.1} parent=71 // pred_check_branch
          %433 = sbr.rel (%p431) target = $region76
        $region75: #{simple_cnn_forward.1} parent=71 // pred_region
          %s434 = smul.u32 4, %s24
          %p435 = scmp.lt.s32.totalorder %s434, 7
          %s436 = scalar_select %p435, %s434, 7
          %s437 = smul.addr %s436, 8
          %s438 = scalar_lea.vmem %s0, %s437
          %s439 = smul.u32 4, %s24
        $region76: #{simple_cnn_forward.1} parent=71 // pred_fallthru
          _
      $region72: #{simple_cnn_forward.1} parent=5 // pred_fallthru
        _
      %p440 = scmp.le.s32.totalorder 1, %s24
      %p441 = scmp.lt.s32.totalorder %s24, 3
      %p442 = pnand %p440, %p441
      %p443 = pneg %p442
      // Predicated region
      $region77: #{simple_cnn_forward.1} parent=5 // pred_check
        _
      $region78: #{simple_cnn_forward.1} parent=5 // pred_check_branch
        %445 = sbr.rel (%p442) target = $region80
      $region79: #{simple_cnn_forward.1} parent=5 // pred_region
        %s446 = ssub.s32 %s24, 1
        %s447 = smul.u32 4, %s29
        %p448 = scmp.lt.s32.totalorder %s447, 7
        %s449 = scalar_select %p448, %s447, 7
        %s450 = smul.addr %s449, 8
        %s451 = scalar_lea.vmem %s0, %s450
        %p452 = pneg %p50
        %p453 = pneg %p47
        %p454 = pneg %p71
        %p455 = pneg %p68
        %p456 = pneg %p92
        %p457 = pneg %p89
        %p458 = pneg %p113
        %p459 = pneg %p110
        %p460 = pneg %p134
        %p461 = pneg %p131
        %p462 = pneg %p155
        %p463 = pneg %p152
        %p464 = pneg %p176
        %p465 = pneg %p173
        %p466 = pneg %p197
        %p467 = pneg %p194
        %p468 = pneg %p218
        %p469 = pneg %p215
        %p470 = pneg %p239
        %p471 = pneg %p236
        %p472 = pneg %p260
        %p473 = pneg %p257
        %p474 = pneg %p281
        %p475 = pneg %p278
        %p476 = pneg %p302
        %p477 = pneg %p299
        %p478 = pneg %p323
        %p479 = pneg %p320
        %p480 = pneg %p344
        %p481 = pneg %p341
        %p482 = pneg %p370
        %p483 = pneg %p367
        %s484 = sand.u32 %s357, 1
        %s485 = scalar_lea.sflag [#allocation5], %s484
        %s486 = sand.u32 %s357, 1
        %s487 = scalar_lea.vmem [#allocation4], %s486
        %s488 = smul.u32 4, %s29
        %p489 = scmp.lt.s32.totalorder %s488, 7
        %s490 = scalar_select %p489, %s488, 7
        %s491 = smul.addr %s490, 8
        %s492 = scalar_lea.vmem %s0, %s491
        %s493 = smul.u32 4, %s29
        %v494 = vld [vmem:[%s492] sm:$0xff]
        %v495 = vld [vmem:[%s492 + $0x8] sm:$0xff]
        %v496 = vld [vmem:[%s492 + $0x10] sm:$0xff]
        %v497 = vld [vmem:[%s492 + $0x18] sm:$0xf]
        %v498 = vld [vmem:[%s1] sm:$0xff]
        %v499 = vld [vmem:[%s1 + $0x8] sm:$0xff]
        %v500 = vld [vmem:[%s1 + $0x10] sm:$0xff]
        %v501 = vld [vmem:[%s1 + $0x18] sm:$0xff]
        %v502 = vld [vmem:[%s1 + $0x20] sm:$0xff]
        %v503 = vld [vmem:[%s1 + $0x28] sm:$0xff]
        %v504 = vld [vmem:[%s1 + $0x30] sm:$0xff]
        %v505 = vld [vmem:[%s1 + $0x38] sm:$0xff]
        %v506 = vld [vmem:[%s1 + $0x40] sm:$0xff]
        %v507 = vld [vmem:[%s1 + $0x48] sm:$0xff]
        %v508 = vld [vmem:[%s1 + $0x50] sm:$0xff]
        %v509 = vld [vmem:[%s1 + $0x58] sm:$0xff]
        %v510 = vld [vmem:[%s1 + $0x60] sm:$0xff]
        %v511 = vld [vmem:[%s1 + $0x68] sm:$0xff]
        %v512 = vld [vmem:[%s1 + $0x70] sm:$0xff]
        %v513 = vld [vmem:[%s1 + $0x78] sm:$0xff]
        %v514 = vld [vmem:[%s1 + $0x80] sm:$0xff]
        %v515 = vld [vmem:[%s1 + $0x88] sm:$0xff]
        %v516 = vld [vmem:[%s1 + $0x90] sm:$0xff]
        %v517 = vld [vmem:[%s1 + $0x98] sm:$0xff]
        %v518 = vld [vmem:[%s1 + $0xa0] sm:$0xff]
        %v519 = vld [vmem:[%s1 + $0xa8] sm:$0xff]
        %v520 = vld [vmem:[%s1 + $0xb0] sm:$0xff]
        %v521 = vld [vmem:[%s1 + $0xb8] sm:$0xff]
        %v522 = vld [vmem:[%s492 + $0x1] sm:$0xff]
        %v523 = vld [vmem:[%s492 + $0x9] sm:$0xff]
        %v524 = vld [vmem:[%s492 + $0x11] sm:$0xff]
        %v525 = vld [vmem:[%s492 + $0x19] sm:$0xf]
        %s526 = scalar_lea.vmem %s1, 192
        %v527 = vld [vmem:[%s526] sm:$0xff]
        %v528 = vld [vmem:[%s526 + $0x8] sm:$0xff]
        %v529 = vld [vmem:[%s526 + $0x10] sm:$0xff]
        %v530 = vld [vmem:[%s526 + $0x18] sm:$0xff]
        %v531 = vld [vmem:[%s526 + $0x20] sm:$0xff]
        %v532 = vld [vmem:[%s526 + $0x28] sm:$0xff]
        %v533 = vld [vmem:[%s526 + $0x30] sm:$0xff]
        %v534 = vld [vmem:[%s526 + $0x38] sm:$0xff]
        %v535 = vld [vmem:[%s526 + $0x40] sm:$0xff]
        %v536 = vld [vmem:[%s526 + $0x48] sm:$0xff]
        %v537 = vld [vmem:[%s526 + $0x50] sm:$0xff]
        %v538 = vld [vmem:[%s526 + $0x58] sm:$0xff]
        %v539 = vld [vmem:[%s526 + $0x60] sm:$0xff]
        %v540 = vld [vmem:[%s526 + $0x68] sm:$0xff]
        %v541 = vld [vmem:[%s526 + $0x70] sm:$0xff]
        %v542 = vld [vmem:[%s526 + $0x78] sm:$0xff]
        %v543 = vld [vmem:[%s526 + $0x80] sm:$0xff]
        %v544 = vld [vmem:[%s526 + $0x88] sm:$0xff]
        %v545 = vld [vmem:[%s526 + $0x90] sm:$0xff]
        %v546 = vld [vmem:[%s526 + $0x98] sm:$0xff]
        %v547 = vld [vmem:[%s526 + $0xa0] sm:$0xff]
        %v548 = vld [vmem:[%s526 + $0xa8] sm:$0xff]
        %v549 = vld [vmem:[%s526 + $0xb0] sm:$0xff]
        %v550 = vld [vmem:[%s526 + $0xb8] sm:$0xff]
        %vm551 = vcmask 785408
        %v553 = vsel %vm551, %v522, 0
        %v556 = vsel %vm551, %v523, 0
        %v559 = vsel %vm551, %v524, 0
        %v562 = vsel %vm551, %v525, 0
        %564 = vmatprep.subr.mxu0 %v528
        %565 = vmatpush1.msra.mxu0 %v527
        %566 = vmatprep.subr.mxu0 %v530
        %567 = vmatpush1.msra.mxu0 %v529
        %568 = vmatprep.subr.mxu0 %v532
        %569 = vmatpush1.msra.mxu0 %v531
        %570 = vmatprep.subr.mxu0 %v534
        %571 = vmatpush1.msra.mxu0 %v533
        %572 = vmatprep.subr.mxu0 %v536
        %573 = vmatpush1.msra.mxu0 %v535
        %574 = vmatprep.subr.mxu0 %v538
        %575 = vmatpush1.msra.mxu0 %v537
        %576 = vmatprep.subr.mxu0 %v540
        %577 = vmatpush1.msra.mxu0 %v539
        %578 = vmatprep.subr.mxu0 %v542
        %579 = vmatpush1.msra.mxu0 %v541
        %580 = vmatprep.subr.mxu0 %v544
        %581 = vmatpush1.msra.mxu0 %v543
        %582 = vmatprep.subr.mxu0 %v546
        %583 = vmatpush1.msra.mxu0 %v545
        %584 = vmatprep.subr.mxu0 %v548
        %585 = vmatpush1.msra.mxu0 %v547
        %586 = vmatprep.subr.mxu0 %v550
        %587 = vmatpush1.msra.mxu0 %v549
        %588 = vmatprep.subr.mxu0 0.0
        %589 = vmatpush1.msra.mxu0 0.0
        %590 = vmatprep.subr.mxu0 0.0
        %591 = vmatpush1.msra.mxu0 0.0
        %592 = vmatprep.subr.mxu0 0.0
        %593 = vmatpush1.msra.mxu0 0.0
        %594 = vmatprep.subr.mxu0 0.0
        %595 = vmatpush1.msra.mxu0 0.0
        %596 = vmatprep.subr.mxu0 0.0
        %597 = vmatpush1.msra.mxu0 0.0
        %598 = vmatprep.subr.mxu0 0.0
        %599 = vmatpush1.msra.mxu0 0.0
        %600 = vmatprep.subr.mxu0 0.0
        %601 = vmatpush1.msra.mxu0 0.0
        %602 = vmatprep.subr.mxu0 0.0
        %603 = vmatpush1.msra.mxu0 0.0
        %604 = vmatprep.subr.mxu0 0.0
        %605 = vmatpush1.msra.mxu0 0.0
        %606 = vmatprep.subr.mxu0 0.0
        %607 = vmatpush1.msra.mxu0 0.0
        %608 = vmatprep.subr.mxu0 0.0
        %609 = vmatpush1.msra.mxu0 0.0
        %610 = vmatprep.subr.mxu0 0.0
        %611 = vmatpush1.msra.mxu0 0.0
        %612 = vmatprep.subr.mxu0 0.0
        %613 = vmatpush1.msra.mxu0 0.0
        %614 = vmatprep.subr.mxu0 0.0
        %615 = vmatpush1.msra.mxu0 0.0
        %616 = vmatprep.subr.mxu0 0.0
        %617 = vmatpush1.msra.mxu0 0.0
        %618 = vmatprep.subr.mxu0 0.0
        %619 = vmatpush1.msra.mxu0 0.0
        %620 = vmatprep.subr.mxu0 0.0
        %621 = vmatpush1.msra.mxu0 0.0
        %622 = vmatprep.subr.mxu0 0.0
        %623 = vmatpush1.msra.mxu0 0.0
        %624 = vmatprep.subr.mxu0 0.0
        %625 = vmatpush1.msra.mxu0 0.0
        %626 = vmatprep.subr.mxu0 0.0
        %627 = vmatpush1.msra.mxu0 0.0
        %628 = vmatprep.mubr.f32.mxu0 0.0
        %629 = vmatmul.mubr.f32.gmra.mrb[0].mxu0 %v553
        %v630 = vpop.f32.mrb[0].mxu0
        %v631 = vadd.f32 0.0, %v630
        %v632 = vpop.f32.mrb[0].mxu0
        %v633 = vadd.f32 0.0, %v632
        %634 = vmatprep.mubr.f32.mxu0 0.0
        %635 = vmatmul.mubr.f32.gmra.mrb[0].mxu0 %v556
        %v636 = vpop.f32.mrb[0].mxu0
        %v637 = vadd.f32 0.0, %v636
        %v638 = vpop.f32.mrb[0].mxu0
        %v639 = vadd.f32 0.0, %v638
        %640 = vmatprep.mubr.f32.mxu0 0.0
        %641 = vmatmul.mubr.f32.gmra.mrb[0].mxu0 %v559
        %v642 = vpop.f32.mrb[0].mxu0
        %v643 = vadd.f32 0.0, %v642
        %v644 = vpop.f32.mrb[0].mxu0
        %v645 = vadd.f32 0.0, %v644
        %646 = vmatprep.mubr.f32.mxu0 0.0
        %647 = vmatmul.mubr.f32.gmra.mrb[0].mxu0 %v562
        %v648 = vpop.f32.mrb[0].mxu0
        %v649 = vadd.f32 0.0, %v648
        %v650 = vpop.f32.mrb[0].mxu0
        %v651 = vadd.f32 0.0, %v650
        %652 = vdwg.mxu0
        %v654 = vsel %vm551, %v494, 0
        %v657 = vsel %vm551, %v495, 0
        %v660 = vsel %vm551, %v496, 0
        %v663 = vsel %vm551, %v497, 0
        %665 = vmatprep.subr.mxu0 %v499
        %666 = vmatpush1.msra.mxu0 %v498
        %667 = vmatprep.subr.mxu0 %v501
        %668 = vmatpush1.msra.mxu0 %v500
        %669 = vmatprep.subr.mxu0 %v503
        %670 = vmatpush1.msra.mxu0 %v502
        %671 = vmatprep.subr.mxu0 %v505
        %672 = vmatpush1.msra.mxu0 %v504
        %673 = vmatprep.subr.mxu0 %v507
        %674 = vmatpush1.msra.mxu0 %v506
        %675 = vmatprep.subr.mxu0 %v509
        %676 = vmatpush1.msra.mxu0 %v508
        %677 = vmatprep.subr.mxu0 %v511
        %678 = vmatpush1.msra.mxu0 %v510
        %679 = vmatprep.subr.mxu0 %v513
        %680 = vmatpush1.msra.mxu0 %v512
        %681 = vmatprep.subr.mxu0 %v515
        %682 = vmatpush1.msra.mxu0 %v514
        %683 = vmatprep.subr.mxu0 %v517
        %684 = vmatpush1.msra.mxu0 %v516
        %685 = vmatprep.subr.mxu0 %v519
        %686 = vmatpush1.msra.mxu0 %v518
        %687 = vmatprep.subr.mxu0 %v521
        %688 = vmatpush1.msra.mxu0 %v520
        %689 = vmatprep.subr.mxu0 0.0
        %690 = vmatpush1.msra.mxu0 0.0
        %691 = vmatprep.subr.mxu0 0.0
        %692 = vmatpush1.msra.mxu0 0.0
        %693 = vmatprep.subr.mxu0 0.0
        %694 = vmatpush1.msra.mxu0 0.0
        %695 = vmatprep.subr.mxu0 0.0
        %696 = vmatpush1.msra.mxu0 0.0
        %697 = vmatprep.subr.mxu0 0.0
        %698 = vmatpush1.msra.mxu0 0.0
        %699 = vmatprep.subr.mxu0 0.0
        %700 = vmatpush1.msra.mxu0 0.0
        %701 = vmatprep.subr.mxu0 0.0
        %702 = vmatpush1.msra.mxu0 0.0
        %703 = vmatprep.subr.mxu0 0.0
        %704 = vmatpush1.msra.mxu0 0.0
        %705 = vmatprep.subr.mxu0 0.0
        %706 = vmatpush1.msra.mxu0 0.0
        %707 = vmatprep.subr.mxu0 0.0
        %708 = vmatpush1.msra.mxu0 0.0
        %709 = vmatprep.subr.mxu0 0.0
        %710 = vmatpush1.msra.mxu0 0.0
        %711 = vmatprep.subr.mxu0 0.0
        %712 = vmatpush1.msra.mxu0 0.0
        %713 = vmatprep.subr.mxu0 0.0
        %714 = vmatpush1.msra.mxu0 0.0
        %715 = vmatprep.subr.mxu0 0.0
        %716 = vmatpush1.msra.mxu0 0.0
        %717 = vmatprep.subr.mxu0 0.0
        %718 = vmatpush1.msra.mxu0 0.0
        %719 = vmatprep.subr.mxu0 0.0
        %720 = vmatpush1.msra.mxu0 0.0
        %721 = vmatprep.subr.mxu0 0.0
        %722 = vmatpush1.msra.mxu0 0.0
        %723 = vmatprep.subr.mxu0 0.0
        %724 = vmatpush1.msra.mxu0 0.0
        %725 = vmatprep.subr.mxu0 0.0
        %726 = vmatpush1.msra.mxu0 0.0
        %727 = vmatprep.subr.mxu0 0.0
        %728 = vmatpush1.msra.mxu0 0.0
        %729 = vmatprep.mubr.f32.mxu0 0.0
        %730 = vmatmul.mubr.f32.gmra.mrb[0].mxu0 %v654
        %v731 = vpop.f32.mrb[0].mxu0
        %v732 = vadd.f32 %v631, %v731
        %v733 = vpop.f32.mrb[0].mxu0
        %v734 = vadd.f32 %v633, %v733
        %735 = vmatprep.mubr.f32.mxu0 0.0
        %736 = vmatmul.mubr.f32.gmra.mrb[0].mxu0 %v657
        %v737 = vpop.f32.mrb[0].mxu0
        %v738 = vadd.f32 %v637, %v737
        %v739 = vpop.f32.mrb[0].mxu0
        %v740 = vadd.f32 %v639, %v739
        %741 = vmatprep.mubr.f32.mxu0 0.0
        %742 = vmatmul.mubr.f32.gmra.mrb[0].mxu0 %v660
        %v743 = vpop.f32.mrb[0].mxu0
        %v744 = vadd.f32 %v643, %v743
        %v745 = vpop.f32.mrb[0].mxu0
        %v746 = vadd.f32 %v645, %v745
        %747 = vmatprep.mubr.f32.mxu0 0.0
        %748 = vmatmul.mubr.f32.gmra.mrb[0].mxu0 %v663
        %v749 = vpop.f32.mrb[0].mxu0
        %v750 = vadd.f32 %v649, %v749
        %v751 = vpop.f32.mrb[0].mxu0
        %v752 = vadd.f32 %v651, %v751
        %753 = vdwg.mxu0
        %v754 = vld [vmem:[%s492 + $0x2] sm:$0xff]
        %v755 = vld [vmem:[%s492 + $0xa] sm:$0xff]
        %v756 = vld [vmem:[%s492 + $0x12] sm:$0xff]
        %v757 = vld [vmem:[%s492 + $0x1a] sm:$0xf]
        %s758 = scalar_lea.vmem %s1, 384
        %v759 = vld [vmem:[%s758] sm:$0xff]
        %v760 = vld [vmem:[%s758 + $0x8] sm:$0xff]
        %v761 = vld [vmem:[%s758 + $0x10] sm:$0xff]
        %v762 = vld [vmem:[%s758 + $0x18] sm:$0xff]
        %v763 = vld [vmem:[%s758 + $0x20] sm:$0xff]
        %v764 = vld [vmem:[%s758 + $0x28] sm:$0xff]
        %v765 = vld [vmem:[%s758 + $0x30] sm:$0xff]
        %v766 = vld [vmem:[%s758 + $0x38] sm:$0xff]
        %v767 = vld [vmem:[%s758 + $0x40] sm:$0xff]
        %v768 = vld [vmem:[%s758 + $0x48] sm:$0xff]
        %v769 = vld [vmem:[%s758 + $0x50] sm:$0xff]
        %v770 = vld [vmem:[%s758 + $0x58] sm:$0xff]
        %v771 = vld [vmem:[%s758 + $0x60] sm:$0xff]
        %v772 = vld [vmem:[%s758 + $0x68] sm:$0xff]
        %v773 = vld [vmem:[%s758 + $0x70] sm:$0xff]
        %v774 = vld [vmem:[%s758 + $0x78] sm:$0xff]
        %v775 = vld [vmem:[%s758 + $0x80] sm:$0xff]
        %v776 = vld [vmem:[%s758 + $0x88] sm:$0xff]
        %v777 = vld [vmem:[%s758 + $0x90] sm:$0xff]
        %v778 = vld [vmem:[%s758 + $0x98] sm:$0xff]
        %v779 = vld [vmem:[%s758 + $0xa0] sm:$0xff]
        %v780 = vld [vmem:[%s758 + $0xa8] sm:$0xff]
        %v781 = vld [vmem:[%s758 + $0xb0] sm:$0xff]
        %v782 = vld [vmem:[%s758 + $0xb8] sm:$0xff]
        %v784 = vsel %vm551, %v754, 0
        %v787 = vsel %vm551, %v755, 0
        %v790 = vsel %vm551, %v756, 0
        %v793 = vsel %vm551, %v757, 0
        %795 = vmatprep.subr.mxu0 %v760
        %796 = vmatpush1.msra.mxu0 %v759
        %797 = vmatprep.subr.mxu0 %v762
        %798 = vmatpush1.msra.mxu0 %v761
        %799 = vmatprep.subr.mxu0 %v764
        %800 = vmatpush1.msra.mxu0 %v763
        %801 = vmatprep.subr.mxu0 %v766
        %802 = vmatpush1.msra.mxu0 %v765
        %803 = vmatprep.subr.mxu0 %v768
        %804 = vmatpush1.msra.mxu0 %v767
        %805 = vmatprep.subr.mxu0 %v770
        %806 = vmatpush1.msra.mxu0 %v769
        %807 = vmatprep.subr.mxu0 %v772
        %808 = vmatpush1.msra.mxu0 %v771
        %809 = vmatprep.subr.mxu0 %v774
        %810 = vmatpush1.msra.mxu0 %v773
        %811 = vmatprep.subr.mxu0 %v776
        %812 = vmatpush1.msra.mxu0 %v775
        %813 = vmatprep.subr.mxu0 %v778
        %814 = vmatpush1.msra.mxu0 %v777
        %815 = vmatprep.subr.mxu0 %v780
        %816 = vmatpush1.msra.mxu0 %v779
        %817 = vmatprep.subr.mxu0 %v782
        %818 = vmatpush1.msra.mxu0 %v781
        %819 = vmatprep.subr.mxu0 0.0
        %820 = vmatpush1.msra.mxu0 0.0
        %821 = vmatprep.subr.mxu0 0.0
        %822 = vmatpush1.msra.mxu0 0.0
        %823 = vmatprep.subr.mxu0 0.0
        %824 = vmatpush1.msra.mxu0 0.0
        %825 = vmatprep.subr.mxu0 0.0
        %826 = vmatpush1.msra.mxu0 0.0
        %827 = vmatprep.subr.mxu0 0.0
        %828 = vmatpush1.msra.mxu0 0.0
        %829 = vmatprep.subr.mxu0 0.0
        %830 = vmatpush1.msra.mxu0 0.0
        %831 = vmatprep.subr.mxu0 0.0
        %832 = vmatpush1.msra.mxu0 0.0
        %833 = vmatprep.subr.mxu0 0.0
        %834 = vmatpush1.msra.mxu0 0.0
        %835 = vmatprep.subr.mxu0 0.0
        %836 = vmatpush1.msra.mxu0 0.0
        %837 = vmatprep.subr.mxu0 0.0
        %838 = vmatpush1.msra.mxu0 0.0
        %839 = vmatprep.subr.mxu0 0.0
        %840 = vmatpush1.msra.mxu0 0.0
        %841 = vmatprep.subr.mxu0 0.0
        %842 = vmatpush1.msra.mxu0 0.0
        %843 = vmatprep.subr.mxu0 0.0
        %844 = vmatpush1.msra.mxu0 0.0
        %845 = vmatprep.subr.mxu0 0.0
        %846 = vmatpush1.msra.mxu0 0.0
        %847 = vmatprep.subr.mxu0 0.0
        %848 = vmatpush1.msra.mxu0 0.0
        %849 = vmatprep.subr.mxu0 0.0
        %850 = vmatpush1.msra.mxu0 0.0
        %851 = vmatprep.subr.mxu0 0.0
        %852 = vmatpush1.msra.mxu0 0.0
        %853 = vmatprep.subr.mxu0 0.0
        %854 = vmatpush1.msra.mxu0 0.0
        %855 = vmatprep.subr.mxu0 0.0
        %856 = vmatpush1.msra.mxu0 0.0
        %857 = vmatprep.subr.mxu0 0.0
        %858 = vmatpush1.msra.mxu0 0.0
        %859 = vmatprep.mubr.f32.mxu0 0.0
        %860 = vmatmul.mubr.f32.gmra.mrb[0].mxu0 %v784
        %v861 = vpop.f32.mrb[0].mxu0
        %v862 = vadd.f32 0.0, %v861
        %v863 = vpop.f32.mrb[0].mxu0
        %v864 = vadd.f32 0.0, %v863
        %865 = vmatprep.mubr.f32.mxu0 0.0
        %866 = vmatmul.mubr.f32.gmra.mrb[0].mxu0 %v787
        %v867 = vpop.f32.mrb[0].mxu0
        %v868 = vadd.f32 0.0, %v867
        %v869 = vpop.f32.mrb[0].mxu0
        %v870 = vadd.f32 0.0, %v869
        %871 = vmatprep.mubr.f32.mxu0 0.0
        %872 = vmatmul.mubr.f32.gmra.mrb[0].mxu0 %v790
        %v873 = vpop.f32.mrb[0].mxu0
        %v874 = vadd.f32 0.0, %v873
        %v875 = vpop.f32.mrb[0].mxu0
        %v876 = vadd.f32 0.0, %v875
        %877 = vmatprep.mubr.f32.mxu0 0.0
        %878 = vmatmul.mubr.f32.gmra.mrb[0].mxu0 %v793
        %v879 = vpop.f32.mrb[0].mxu0
        %v880 = vadd.f32 0.0, %v879
        %v881 = vpop.f32.mrb[0].mxu0
        %v882 = vadd.f32 0.0, %v881
        %883 = vdwg.mxu0
        %v884 = vadd.f32 %v732, %v862
        %v885 = vadd.f32 %v734, %v864
        %v886 = vadd.f32 %v738, %v868
        %v887 = vadd.f32 %v740, %v870
        %v888 = vadd.f32 %v744, %v874
        %v889 = vadd.f32 %v746, %v876
        %v890 = vadd.f32 %v750, %v880
        %v891 = vadd.f32 %v752, %v882
        %v892 = vld [vmem:[%s492 + $0x3] sm:$0xff]
        %v893 = vld [vmem:[%s492 + $0xb] sm:$0xff]
        %v894 = vld [vmem:[%s492 + $0x13] sm:$0xff]
        %v895 = vld [vmem:[%s492 + $0x1b] sm:$0xf]
        %s896 = scalar_lea.vmem %s1, 576
        %v897 = vld [vmem:[%s896] sm:$0xff]
        %v898 = vld [vmem:[%s896 + $0x8] sm:$0xff]
        %v899 = vld [vmem:[%s896 + $0x10] sm:$0xff]
        %v900 = vld [vmem:[%s896 + $0x18] sm:$0xff]
        %v901 = vld [vmem:[%s896 + $0x20] sm:$0xff]
        %v902 = vld [vmem:[%s896 + $0x28] sm:$0xff]
        %v903 = vld [vmem:[%s896 + $0x30] sm:$0xff]
        %v904 = vld [vmem:[%s896 + $0x38] sm:$0xff]
        %v905 = vld [vmem:[%s896 + $0x40] sm:$0xff]
        %v906 = vld [vmem:[%s896 + $0x48] sm:$0xff]
        %v907 = vld [vmem:[%s896 + $0x50] sm:$0xff]
        %v908 = vld [vmem:[%s896 + $0x58] sm:$0xff]
        %v909 = vld [vmem:[%s896 + $0x60] sm:$0xff]
        %v910 = vld [vmem:[%s896 + $0x68] sm:$0xff]
        %v911 = vld [vmem:[%s896 + $0x70] sm:$0xff]
        %v912 = vld [vmem:[%s896 + $0x78] sm:$0xff]
        %v913 = vld [vmem:[%s896 + $0x80] sm:$0xff]
        %v914 = vld [vmem:[%s896 + $0x88] sm:$0xff]
        %v915 = vld [vmem:[%s896 + $0x90] sm:$0xff]
        %v916 = vld [vmem:[%s896 + $0x98] sm:$0xff]
        %v917 = vld [vmem:[%s896 + $0xa0] sm:$0xff]
        %v918 = vld [vmem:[%s896 + $0xa8] sm:$0xff]
        %v919 = vld [vmem:[%s896 + $0xb0] sm:$0xff]
        %v920 = vld [vmem:[%s896 + $0xb8] sm:$0xff]
        %v922 = vsel %vm551, %v892, 0
        %v925 = vsel %vm551, %v893, 0
        %v928 = vsel %vm551, %v894, 0
        %v931 = vsel %vm551, %v895, 0
        %933 = vmatprep.subr.mxu0 %v898
        %934 = vmatpush1.msra.mxu0 %v897
        %935 = vmatprep.subr.mxu0 %v900
        %936 = vmatpush1.msra.mxu0 %v899
        %937 = vmatprep.subr.mxu0 %v902
        %938 = vmatpush1.msra.mxu0 %v901
        %939 = vmatprep.subr.mxu0 %v904
        %940 = vmatpush1.msra.mxu0 %v903
        %941 = vmatprep.subr.mxu0 %v906
        %942 = vmatpush1.msra.mxu0 %v905
        %943 = vmatprep.subr.mxu0 %v908
        %944 = vmatpush1.msra.mxu0 %v907
        %945 = vmatprep.subr.mxu0 %v910
        %946 = vmatpush1.msra.mxu0 %v909
        %947 = vmatprep.subr.mxu0 %v912
        %948 = vmatpush1.msra.mxu0 %v911
        %949 = vmatprep.subr.mxu0 %v914
        %950 = vmatpush1.msra.mxu0 %v913
        %951 = vmatprep.subr.mxu0 %v916
        %952 = vmatpush1.msra.mxu0 %v915
        %953 = vmatprep.subr.mxu0 %v918
        %954 = vmatpush1.msra.mxu0 %v917
        %955 = vmatprep.subr.mxu0 %v920
        %956 = vmatpush1.msra.mxu0 %v919
        %957 = vmatprep.subr.mxu0 0.0
        %958 = vmatpush1.msra.mxu0 0.0
        %959 = vmatprep.subr.mxu0 0.0
        %960 = vmatpush1.msra.mxu0 0.0
        %961 = vmatprep.subr.mxu0 0.0
        %962 = vmatpush1.msra.mxu0 0.0
        %963 = vmatprep.subr.mxu0 0.0
        %964 = vmatpush1.msra.mxu0 0.0
        %965 = vmatprep.subr.mxu0 0.0
        %966 = vmatpush1.msra.mxu0 0.0
        %967 = vmatprep.subr.mxu0 0.0
        %968 = vmatpush1.msra.mxu0 0.0
        %969 = vmatprep.subr.mxu0 0.0
        %970 = vmatpush1.msra.mxu0 0.0
        %971 = vmatprep.subr.mxu0 0.0
        %972 = vmatpush1.msra.mxu0 0.0
        %973 = vmatprep.subr.mxu0 0.0
        %974 = vmatpush1.msra.mxu0 0.0
        %975 = vmatprep.subr.mxu0 0.0
        %976 = vmatpush1.msra.mxu0 0.0
        %977 = vmatprep.subr.mxu0 0.0
        %978 = vmatpush1.msra.mxu0 0.0
        %979 = vmatprep.subr.mxu0 0.0
        %980 = vmatpush1.msra.mxu0 0.0
        %981 = vmatprep.subr.mxu0 0.0
        %982 = vmatpush1.msra.mxu0 0.0
        %983 = vmatprep.subr.mxu0 0.0
        %984 = vmatpush1.msra.mxu0 0.0
        %985 = vmatprep.subr.mxu0 0.0
        %986 = vmatpush1.msra.mxu0 0.0
        %987 = vmatprep.subr.mxu0 0.0
        %988 = vmatpush1.msra.mxu0 0.0
        %989 = vmatprep.subr.mxu0 0.0
        %990 = vmatpush1.msra.mxu0 0.0
        %991 = vmatprep.subr.mxu0 0.0
        %992 = vmatpush1.msra.mxu0 0.0
        %993 = vmatprep.subr.mxu0 0.0
        %994 = vmatpush1.msra.mxu0 0.0
        %995 = vmatprep.subr.mxu0 0.0
        %996 = vmatpush1.msra.mxu0 0.0
        %997 = vmatprep.mubr.f32.mxu0 0.0
        %998 = vmatmul.mubr.f32.gmra.mrb[0].mxu0 %v922
        %v999 = vpop.f32.mrb[0].mxu0
        %v1000 = vadd.f32 0.0, %v999
        %v1001 = vpop.f32.mrb[0].mxu0
        %v1002 = vadd.f32 0.0, %v1001
        %1003 = vmatprep.mubr.f32.mxu0 0.0
        %1004 = vmatmul.mubr.f32.gmra.mrb[0].mxu0 %v925
        %v1005 = vpop.f32.mrb[0].mxu0
        %v1006 = vadd.f32 0.0, %v1005
        %v1007 = vpop.f32.mrb[0].mxu0
        %v1008 = vadd.f32 0.0, %v1007
        %1009 = vmatprep.mubr.f32.mxu0 0.0
        %1010 = vmatmul.mubr.f32.gmra.mrb[0].mxu0 %v928
        %v1011 = vpop.f32.mrb[0].mxu0
        %v1012 = vadd.f32 0.0, %v1011
        %v1013 = vpop.f32.mrb[0].mxu0
        %v1014 = vadd.f32 0.0, %v1013
        %1015 = vmatprep.mubr.f32.mxu0 0.0
        %1016 = vmatmul.mubr.f32.gmra.mrb[0].mxu0 %v931
        %v1017 = vpop.f32.mrb[0].mxu0
        %v1018 = vadd.f32 0.0, %v1017
        %v1019 = vpop.f32.mrb[0].mxu0
        %v1020 = vadd.f32 0.0, %v1019
        %1021 = vdwg.mxu0
        %v1022 = vadd.f32 %v884, %v1000
        %v1023 = vadd.f32 %v885, %v1002
        %v1024 = vadd.f32 %v886, %v1006
        %v1025 = vadd.f32 %v887, %v1008
        %v1026 = vadd.f32 %v888, %v1012
        %v1027 = vadd.f32 %v889, %v1014
        %v1028 = vadd.f32 %v890, %v1018
        %v1029 = vadd.f32 %v891, %v1020
        %v1030 = vld [vmem:[%s492 + $0x4] sm:$0xff]
        %v1031 = vld [vmem:[%s492 + $0xc] sm:$0xff]
        %v1032 = vld [vmem:[%s492 + $0x14] sm:$0xff]
        %v1033 = vld [vmem:[%s492 + $0x1c] sm:$0xf]
        %s1034 = scalar_lea.vmem %s1, 768
        %v1035 = vld [vmem:[%s1034] sm:$0xff]
        %v1036 = vld [vmem:[%s1034 + $0x8] sm:$0xff]
        %v1037 = vld [vmem:[%s1034 + $0x10] sm:$0xff]
        %v1038 = vld [vmem:[%s1034 + $0x18] sm:$0xff]
        %v1039 = vld [vmem:[%s1034 + $0x20] sm:$0xff]
        %v1040 = vld [vmem:[%s1034 + $0x28] sm:$0xff]
        %v1041 = vld [vmem:[%s1034 + $0x30] sm:$0xff]
        %v1042 = vld [vmem:[%s1034 + $0x38] sm:$0xff]
        %v1043 = vld [vmem:[%s1034 + $0x40] sm:$0xff]
        %v1044 = vld [vmem:[%s1034 + $0x48] sm:$0xff]
        %v1045 = vld [vmem:[%s1034 + $0x50] sm:$0xff]
        %v1046 = vld [vmem:[%s1034 + $0x58] sm:$0xff]
        %v1047 = vld [vmem:[%s1034 + $0x60] sm:$0xff]
        %v1048 = vld [vmem:[%s1034 + $0x68] sm:$0xff]
        %v1049 = vld [vmem:[%s1034 + $0x70] sm:$0xff]
        %v1050 = vld [vmem:[%s1034 + $0x78] sm:$0xff]
        %v1051 = vld [vmem:[%s1034 + $0x80] sm:$0xff]
        %v1052 = vld [vmem:[%s1034 + $0x88] sm:$0xff]
        %v1053 = vld [vmem:[%s1034 + $0x90] sm:$0xff]
        %v1054 = vld [vmem:[%s1034 + $0x98] sm:$0xff]
        %v1055 = vld [vmem:[%s1034 + $0xa0] sm:$0xff]
        %v1056 = vld [vmem:[%s1034 + $0xa8] sm:$0xff]
        %v1057 = vld [vmem:[%s1034 + $0xb0] sm:$0xff]
        %v1058 = vld [vmem:[%s1034 + $0xb8] sm:$0xff]
        %v1060 = vsel %vm551, %v1030, 0
        %v1063 = vsel %vm551, %v1031, 0
        %v1066 = vsel %vm551, %v1032, 0
        %v1069 = vsel %vm551, %v1033, 0
        %1071 = vmatprep.subr.mxu0 %v1036
        %1072 = vmatpush1.msra.mxu0 %v1035
        %1073 = vmatprep.subr.mxu0 %v1038
        %1074 = vmatpush1.msra.mxu0 %v1037
        %1075 = vmatprep.subr.mxu0 %v1040
        %1076 = vmatpush1.msra.mxu0 %v1039
        %1077 = vmatprep.subr.mxu0 %v1042
        %1078 = vmatpush1.msra.mxu0 %v1041
        %1079 = vmatprep.subr.mxu0 %v1044
        %1080 = vmatpush1.msra.mxu0 %v1043
        %1081 = vmatprep.subr.mxu0 %v1046
        %1082 = vmatpush1.msra.mxu0 %v1045
        %1083 = vmatprep.subr.mxu0 %v1048
        %1084 = vmatpush1.msra.mxu0 %v1047
        %1085 = vmatprep.subr.mxu0 %v1050
        %1086 = vmatpush1.msra.mxu0 %v1049
        %1087 = vmatprep.subr.mxu0 %v1052
        %1088 = vmatpush1.msra.mxu0 %v1051
        %1089 = vmatprep.subr.mxu0 %v1054
        %1090 = vmatpush1.msra.mxu0 %v1053
        %1091 = vmatprep.subr.mxu0 %v1056
        %1092 = vmatpush1.msra.mxu0 %v1055
        %1093 = vmatprep.subr.mxu0 %v1058
        %1094 = vmatpush1.msra.mxu0 %v1057
        %1095 = vmatprep.subr.mxu0 0.0
        %1096 = vmatpush1.msra.mxu0 0.0
        %1097 = vmatprep.subr.mxu0 0.0
        %1098 = vmatpush1.msra.mxu0 0.0
        %1099 = vmatprep.subr.mxu0 0.0
        %1100 = vmatpush1.msra.mxu0 0.0
        %1101 = vmatprep.subr.mxu0 0.0
        %1102 = vmatpush1.msra.mxu0 0.0
        %1103 = vmatprep.subr.mxu0 0.0
        %1104 = vmatpush1.msra.mxu0 0.0
        %1105 = vmatprep.subr.mxu0 0.0
        %1106 = vmatpush1.msra.mxu0 0.0
        %1107 = vmatprep.subr.mxu0 0.0
        %1108 = vmatpush1.msra.mxu0 0.0
        %1109 = vmatprep.subr.mxu0 0.0
        %1110 = vmatpush1.msra.mxu0 0.0
        %1111 = vmatprep.subr.mxu0 0.0
        %1112 = vmatpush1.msra.mxu0 0.0
        %1113 = vmatprep.subr.mxu0 0.0
        %1114 = vmatpush1.msra.mxu0 0.0
        %1115 = vmatprep.subr.mxu0 0.0
        %1116 = vmatpush1.msra.mxu0 0.0
        %1117 = vmatprep.subr.mxu0 0.0
        %1118 = vmatpush1.msra.mxu0 0.0
        %1119 = vmatprep.subr.mxu0 0.0
        %1120 = vmatpush1.msra.mxu0 0.0
        %1121 = vmatprep.subr.mxu0 0.0
        %1122 = vmatpush1.msra.mxu0 0.0
        %1123 = vmatprep.subr.mxu0 0.0
        %1124 = vmatpush1.msra.mxu0 0.0
        %1125 = vmatprep.subr.mxu0 0.0
        %1126 = vmatpush1.msra.mxu0 0.0
        %1127 = vmatprep.subr.mxu0 0.0
        %1128 = vmatpush1.msra.mxu0 0.0
        %1129 = vmatprep.subr.mxu0 0.0
        %1130 = vmatpush1.msra.mxu0 0.0
        %1131 = vmatprep.subr.mxu0 0.0
        %1132 = vmatpush1.msra.mxu0 0.0
        %1133 = vmatprep.subr.mxu0 0.0
        %1134 = vmatpush1.msra.mxu0 0.0
        %1135 = vmatprep.mubr.f32.mxu0 0.0
        %1136 = vmatmul.mubr.f32.gmra.mrb[0].mxu0 %v1060
        %v1137 = vpop.f32.mrb[0].mxu0
        %v1138 = vadd.f32 0.0, %v1137
        %v1139 = vpop.f32.mrb[0].mxu0
        %v1140 = vadd.f32 0.0, %v1139
        %1141 = vmatprep.mubr.f32.mxu0 0.0
        %1142 = vmatmul.mubr.f32.gmra.mrb[0].mxu0 %v1063
        %v1143 = vpop.f32.mrb[0].mxu0
        %v1144 = vadd.f32 0.0, %v1143
        %v1145 = vpop.f32.mrb[0].mxu0
        %v1146 = vadd.f32 0.0, %v1145
        %1147 = vmatprep.mubr.f32.mxu0 0.0
        %1148 = vmatmul.mubr.f32.gmra.mrb[0].mxu0 %v1066
        %v1149 = vpop.f32.mrb[0].mxu0
        %v1150 = vadd.f32 0.0, %v1149
        %v1151 = vpop.f32.mrb[0].mxu0
        %v1152 = vadd.f32 0.0, %v1151
        %1153 = vmatprep.mubr.f32.mxu0 0.0
        %1154 = vmatmul.mubr.f32.gmra.mrb[0].mxu0 %v1069
        %v1155 = vpop.f32.mrb[0].mxu0
        %v1156 = vadd.f32 0.0, %v1155
        %v1157 = vpop.f32.mrb[0].mxu0
        %v1158 = vadd.f32 0.0, %v1157
        %1159 = vdwg.mxu0
        %v1160 = vadd.f32 %v1022, %v1138
        %v1161 = vadd.f32 %v1023, %v1140
        %v1162 = vadd.f32 %v1024, %v1144
        %v1163 = vadd.f32 %v1025, %v1146
        %v1164 = vadd.f32 %v1026, %v1150
        %v1165 = vadd.f32 %v1027, %v1152
        %v1166 = vadd.f32 %v1028, %v1156
        %v1167 = vadd.f32 %v1029, %v1158
        %v1168 = vld [vmem:[%s2] sm:$0x3]
        %v1170 = vlaneseq
        %v1171 = vshrl.u32 %v1170, 7
        %v1172 = vsub.s32 0, %v1171
        %v1173 = vrot.slane %v1168, %v1172
        %v1174 = vlaneseq
        %v1175 = vshrl.u32 %v1174, 7
        %v1176 = vsub.s32 1, %v1175
        %v1177 = vrot.slane %v1168, %v1176
        %v1180 = vadd.f32 %v1160, %v1173
        %v1181 = vadd.f32 %v1161, %v1177
        %v1182 = vadd.f32 %v1162, %v1173
        %v1183 = vadd.f32 %v1163, %v1177
        %v1184 = vadd.f32 %v1164, %v1173
        %v1185 = vadd.f32 %v1165, %v1177
        %v1186 = vadd.f32 %v1166, %v1173
        %v1187 = vadd.f32 %v1167, %v1177
        %v1188 = vmax.f32 %v1180, 0.0
        %v1189 = vmax.f32 %v1181, 0.0
        %v1190 = vmax.f32 %v1182, 0.0
        %v1191 = vmax.f32 %v1183, 0.0
        %v1192 = vmax.f32 %v1184, 0.0
        %v1193 = vmax.f32 %v1185, 0.0
        %v1194 = vmax.f32 %v1186, 0.0
        %v1195 = vmax.f32 %v1187, 0.0
        %v1196 = vld [vmem:[%s3] sm:$0xff]
        %v1197 = vld [vmem:[%s3 + $0x8] sm:$0x3f]
        %vm1198 = vcmask 228352
        %v1200 = vsel %vm1198, %v1196, 0
        %v1203 = vsel %vm1198, %v1197, 0
        %vm1205 = vcmask 1043456
        %v1207 = vsel %vm1205, %v1194, 0
        %v1210 = vsel %vm1205, %v1195, 0
        %1212 = vmatprep.subr.mxu0 %v1189
        %1213 = vmatpush1.msra.mxu0 %v1188
        %1214 = vmatprep.subr.mxu0 %v1191
        %1215 = vmatpush1.msra.mxu0 %v1190
        %1216 = vmatprep.subr.mxu0 %v1193
        %1217 = vmatpush1.msra.mxu0 %v1192
        %1218 = vmatprep.subr.mxu0 %v1210
        %1219 = vmatpush1.msra.mxu0 %v1207
        %1220 = vmatprep.subr.mxu0 0.0
        %1221 = vmatpush1.msra.mxu0 0.0
        %1222 = vmatprep.subr.mxu0 0.0
        %1223 = vmatpush1.msra.mxu0 0.0
        %1224 = vmatprep.subr.mxu0 0.0
        %1225 = vmatpush1.msra.mxu0 0.0
        %1226 = vmatprep.subr.mxu0 0.0
        %1227 = vmatpush1.msra.mxu0 0.0
        %1228 = vmatprep.subr.mxu0 0.0
        %1229 = vmatpush1.msra.mxu0 0.0
        %1230 = vmatprep.subr.mxu0 0.0
        %1231 = vmatpush1.msra.mxu0 0.0
        %1232 = vmatprep.subr.mxu0 0.0
        %1233 = vmatpush1.msra.mxu0 0.0
        %1234 = vmatprep.subr.mxu0 0.0
        %1235 = vmatpush1.msra.mxu0 0.0
        %1236 = vmatprep.subr.mxu0 0.0
        %1237 = vmatpush1.msra.mxu0 0.0
        %1238 = vmatprep.subr.mxu0 0.0
        %1239 = vmatpush1.msra.mxu0 0.0
        %1240 = vmatprep.subr.mxu0 0.0
        %1241 = vmatpush1.msra.mxu0 0.0
        %1242 = vmatprep.subr.mxu0 0.0
        %1243 = vmatpush1.msra.mxu0 0.0
        %1244 = vmatprep.subr.mxu0 0.0
        %1245 = vmatpush1.msra.mxu0 0.0
        %1246 = vmatprep.subr.mxu0 0.0
        %1247 = vmatpush1.msra.mxu0 0.0
        %1248 = vmatprep.subr.mxu0 0.0
        %1249 = vmatpush1.msra.mxu0 0.0
        %1250 = vmatprep.subr.mxu0 0.0
        %1251 = vmatpush1.msra.mxu0 0.0
        %1252 = vmatprep.subr.mxu0 0.0
        %1253 = vmatpush1.msra.mxu0 0.0
        %1254 = vmatprep.subr.mxu0 0.0
        %1255 = vmatpush1.msra.mxu0 0.0
        %1256 = vmatprep.subr.mxu0 0.0
        %1257 = vmatpush1.msra.mxu0 0.0
        %1258 = vmatprep.subr.mxu0 0.0
        %1259 = vmatpush1.msra.mxu0 0.0
        %1260 = vmatprep.subr.mxu0 0.0
        %1261 = vmatpush1.msra.mxu0 0.0
        %1262 = vmatprep.subr.mxu0 0.0
        %1263 = vmatpush1.msra.mxu0 0.0
        %1264 = vmatprep.subr.mxu0 0.0
        %1265 = vmatpush1.msra.mxu0 0.0
        %1266 = vmatprep.subr.mxu0 0.0
        %1267 = vmatpush1.msra.mxu0 0.0
        %1268 = vmatprep.subr.mxu0 0.0
        %1269 = vmatpush1.msra.mxu0 0.0
        %1270 = vmatprep.subr.mxu0 0.0
        %1271 = vmatpush1.msra.mxu0 0.0
        %1272 = vmatprep.subr.mxu0 0.0
        %1273 = vmatpush1.msra.mxu0 0.0
        %1274 = vmatprep.subr.mxu0 0.0
        %1275 = vmatpush1.msra.mxu0 0.0
        %1276 = vmatprep.mubr.f32.mxu0 0.0
        %1277 = vmatmul.mubr.f32.gmra.mrb[0].mxu0 %v1200
        %v1278 = vpop.f32.mrb[0].mxu0
        %v1279 = vadd.f32 0.0, %v1278
        %v1280 = vpop.f32.mrb[0].mxu0
        %v1281 = vadd.f32 0.0, %v1280
        %1282 = vmatprep.mubr.f32.mxu0 0.0
        %1283 = vmatmul.mubr.f32.gmra.mrb[0].mxu0 %v1203
        %v1284 = vpop.f32.mrb[0].mxu0
        %v1285 = vadd.f32 0.0, %v1284
        %v1286 = vpop.f32.mrb[0].mxu0
        %v1287 = vadd.f32 0.0, %v1286
        %1288 = vdwg.mxu0
        %s1289 = scalar_lea.vmem %s3, 16
        %v1290 = vld [vmem:[%s1289] sm:$0xff]
        %v1291 = vld [vmem:[%s1289 + $0x8] sm:$0x3f]
        %v1293 = vsel %vm1198, %v1290, 0
        %v1296 = vsel %vm1198, %v1291, 0
        %1298 = vmatprep.subr.mxu0 %v1189
        %1299 = vmatpush1.msra.mxu0 %v1188
        %1300 = vmatprep.subr.mxu0 %v1191
        %1301 = vmatpush1.msra.mxu0 %v1190
        %1302 = vmatprep.subr.mxu0 %v1193
        %1303 = vmatpush1.msra.mxu0 %v1192
        %1304 = vmatprep.subr.mxu0 %v1210
        %1305 = vmatpush1.msra.mxu0 %v1207
        %1306 = vmatprep.subr.mxu0 0.0
        %1307 = vmatpush1.msra.mxu0 0.0
        %1308 = vmatprep.subr.mxu0 0.0
        %1309 = vmatpush1.msra.mxu0 0.0
        %1310 = vmatprep.subr.mxu0 0.0
        %1311 = vmatpush1.msra.mxu0 0.0
        %1312 = vmatprep.subr.mxu0 0.0
        %1313 = vmatpush1.msra.mxu0 0.0
        %1314 = vmatprep.subr.mxu0 0.0
        %1315 = vmatpush1.msra.mxu0 0.0
        %1316 = vmatprep.subr.mxu0 0.0
        %1317 = vmatpush1.msra.mxu0 0.0
        %1318 = vmatprep.subr.mxu0 0.0
        %1319 = vmatpush1.msra.mxu0 0.0
        %1320 = vmatprep.subr.mxu0 0.0
        %1321 = vmatpush1.msra.mxu0 0.0
        %1322 = vmatprep.subr.mxu0 0.0
        %1323 = vmatpush1.msra.mxu0 0.0
        %1324 = vmatprep.subr.mxu0 0.0
        %1325 = vmatpush1.msra.mxu0 0.0
        %1326 = vmatprep.subr.mxu0 0.0
        %1327 = vmatpush1.msra.mxu0 0.0
        %1328 = vmatprep.subr.mxu0 0.0
        %1329 = vmatpush1.msra.mxu0 0.0
        %1330 = vmatprep.subr.mxu0 0.0
        %1331 = vmatpush1.msra.mxu0 0.0
        %1332 = vmatprep.subr.mxu0 0.0
        %1333 = vmatpush1.msra.mxu0 0.0
        %1334 = vmatprep.subr.mxu0 0.0
        %1335 = vmatpush1.msra.mxu0 0.0
        %1336 = vmatprep.subr.mxu0 0.0
        %1337 = vmatpush1.msra.mxu0 0.0
        %1338 = vmatprep.subr.mxu0 0.0
        %1339 = vmatpush1.msra.mxu0 0.0
        %1340 = vmatprep.subr.mxu0 0.0
        %1341 = vmatpush1.msra.mxu0 0.0
        %1342 = vmatprep.subr.mxu0 0.0
        %1343 = vmatpush1.msra.mxu0 0.0
        %1344 = vmatprep.subr.mxu0 0.0
        %1345 = vmatpush1.msra.mxu0 0.0
        %1346 = vmatprep.subr.mxu0 0.0
        %1347 = vmatpush1.msra.mxu0 0.0
        %1348 = vmatprep.subr.mxu0 0.0
        %1349 = vmatpush1.msra.mxu0 0.0
        %1350 = vmatprep.subr.mxu0 0.0
        %1351 = vmatpush1.msra.mxu0 0.0
        %1352 = vmatprep.subr.mxu0 0.0
        %1353 = vmatpush1.msra.mxu0 0.0
        %1354 = vmatprep.subr.mxu0 0.0
        %1355 = vmatpush1.msra.mxu0 0.0
        %1356 = vmatprep.subr.mxu0 0.0
        %1357 = vmatpush1.msra.mxu0 0.0
        %1358 = vmatprep.subr.mxu0 0.0
        %1359 = vmatpush1.msra.mxu0 0.0
        %1360 = vmatprep.subr.mxu0 0.0
        %1361 = vmatpush1.msra.mxu0 0.0
        %1362 = vmatprep.mubr.f32.mxu0 0.0
        %1363 = vmatmul.mubr.f32.gmra.mrb[0].mxu0 %v1293
        %v1364 = vpop.f32.mrb[0].mxu0
        %v1365 = vadd.f32 0.0, %v1364
        %v1366 = vpop.f32.mrb[0].mxu0
        %v1367 = vadd.f32 0.0, %v1366
        %1368 = vmatprep.mubr.f32.mxu0 0.0
        %1369 = vmatmul.mubr.f32.gmra.mrb[0].mxu0 %v1296
        %v1370 = vpop.f32.mrb[0].mxu0
        %v1371 = vadd.f32 0.0, %v1370
        %v1372 = vpop.f32.mrb[0].mxu0
        %v1373 = vadd.f32 0.0, %v1372
        %1374 = vdwg.mxu0
        %v1375 = vmax.f32 %v1279, %v1365
        %v1376 = vmax.f32 %v1281, %v1367
        %v1377 = vmax.f32 %v1285, %v1371
        %v1378 = vmax.f32 %v1287, %v1373
        %v1379 = vld [vmem:[%s4] sm:$0xff]
        %v1380 = vld [vmem:[%s4 + $0x8] sm:$0xff]
        %v1381 = vld [vmem:[%s4 + $0x10] sm:$0xff]
        %v1382 = vld [vmem:[%s4 + $0x18] sm:$0xff]
        %v1383 = vld [vmem:[%s4 + $0x20] sm:$0xff]
        %v1384 = vld [vmem:[%s4 + $0x28] sm:$0xff]
        %v1385 = vld [vmem:[%s4 + $0x30] sm:$0xff]
        %v1386 = vld [vmem:[%s4 + $0x38] sm:$0xff]
        %v1387 = vld [vmem:[%s4 + $0x40] sm:$0xff]
        %v1388 = vld [vmem:[%s4 + $0x48] sm:$0xff]
        %v1389 = vld [vmem:[%s4 + $0x50] sm:$0xff]
        %v1390 = vld [vmem:[%s4 + $0x58] sm:$0xff]
        %v1391 = vld [vmem:[%s4 + $0x60] sm:$0xff]
        %v1392 = vld [vmem:[%s4 + $0x68] sm:$0xff]
        %v1393 = vld [vmem:[%s4 + $0x70] sm:$0xff]
        %v1394 = vld [vmem:[%s4 + $0x78] sm:$0xff]
        %v1395 = vld [vmem:[%s4 + $0x80] sm:$0xff]
        %v1396 = vld [vmem:[%s4 + $0x88] sm:$0xff]
        %v1397 = vld [vmem:[%s4 + $0x90] sm:$0xff]
        %v1398 = vld [vmem:[%s4 + $0x98] sm:$0xff]
        %v1399 = vld [vmem:[%s4 + $0xa0] sm:$0xff]
        %vm1400 = vcmask 326656
        %v1402 = vsel %vm1400, %v1376, 0
        %v1405 = vsel %vm1400, %v1378, 0
        %1407 = vmatprep.subr.mxu0 0.0
        %1408 = vmatpush1.msra.mxu0 %v1379
        %1409 = vmatprep.subr.mxu0 0.0
        %1410 = vmatpush1.msra.mxu0 %v1380
        %1411 = vmatprep.subr.mxu0 0.0
        %1412 = vmatpush1.msra.mxu0 %v1381
        %1413 = vmatprep.subr.mxu0 0.0
        %1414 = vmatpush1.msra.mxu0 %v1382
        %1415 = vmatprep.subr.mxu0 0.0
        %1416 = vmatpush1.msra.mxu0 %v1383
        %1417 = vmatprep.subr.mxu0 0.0
        %1418 = vmatpush1.msra.mxu0 %v1384
        %1419 = vmatprep.subr.mxu0 0.0
        %1420 = vmatpush1.msra.mxu0 %v1385
        %1421 = vmatprep.subr.mxu0 0.0
        %1422 = vmatpush1.msra.mxu0 %v1386
        %1423 = vmatprep.subr.mxu0 0.0
        %1424 = vmatpush1.msra.mxu0 %v1387
        %1425 = vmatprep.subr.mxu0 0.0
        %1426 = vmatpush1.msra.mxu0 %v1388
        %1427 = vmatprep.subr.mxu0 0.0
        %1428 = vmatpush1.msra.mxu0 %v1389
        %1429 = vmatprep.subr.mxu0 0.0
        %1430 = vmatpush1.msra.mxu0 %v1390
        %1431 = vmatprep.subr.mxu0 0.0
        %1432 = vmatpush1.msra.mxu0 %v1391
        %1433 = vmatprep.subr.mxu0 0.0
        %1434 = vmatpush1.msra.mxu0 %v1392
        %1435 = vmatprep.subr.mxu0 0.0
        %1436 = vmatpush1.msra.mxu0 %v1393
        %1437 = vmatprep.subr.mxu0 0.0
        %1438 = vmatpush1.msra.mxu0 %v1394
        %1439 = vmatprep.subr.mxu0 0.0
        %1440 = vmatpush1.msra.mxu0 %v1395
        %1441 = vmatprep.subr.mxu0 0.0
        %1442 = vmatpush1.msra.mxu0 %v1396
        %1443 = vmatprep.subr.mxu0 0.0
        %1444 = vmatpush1.msra.mxu0 %v1397
        %1445 = vmatprep.subr.mxu0 0.0
        %1446 = vmatpush1.msra.mxu0 %v1398
        %1447 = vmatprep.subr.mxu0 0.0
        %1448 = vmatpush1.msra.mxu0 %v1399
        %1449 = vmatprep.subr.mxu0 0.0
        %1450 = vmatpush1.msra.mxu0 0.0
        %1451 = vmatprep.subr.mxu0 0.0
        %1452 = vmatpush1.msra.mxu0 0.0
        %1453 = vmatprep.subr.mxu0 0.0
        %1454 = vmatpush1.msra.mxu0 0.0
        %1455 = vmatprep.subr.mxu0 0.0
        %1456 = vmatpush1.msra.mxu0 0.0
        %1457 = vmatprep.subr.mxu0 0.0
        %1458 = vmatpush1.msra.mxu0 0.0
        %1459 = vmatprep.subr.mxu0 0.0
        %1460 = vmatpush1.msra.mxu0 0.0
        %1461 = vmatprep.subr.mxu0 0.0
        %1462 = vmatpush1.msra.mxu0 0.0
        %1463 = vmatprep.subr.mxu0 0.0
        %1464 = vmatpush1.msra.mxu0 0.0
        %1465 = vmatprep.subr.mxu0 0.0
        %1466 = vmatpush1.msra.mxu0 0.0
        %1467 = vmatprep.subr.mxu0 0.0
        %1468 = vmatpush1.msra.mxu0 0.0
        %1469 = vmatprep.subr.mxu0 0.0
        %1470 = vmatpush1.msra.mxu0 0.0
        %1471 = vmatprep.mubr.f32.mxu0 %v1402
        %1472 = vmatmul.mubr.f32.gmra.mrb[0].mxu0 %v1375
        %v1473 = vpop.f32.mrb[0].mxu0
        %v1474 = vadd.f32 0.0, %v1473
        %v1475 = vpop.f32.mrb[0].mxu0
        %1476 = vmatprep.mubr.f32.mxu0 %v1405
        %1477 = vmatmul.mubr.f32.gmra.mrb[0].mxu0 %v1377
        %v1478 = vpop.f32.mrb[0].mxu0
        %v1479 = vadd.f32 0.0, %v1478
        %v1480 = vpop.f32.mrb[0].mxu0
        %1481 = vdwg.mxu0
        %s1482 = scalar_lea.vmem %s4, 168
        %v1483 = vld [vmem:[%s1482] sm:$0xff]
        %v1484 = vld [vmem:[%s1482 + $0x8] sm:$0xff]
        %v1485 = vld [vmem:[%s1482 + $0x10] sm:$0xff]
        %v1486 = vld [vmem:[%s1482 + $0x18] sm:$0xff]
        %v1487 = vld [vmem:[%s1482 + $0x20] sm:$0xff]
        %v1488 = vld [vmem:[%s1482 + $0x28] sm:$0xff]
        %v1489 = vld [vmem:[%s1482 + $0x30] sm:$0xff]
        %v1490 = vld [vmem:[%s1482 + $0x38] sm:$0xff]
        %v1491 = vld [vmem:[%s1482 + $0x40] sm:$0xff]
        %v1492 = vld [vmem:[%s1482 + $0x48] sm:$0xff]
        %v1493 = vld [vmem:[%s1482 + $0x50] sm:$0xff]
        %v1494 = vld [vmem:[%s1482 + $0x58] sm:$0xff]
        %v1495 = vld [vmem:[%s1482 + $0x60] sm:$0xff]
        %v1496 = vld [vmem:[%s1482 + $0x68] sm:$0xff]
        %v1497 = vld [vmem:[%s1482 + $0x70] sm:$0xff]
        %v1498 = vld [vmem:[%s1482 + $0x78] sm:$0xff]
        %v1499 = vld [vmem:[%s1482 + $0x80] sm:$0xff]
        %v1500 = vld [vmem:[%s1482 + $0x88] sm:$0xff]
        %v1501 = vld [vmem:[%s1482 + $0x90] sm:$0xff]
        %v1502 = vld [vmem:[%s1482 + $0x98] sm:$0xff]
        %v1503 = vld [vmem:[%s1482 + $0xa0] sm:$0xff]
        %1504 = vmatprep.subr.mxu0 0.0
        %1505 = vmatpush1.msra.mxu0 %v1483
        %1506 = vmatprep.subr.mxu0 0.0
        %1507 = vmatpush1.msra.mxu0 %v1484
        %1508 = vmatprep.subr.mxu0 0.0
        %1509 = vmatpush1.msra.mxu0 %v1485
        %1510 = vmatprep.subr.mxu0 0.0
        %1511 = vmatpush1.msra.mxu0 %v1486
        %1512 = vmatprep.subr.mxu0 0.0
        %1513 = vmatpush1.msra.mxu0 %v1487
        %1514 = vmatprep.subr.mxu0 0.0
        %1515 = vmatpush1.msra.mxu0 %v1488
        %1516 = vmatprep.subr.mxu0 0.0
        %1517 = vmatpush1.msra.mxu0 %v1489
        %1518 = vmatprep.subr.mxu0 0.0
        %1519 = vmatpush1.msra.mxu0 %v1490
        %1520 = vmatprep.subr.mxu0 0.0
        %1521 = vmatpush1.msra.mxu0 %v1491
        %1522 = vmatprep.subr.mxu0 0.0
        %1523 = vmatpush1.msra.mxu0 %v1492
        %1524 = vmatprep.subr.mxu0 0.0
        %1525 = vmatpush1.msra.mxu0 %v1493
        %1526 = vmatprep.subr.mxu0 0.0
        %1527 = vmatpush1.msra.mxu0 %v1494
        %1528 = vmatprep.subr.mxu0 0.0
        %1529 = vmatpush1.msra.mxu0 %v1495
        %1530 = vmatprep.subr.mxu0 0.0
        %1531 = vmatpush1.msra.mxu0 %v1496
        %1532 = vmatprep.subr.mxu0 0.0
        %1533 = vmatpush1.msra.mxu0 %v1497
        %1534 = vmatprep.subr.mxu0 0.0
        %1535 = vmatpush1.msra.mxu0 %v1498
        %1536 = vmatprep.subr.mxu0 0.0
        %1537 = vmatpush1.msra.mxu0 %v1499
        %1538 = vmatprep.subr.mxu0 0.0
        %1539 = vmatpush1.msra.mxu0 %v1500
        %1540 = vmatprep.subr.mxu0 0.0
        %1541 = vmatpush1.msra.mxu0 %v1501
        %1542 = vmatprep.subr.mxu0 0.0
        %1543 = vmatpush1.msra.mxu0 %v1502
        %1544 = vmatprep.subr.mxu0 0.0
        %1545 = vmatpush1.msra.mxu0 %v1503
        %1546 = vmatprep.subr.mxu0 0.0
        %1547 = vmatpush1.msra.mxu0 0.0
        %1548 = vmatprep.subr.mxu0 0.0
        %1549 = vmatpush1.msra.mxu0 0.0
        %1550 = vmatprep.subr.mxu0 0.0
        %1551 = vmatpush1.msra.mxu0 0.0
        %1552 = vmatprep.subr.mxu0 0.0
        %1553 = vmatpush1.msra.mxu0 0.0
        %1554 = vmatprep.subr.mxu0 0.0
        %1555 = vmatpush1.msra.mxu0 0.0
        %1556 = vmatprep.subr.mxu0 0.0
        %1557 = vmatpush1.msra.mxu0 0.0
        %1558 = vmatprep.subr.mxu0 0.0
        %1559 = vmatpush1.msra.mxu0 0.0
        %1560 = vmatprep.subr.mxu0 0.0
        %1561 = vmatpush1.msra.mxu0 0.0
        %1562 = vmatprep.subr.mxu0 0.0
        %1563 = vmatpush1.msra.mxu0 0.0
        %1564 = vmatprep.subr.mxu0 0.0
        %1565 = vmatpush1.msra.mxu0 0.0
        %1566 = vmatprep.subr.mxu0 0.0
        %1567 = vmatpush1.msra.mxu0 0.0
        %1568 = vmatprep.mubr.f32.mxu0 %v1402
        %1569 = vmatmul.mubr.f32.gmra.mrb[0].mxu0 %v1375
        %v1570 = vpop.f32.mrb[0].mxu0
        %v1571 = vadd.f32 0.0, %v1570
        %v1572 = vpop.f32.mrb[0].mxu0
        %1573 = vmatprep.mubr.f32.mxu0 %v1405
        %1574 = vmatmul.mubr.f32.gmra.mrb[0].mxu0 %v1377
        %v1575 = vpop.f32.mrb[0].mxu0
        %v1576 = vadd.f32 0.0, %v1575
        %v1577 = vpop.f32.mrb[0].mxu0
        %1578 = vdwg.mxu0
        %v1579 = vmax.f32 %v1474, %v1571
        %v1580 = vmax.f32 %v1479, %v1576
        %vm1581 = vcmask 687104
        %1582 = vst.msk [vmem:[#allocation2] sm:$0xff] %vm1581, %v1579
        %vm1583 = vcmask 685056
        %1584 = vst.msk [vmem:[#allocation2 + $0x8] sm:$0x3f] %vm1583, %v1580
        %v1585 = vld [vmem:[#allocation2] sm:$0xff]
        %v1586 = vld [vmem:[#allocation2 + $0x8] sm:$0x3]
        %v1587 = vld [vmem:[%s5] sm:$0xff]
        %v1588 = vld [vmem:[%s5 + $0x8] sm:$0xff]
        %v1589 = vld [vmem:[%s5 + $0x10] sm:$0xff]
        %v1590 = vld [vmem:[%s5 + $0x18] sm:$0xff]
        %v1591 = vld [vmem:[%s5 + $0x20] sm:$0xff]
        %v1592 = vld [vmem:[%s5 + $0x28] sm:$0xff]
        %v1593 = vld [vmem:[%s5 + $0x30] sm:$0xff]
        %v1594 = vld [vmem:[%s5 + $0x38] sm:$0xff]
        %v1595 = vld [vmem:[%s5 + $0x40] sm:$0xff]
        %v1596 = vld [vmem:[%s5 + $0x48] sm:$0xff]
        %v1597 = vld [vmem:[%s5 + $0x50] sm:$0xff]
        %v1598 = vld [vmem:[%s5 + $0x58] sm:$0xff]
        %v1599 = vld [vmem:[%s5 + $0x60] sm:$0xff]
        %v1600 = vld [vmem:[%s5 + $0x68] sm:$0xff]
        %v1601 = vld [vmem:[%s5 + $0x70] sm:$0xff]
        %v1602 = vld [vmem:[%s5 + $0x78] sm:$0xff]
        %v1603 = vld [vmem:[%s5 + $0x80] sm:$0xff]
        %v1604 = vld [vmem:[%s5 + $0x88] sm:$0xff]
        %v1605 = vld [vmem:[%s5 + $0x90] sm:$0xff]
        %v1606 = vld [vmem:[%s5 + $0x98] sm:$0xff]
        %v1607 = vld [vmem:[%s5 + $0xa0] sm:$0xf]
        %v1608 = vld [vmem:[%s5 + $0xa8] sm:$0xf]
        %v1609 = vld [vmem:[#allocation2 + $0x1] sm:$0xff]
        %v1610 = vld [vmem:[#allocation2 + $0x9] sm:$0x3]
        %s1611 = scalar_lea.vmem %s5, 176
        %v1612 = vld [vmem:[%s1611] sm:$0xff]
        %v1613 = vld [vmem:[%s1611 + $0x8] sm:$0xff]
        %v1614 = vld [vmem:[%s1611 + $0x10] sm:$0xff]
        %v1615 = vld [vmem:[%s1611 + $0x18] sm:$0xff]
        %v1616 = vld [vmem:[%s1611 + $0x20] sm:$0xff]
        %v1617 = vld [vmem:[%s1611 + $0x28] sm:$0xff]
        %v1618 = vld [vmem:[%s1611 + $0x30] sm:$0xff]
        %v1619 = vld [vmem:[%s1611 + $0x38] sm:$0xff]
        %v1620 = vld [vmem:[%s1611 + $0x40] sm:$0xff]
        %v1621 = vld [vmem:[%s1611 + $0x48] sm:$0xff]
        %v1622 = vld [vmem:[%s1611 + $0x50] sm:$0xff]
        %v1623 = vld [vmem:[%s1611 + $0x58] sm:$0xff]
        %v1624 = vld [vmem:[%s1611 + $0x60] sm:$0xff]
        %v1625 = vld [vmem:[%s1611 + $0x68] sm:$0xff]
        %v1626 = vld [vmem:[%s1611 + $0x70] sm:$0xff]
        %v1627 = vld [vmem:[%s1611 + $0x78] sm:$0xff]
        %v1628 = vld [vmem:[%s1611 + $0x80] sm:$0xff]
        %v1629 = vld [vmem:[%s1611 + $0x88] sm:$0xff]
        %v1630 = vld [vmem:[%s1611 + $0x90] sm:$0xff]
        %v1631 = vld [vmem:[%s1611 + $0x98] sm:$0xff]
        %v1632 = vld [vmem:[%s1611 + $0xa0] sm:$0xf]
        %v1633 = vld [vmem:[%s1611 + $0xa8] sm:$0xf]
        %v1635 = vsel %vm1581, %v1609, 0
        %v1638 = vsel %vm1581, %v1610, 0
        %v1641 = vsel %vm1205, %v1632, 0
        %v1644 = vsel %vm1205, %v1633, 0
        %1646 = vmatprep.subr.mxu0 %v1613
        %1647 = vmatpush1.msra.mxu0 %v1612
        %1648 = vmatprep.subr.mxu0 %v1615
        %1649 = vmatpush1.msra.mxu0 %v1614
        %1650 = vmatprep.subr.mxu0 %v1617
        %1651 = vmatpush1.msra.mxu0 %v1616
        %1652 = vmatprep.subr.mxu0 %v1619
        %1653 = vmatpush1.msra.mxu0 %v1618
        %1654 = vmatprep.subr.mxu0 %v1621
        %1655 = vmatpush1.msra.mxu0 %v1620
        %1656 = vmatprep.subr.mxu0 %v1623
        %1657 = vmatpush1.msra.mxu0 %v1622
        %1658 = vmatprep.subr.mxu0 %v1625
        %1659 = vmatpush1.msra.mxu0 %v1624
        %1660 = vmatprep.subr.mxu0 %v1627
        %1661 = vmatpush1.msra.mxu0 %v1626
        %1662 = vmatprep.subr.mxu0 %v1629
        %1663 = vmatpush1.msra.mxu0 %v1628
        %1664 = vmatprep.subr.mxu0 %v1631
        %1665 = vmatpush1.msra.mxu0 %v1630
        %1666 = vmatprep.subr.mxu0 %v1644
        %1667 = vmatpush1.msra.mxu0 %v1641
        %1668 = vmatprep.subr.mxu0 0.0
        %1669 = vmatpush1.msra.mxu0 0.0
        %1670 = vmatprep.subr.mxu0 0.0
        %1671 = vmatpush1.msra.mxu0 0.0
        %1672 = vmatprep.subr.mxu0 0.0
        %1673 = vmatpush1.msra.mxu0 0.0
        %1674 = vmatprep.subr.mxu0 0.0
        %1675 = vmatpush1.msra.mxu0 0.0
        %1676 = vmatprep.subr.mxu0 0.0
        %1677 = vmatpush1.msra.mxu0 0.0
        %1678 = vmatprep.subr.mxu0 0.0
        %1679 = vmatpush1.msra.mxu0 0.0
        %1680 = vmatprep.subr.mxu0 0.0
        %1681 = vmatpush1.msra.mxu0 0.0
        %1682 = vmatprep.subr.mxu0 0.0
        %1683 = vmatpush1.msra.mxu0 0.0
        %1684 = vmatprep.subr.mxu0 0.0
        %1685 = vmatpush1.msra.mxu0 0.0
        %1686 = vmatprep.subr.mxu0 0.0
        %1687 = vmatpush1.msra.mxu0 0.0
        %1688 = vmatprep.subr.mxu0 0.0
        %1689 = vmatpush1.msra.mxu0 0.0
        %1690 = vmatprep.subr.mxu0 0.0
        %1691 = vmatpush1.msra.mxu0 0.0
        %1692 = vmatprep.subr.mxu0 0.0
        %1693 = vmatpush1.msra.mxu0 0.0
        %1694 = vmatprep.subr.mxu0 0.0
        %1695 = vmatpush1.msra.mxu0 0.0
        %1696 = vmatprep.subr.mxu0 0.0
        %1697 = vmatpush1.msra.mxu0 0.0
        %1698 = vmatprep.subr.mxu0 0.0
        %1699 = vmatpush1.msra.mxu0 0.0
        %1700 = vmatprep.subr.mxu0 0.0
        %1701 = vmatpush1.msra.mxu0 0.0
        %1702 = vmatprep.subr.mxu0 0.0
        %1703 = vmatpush1.msra.mxu0 0.0
        %1704 = vmatprep.subr.mxu0 0.0
        %1705 = vmatpush1.msra.mxu0 0.0
        %1706 = vmatprep.subr.mxu0 0.0
        %1707 = vmatpush1.msra.mxu0 0.0
        %1708 = vmatprep.subr.mxu0 0.0
        %1709 = vmatpush1.msra.mxu0 0.0
        %1710 = vmatprep.mubr.f32.mxu0 0.0
        %1711 = vmatmul.mubr.f32.gmra.mrb[0].mxu0 %v1635
        %v1712 = vpop.f32.mrb[0].mxu0
        %v1713 = vadd.f32 0.0, %v1712
        %v1714 = vpop.f32.mrb[0].mxu0
        %v1715 = vadd.f32 0.0, %v1714
        %1716 = vmatprep.mubr.f32.mxu0 0.0
        %1717 = vmatmul.mubr.f32.gmra.mrb[0].mxu0 %v1638
        %v1718 = vpop.f32.mrb[0].mxu0
        %v1719 = vadd.f32 0.0, %v1718
        %v1720 = vpop.f32.mrb[0].mxu0
        %v1721 = vadd.f32 0.0, %v1720
        %1722 = vdwg.mxu0
        %v1724 = vsel %vm1581, %v1585, 0
        %v1727 = vsel %vm1581, %v1586, 0
        %v1730 = vsel %vm1205, %v1607, 0
        %v1733 = vsel %vm1205, %v1608, 0
        %1735 = vmatprep.subr.mxu0 %v1588
        %1736 = vmatpush1.msra.mxu0 %v1587
        %1737 = vmatprep.subr.mxu0 %v1590
        %1738 = vmatpush1.msra.mxu0 %v1589
        %1739 = vmatprep.subr.mxu0 %v1592
        %1740 = vmatpush1.msra.mxu0 %v1591
        %1741 = vmatprep.subr.mxu0 %v1594
        %1742 = vmatpush1.msra.mxu0 %v1593
        %1743 = vmatprep.subr.mxu0 %v1596
        %1744 = vmatpush1.msra.mxu0 %v1595
        %1745 = vmatprep.subr.mxu0 %v1598
        %1746 = vmatpush1.msra.mxu0 %v1597
        %1747 = vmatprep.subr.mxu0 %v1600
        %1748 = vmatpush1.msra.mxu0 %v1599
        %1749 = vmatprep.subr.mxu0 %v1602
        %1750 = vmatpush1.msra.mxu0 %v1601
        %1751 = vmatprep.subr.mxu0 %v1604
        %1752 = vmatpush1.msra.mxu0 %v1603
        %1753 = vmatprep.subr.mxu0 %v1606
        %1754 = vmatpush1.msra.mxu0 %v1605
        %1755 = vmatprep.subr.mxu0 %v1733
        %1756 = vmatpush1.msra.mxu0 %v1730
        %1757 = vmatprep.subr.mxu0 0.0
        %1758 = vmatpush1.msra.mxu0 0.0
        %1759 = vmatprep.subr.mxu0 0.0
        %1760 = vmatpush1.msra.mxu0 0.0
        %1761 = vmatprep.subr.mxu0 0.0
        %1762 = vmatpush1.msra.mxu0 0.0
        %1763 = vmatprep.subr.mxu0 0.0
        %1764 = vmatpush1.msra.mxu0 0.0
        %1765 = vmatprep.subr.mxu0 0.0
        %1766 = vmatpush1.msra.mxu0 0.0
        %1767 = vmatprep.subr.mxu0 0.0
        %1768 = vmatpush1.msra.mxu0 0.0
        %1769 = vmatprep.subr.mxu0 0.0
        %1770 = vmatpush1.msra.mxu0 0.0
        %1771 = vmatprep.subr.mxu0 0.0
        %1772 = vmatpush1.msra.mxu0 0.0
        %1773 = vmatprep.subr.mxu0 0.0
        %1774 = vmatpush1.msra.mxu0 0.0
        %1775 = vmatprep.subr.mxu0 0.0
        %1776 = vmatpush1.msra.mxu0 0.0
        %1777 = vmatprep.subr.mxu0 0.0
        %1778 = vmatpush1.msra.mxu0 0.0
        %1779 = vmatprep.subr.mxu0 0.0
        %1780 = vmatpush1.msra.mxu0 0.0
        %1781 = vmatprep.subr.mxu0 0.0
        %1782 = vmatpush1.msra.mxu0 0.0
        %1783 = vmatprep.subr.mxu0 0.0
        %1784 = vmatpush1.msra.mxu0 0.0
        %1785 = vmatprep.subr.mxu0 0.0
        %1786 = vmatpush1.msra.mxu0 0.0
        %1787 = vmatprep.subr.mxu0 0.0
        %1788 = vmatpush1.msra.mxu0 0.0
        %1789 = vmatprep.subr.mxu0 0.0
        %1790 = vmatpush1.msra.mxu0 0.0
        %1791 = vmatprep.subr.mxu0 0.0
        %1792 = vmatpush1.msra.mxu0 0.0
        %1793 = vmatprep.subr.mxu0 0.0
        %1794 = vmatpush1.msra.mxu0 0.0
        %1795 = vmatprep.subr.mxu0 0.0
        %1796 = vmatpush1.msra.mxu0 0.0
        %1797 = vmatprep.subr.mxu0 0.0
        %1798 = vmatpush1.msra.mxu0 0.0
        %1799 = vmatprep.mubr.f32.mxu0 0.0
        %1800 = vmatmul.mubr.f32.gmra.mrb[0].mxu0 %v1724
        %v1801 = vpop.f32.mrb[0].mxu0
        %v1802 = vadd.f32 %v1713, %v1801
        %v1803 = vpop.f32.mrb[0].mxu0
        %v1804 = vadd.f32 %v1715, %v1803
        %1805 = vmatprep.mubr.f32.mxu0 0.0
        %1806 = vmatmul.mubr.f32.gmra.mrb[0].mxu0 %v1727
        %v1807 = vpop.f32.mrb[0].mxu0
        %v1808 = vadd.f32 %v1719, %v1807
        %v1809 = vpop.f32.mrb[0].mxu0
        %v1810 = vadd.f32 %v1721, %v1809
        %1811 = vdwg.mxu0
        %v1812 = vld [vmem:[#allocation2 + $0x2] sm:$0xff]
        %v1813 = vld [vmem:[#allocation2 + $0xa] sm:$0x3]
        %s1814 = scalar_lea.vmem %s5, 352
        %v1815 = vld [vmem:[%s1814] sm:$0xff]
        %v1816 = vld [vmem:[%s1814 + $0x8] sm:$0xff]
        %v1817 = vld [vmem:[%s1814 + $0x10] sm:$0xff]
        %v1818 = vld [vmem:[%s1814 + $0x18] sm:$0xff]
        %v1819 = vld [vmem:[%s1814 + $0x20] sm:$0xff]
        %v1820 = vld [vmem:[%s1814 + $0x28] sm:$0xff]
        %v1821 = vld [vmem:[%s1814 + $0x30] sm:$0xff]
        %v1822 = vld [vmem:[%s1814 + $0x38] sm:$0xff]
        %v1823 = vld [vmem:[%s1814 + $0x40] sm:$0xff]
        %v1824 = vld [vmem:[%s1814 + $0x48] sm:$0xff]
        %v1825 = vld [vmem:[%s1814 + $0x50] sm:$0xff]
        %v1826 = vld [vmem:[%s1814 + $0x58] sm:$0xff]
        %v1827 = vld [vmem:[%s1814 + $0x60] sm:$0xff]
        %v1828 = vld [vmem:[%s1814 + $0x68] sm:$0xff]
        %v1829 = vld [vmem:[%s1814 + $0x70] sm:$0xff]
        %v1830 = vld [vmem:[%s1814 + $0x78] sm:$0xff]
        %v1831 = vld [vmem:[%s1814 + $0x80] sm:$0xff]
        %v1832 = vld [vmem:[%s1814 + $0x88] sm:$0xff]
        %v1833 = vld [vmem:[%s1814 + $0x90] sm:$0xff]
        %v1834 = vld [vmem:[%s1814 + $0x98] sm:$0xff]
        %v1835 = vld [vmem:[%s1814 + $0xa0] sm:$0xf]
        %v1836 = vld [vmem:[%s1814 + $0xa8] sm:$0xf]
        %v1838 = vsel %vm1581, %v1812, 0
        %v1841 = vsel %vm1581, %v1813, 0
        %v1844 = vsel %vm1205, %v1835, 0
        %v1847 = vsel %vm1205, %v1836, 0
        %1849 = vmatprep.subr.mxu0 %v1816
        %1850 = vmatpush1.msra.mxu0 %v1815
        %1851 = vmatprep.subr.mxu0 %v1818
        %1852 = vmatpush1.msra.mxu0 %v1817
        %1853 = vmatprep.subr.mxu0 %v1820
        %1854 = vmatpush1.msra.mxu0 %v1819
        %1855 = vmatprep.subr.mxu0 %v1822
        %1856 = vmatpush1.msra.mxu0 %v1821
        %1857 = vmatprep.subr.mxu0 %v1824
        %1858 = vmatpush1.msra.mxu0 %v1823
        %1859 = vmatprep.subr.mxu0 %v1826
        %1860 = vmatpush1.msra.mxu0 %v1825
        %1861 = vmatprep.subr.mxu0 %v1828
        %1862 = vmatpush1.msra.mxu0 %v1827
        %1863 = vmatprep.subr.mxu0 %v1830
        %1864 = vmatpush1.msra.mxu0 %v1829
        %1865 = vmatprep.subr.mxu0 %v1832
        %1866 = vmatpush1.msra.mxu0 %v1831
        %1867 = vmatprep.subr.mxu0 %v1834
        %1868 = vmatpush1.msra.mxu0 %v1833
        %1869 = vmatprep.subr.mxu0 %v1847
        %1870 = vmatpush1.msra.mxu0 %v1844
        %1871 = vmatprep.subr.mxu0 0.0
        %1872 = vmatpush1.msra.mxu0 0.0
        %1873 = vmatprep.subr.mxu0 0.0
        %1874 = vmatpush1.msra.mxu0 0.0
        %1875 = vmatprep.subr.mxu0 0.0
        %1876 = vmatpush1.msra.mxu0 0.0
        %1877 = vmatprep.subr.mxu0 0.0
        %1878 = vmatpush1.msra.mxu0 0.0
        %1879 = vmatprep.subr.mxu0 0.0
        %1880 = vmatpush1.msra.mxu0 0.0
        %1881 = vmatprep.subr.mxu0 0.0
        %1882 = vmatpush1.msra.mxu0 0.0
        %1883 = vmatprep.subr.mxu0 0.0
        %1884 = vmatpush1.msra.mxu0 0.0
        %1885 = vmatprep.subr.mxu0 0.0
        %1886 = vmatpush1.msra.mxu0 0.0
        %1887 = vmatprep.subr.mxu0 0.0
        %1888 = vmatpush1.msra.mxu0 0.0
        %1889 = vmatprep.subr.mxu0 0.0
        %1890 = vmatpush1.msra.mxu0 0.0
        %1891 = vmatprep.subr.mxu0 0.0
        %1892 = vmatpush1.msra.mxu0 0.0
        %1893 = vmatprep.subr.mxu0 0.0
        %1894 = vmatpush1.msra.mxu0 0.0
        %1895 = vmatprep.subr.mxu0 0.0
        %1896 = vmatpush1.msra.mxu0 0.0
        %1897 = vmatprep.subr.mxu0 0.0
        %1898 = vmatpush1.msra.mxu0 0.0
        %1899 = vmatprep.subr.mxu0 0.0
        %1900 = vmatpush1.msra.mxu0 0.0
        %1901 = vmatprep.subr.mxu0 0.0
        %1902 = vmatpush1.msra.mxu0 0.0
        %1903 = vmatprep.subr.mxu0 0.0
        %1904 = vmatpush1.msra.mxu0 0.0
        %1905 = vmatprep.subr.mxu0 0.0
        %1906 = vmatpush1.msra.mxu0 0.0
        %1907 = vmatprep.subr.mxu0 0.0
        %1908 = vmatpush1.msra.mxu0 0.0
        %1909 = vmatprep.subr.mxu0 0.0
        %1910 = vmatpush1.msra.mxu0 0.0
        %1911 = vmatprep.subr.mxu0 0.0
        %1912 = vmatpush1.msra.mxu0 0.0
        %1913 = vmatprep.mubr.f32.mxu0 0.0
        %1914 = vmatmul.mubr.f32.gmra.mrb[0].mxu0 %v1838
        %v1915 = vpop.f32.mrb[0].mxu0
        %v1916 = vadd.f32 0.0, %v1915
        %v1917 = vpop.f32.mrb[0].mxu0
        %v1918 = vadd.f32 0.0, %v1917
        %1919 = vmatprep.mubr.f32.mxu0 0.0
        %1920 = vmatmul.mubr.f32.gmra.mrb[0].mxu0 %v1841
        %v1921 = vpop.f32.mrb[0].mxu0
        %v1922 = vadd.f32 0.0, %v1921
        %v1923 = vpop.f32.mrb[0].mxu0
        %v1924 = vadd.f32 0.0, %v1923
        %1925 = vdwg.mxu0
        %v1926 = vadd.f32 %v1802, %v1916
        %v1927 = vadd.f32 %v1804, %v1918
        %v1928 = vadd.f32 %v1808, %v1922
        %v1929 = vadd.f32 %v1810, %v1924
        %v1930 = vld [vmem:[#allocation2 + $0x3] sm:$0xff]
        %v1931 = vld [vmem:[#allocation2 + $0xb] sm:$0x3]
        %s1932 = scalar_lea.vmem %s5, 528
        %v1933 = vld [vmem:[%s1932] sm:$0xff]
        %v1934 = vld [vmem:[%s1932 + $0x8] sm:$0xff]
        %v1935 = vld [vmem:[%s1932 + $0x10] sm:$0xff]
        %v1936 = vld [vmem:[%s1932 + $0x18] sm:$0xff]
        %v1937 = vld [vmem:[%s1932 + $0x20] sm:$0xff]
        %v1938 = vld [vmem:[%s1932 + $0x28] sm:$0xff]
        %v1939 = vld [vmem:[%s1932 + $0x30] sm:$0xff]
        %v1940 = vld [vmem:[%s1932 + $0x38] sm:$0xff]
        %v1941 = vld [vmem:[%s1932 + $0x40] sm:$0xff]
        %v1942 = vld [vmem:[%s1932 + $0x48] sm:$0xff]
        %v1943 = vld [vmem:[%s1932 + $0x50] sm:$0xff]
        %v1944 = vld [vmem:[%s1932 + $0x58] sm:$0xff]
        %v1945 = vld [vmem:[%s1932 + $0x60] sm:$0xff]
        %v1946 = vld [vmem:[%s1932 + $0x68] sm:$0xff]
        %v1947 = vld [vmem:[%s1932 + $0x70] sm:$0xff]
        %v1948 = vld [vmem:[%s1932 + $0x78] sm:$0xff]
        %v1949 = vld [vmem:[%s1932 + $0x80] sm:$0xff]
        %v1950 = vld [vmem:[%s1932 + $0x88] sm:$0xff]
        %v1951 = vld [vmem:[%s1932 + $0x90] sm:$0xff]
        %v1952 = vld [vmem:[%s1932 + $0x98] sm:$0xff]
        %v1953 = vld [vmem:[%s1932 + $0xa0] sm:$0xf]
        %v1954 = vld [vmem:[%s1932 + $0xa8] sm:$0xf]
        %v1956 = vsel %vm1581, %v1930, 0
        %v1959 = vsel %vm1581, %v1931, 0
        %v1962 = vsel %vm1205, %v1953, 0
        %v1965 = vsel %vm1205, %v1954, 0
        %1967 = vmatprep.subr.mxu0 %v1934
        %1968 = vmatpush1.msra.mxu0 %v1933
        %1969 = vmatprep.subr.mxu0 %v1936
        %1970 = vmatpush1.msra.mxu0 %v1935
        %1971 = vmatprep.subr.mxu0 %v1938
        %1972 = vmatpush1.msra.mxu0 %v1937
        %1973 = vmatprep.subr.mxu0 %v1940
        %1974 = vmatpush1.msra.mxu0 %v1939
        %1975 = vmatprep.subr.mxu0 %v1942
        %1976 = vmatpush1.msra.mxu0 %v1941
        %1977 = vmatprep.subr.mxu0 %v1944
        %1978 = vmatpush1.msra.mxu0 %v1943
        %1979 = vmatprep.subr.mxu0 %v1946
        %1980 = vmatpush1.msra.mxu0 %v1945
        %1981 = vmatprep.subr.mxu0 %v1948
        %1982 = vmatpush1.msra.mxu0 %v1947
        %1983 = vmatprep.subr.mxu0 %v1950
        %1984 = vmatpush1.msra.mxu0 %v1949
        %1985 = vmatprep.subr.mxu0 %v1952
        %1986 = vmatpush1.msra.mxu0 %v1951
        %1987 = vmatprep.subr.mxu0 %v1965
        %1988 = vmatpush1.msra.mxu0 %v1962
        %1989 = vmatprep.subr.mxu0 0.0
        %1990 = vmatpush1.msra.mxu0 0.0
        %1991 = vmatprep.subr.mxu0 0.0
        %1992 = vmatpush1.msra.mxu0 0.0
        %1993 = vmatprep.subr.mxu0 0.0
        %1994 = vmatpush1.msra.mxu0 0.0
        %1995 = vmatprep.subr.mxu0 0.0
        %1996 = vmatpush1.msra.mxu0 0.0
        %1997 = vmatprep.subr.mxu0 0.0
        %1998 = vmatpush1.msra.mxu0 0.0
        %1999 = vmatprep.subr.mxu0 0.0
        %2000 = vmatpush1.msra.mxu0 0.0
        %2001 = vmatprep.subr.mxu0 0.0
        %2002 = vmatpush1.msra.mxu0 0.0
        %2003 = vmatprep.subr.mxu0 0.0
        %2004 = vmatpush1.msra.mxu0 0.0
        %2005 = vmatprep.subr.mxu0 0.0
        %2006 = vmatpush1.msra.mxu0 0.0
        %2007 = vmatprep.subr.mxu0 0.0
        %2008 = vmatpush1.msra.mxu0 0.0
        %2009 = vmatprep.subr.mxu0 0.0
        %2010 = vmatpush1.msra.mxu0 0.0
        %2011 = vmatprep.subr.mxu0 0.0
        %2012 = vmatpush1.msra.mxu0 0.0
        %2013 = vmatprep.subr.mxu0 0.0
        %2014 = vmatpush1.msra.mxu0 0.0
        %2015 = vmatprep.subr.mxu0 0.0
        %2016 = vmatpush1.msra.mxu0 0.0
        %2017 = vmatprep.subr.mxu0 0.0
        %2018 = vmatpush1.msra.mxu0 0.0
        %2019 = vmatprep.subr.mxu0 0.0
        %2020 = vmatpush1.msra.mxu0 0.0
        %2021 = vmatprep.subr.mxu0 0.0
        %2022 = vmatpush1.msra.mxu0 0.0
        %2023 = vmatprep.subr.mxu0 0.0
        %2024 = vmatpush1.msra.mxu0 0.0
        %2025 = vmatprep.subr.mxu0 0.0
        %2026 = vmatpush1.msra.mxu0 0.0
        %2027 = vmatprep.subr.mxu0 0.0
        %2028 = vmatpush1.msra.mxu0 0.0
        %2029 = vmatprep.subr.mxu0 0.0
        %2030 = vmatpush1.msra.mxu0 0.0
        %2031 = vmatprep.mubr.f32.mxu0 0.0
        %2032 = vmatmul.mubr.f32.gmra.mrb[0].mxu0 %v1956
        %v2033 = vpop.f32.mrb[0].mxu0
        %v2034 = vadd.f32 0.0, %v2033
        %v2035 = vpop.f32.mrb[0].mxu0
        %v2036 = vadd.f32 0.0, %v2035
        %2037 = vmatprep.mubr.f32.mxu0 0.0
        %2038 = vmatmul.mubr.f32.gmra.mrb[0].mxu0 %v1959
        %v2039 = vpop.f32.mrb[0].mxu0
        %v2040 = vadd.f32 0.0, %v2039
        %v2041 = vpop.f32.mrb[0].mxu0
        %v2042 = vadd.f32 0.0, %v2041
        %2043 = vdwg.mxu0
        %v2044 = vadd.f32 %v1926, %v2034
        %v2045 = vadd.f32 %v1927, %v2036
        %v2046 = vadd.f32 %v1928, %v2040
        %v2047 = vadd.f32 %v1929, %v2042
        %v2048 = vld [vmem:[#allocation2 + $0x4] sm:$0xff]
        %v2049 = vld [vmem:[#allocation2 + $0xc] sm:$0x3]
        %s2050 = scalar_lea.vmem %s5, 704
        %v2051 = vld [vmem:[%s2050] sm:$0xff]
        %v2052 = vld [vmem:[%s2050 + $0x8] sm:$0xff]
        %v2053 = vld [vmem:[%s2050 + $0x10] sm:$0xff]
        %v2054 = vld [vmem:[%s2050 + $0x18] sm:$0xff]
        %v2055 = vld [vmem:[%s2050 + $0x20] sm:$0xff]
        %v2056 = vld [vmem:[%s2050 + $0x28] sm:$0xff]
        %v2057 = vld [vmem:[%s2050 + $0x30] sm:$0xff]
        %v2058 = vld [vmem:[%s2050 + $0x38] sm:$0xff]
        %v2059 = vld [vmem:[%s2050 + $0x40] sm:$0xff]
        %v2060 = vld [vmem:[%s2050 + $0x48] sm:$0xff]
        %v2061 = vld [vmem:[%s2050 + $0x50] sm:$0xff]
        %v2062 = vld [vmem:[%s2050 + $0x58] sm:$0xff]
        %v2063 = vld [vmem:[%s2050 + $0x60] sm:$0xff]
        %v2064 = vld [vmem:[%s2050 + $0x68] sm:$0xff]
        %v2065 = vld [vmem:[%s2050 + $0x70] sm:$0xff]
        %v2066 = vld [vmem:[%s2050 + $0x78] sm:$0xff]
        %v2067 = vld [vmem:[%s2050 + $0x80] sm:$0xff]
        %v2068 = vld [vmem:[%s2050 + $0x88] sm:$0xff]
        %v2069 = vld [vmem:[%s2050 + $0x90] sm:$0xff]
        %v2070 = vld [vmem:[%s2050 + $0x98] sm:$0xff]
        %v2071 = vld [vmem:[%s2050 + $0xa0] sm:$0xf]
        %v2072 = vld [vmem:[%s2050 + $0xa8] sm:$0xf]
        %v2074 = vsel %vm1581, %v2048, 0
        %v2077 = vsel %vm1581, %v2049, 0
        %v2080 = vsel %vm1205, %v2071, 0
        %v2083 = vsel %vm1205, %v2072, 0
        %2085 = vmatprep.subr.mxu0 %v2052
        %2086 = vmatpush1.msra.mxu0 %v2051
        %2087 = vmatprep.subr.mxu0 %v2054
        %2088 = vmatpush1.msra.mxu0 %v2053
        %2089 = vmatprep.subr.mxu0 %v2056
        %2090 = vmatpush1.msra.mxu0 %v2055
        %2091 = vmatprep.subr.mxu0 %v2058
        %2092 = vmatpush1.msra.mxu0 %v2057
        %2093 = vmatprep.subr.mxu0 %v2060
        %2094 = vmatpush1.msra.mxu0 %v2059
        %2095 = vmatprep.subr.mxu0 %v2062
        %2096 = vmatpush1.msra.mxu0 %v2061
        %2097 = vmatprep.subr.mxu0 %v2064
        %2098 = vmatpush1.msra.mxu0 %v2063
        %2099 = vmatprep.subr.mxu0 %v2066
        %2100 = vmatpush1.msra.mxu0 %v2065
        %2101 = vmatprep.subr.mxu0 %v2068
        %2102 = vmatpush1.msra.mxu0 %v2067
        %2103 = vmatprep.subr.mxu0 %v2070
        %2104 = vmatpush1.msra.mxu0 %v2069
        %2105 = vmatprep.subr.mxu0 %v2083
        %2106 = vmatpush1.msra.mxu0 %v2080
        %2107 = vmatprep.subr.mxu0 0.0
        %2108 = vmatpush1.msra.mxu0 0.0
        %2109 = vmatprep.subr.mxu0 0.0
        %2110 = vmatpush1.msra.mxu0 0.0
        %2111 = vmatprep.subr.mxu0 0.0
        %2112 = vmatpush1.msra.mxu0 0.0
        %2113 = vmatprep.subr.mxu0 0.0
        %2114 = vmatpush1.msra.mxu0 0.0
        %2115 = vmatprep.subr.mxu0 0.0
        %2116 = vmatpush1.msra.mxu0 0.0
        %2117 = vmatprep.subr.mxu0 0.0
        %2118 = vmatpush1.msra.mxu0 0.0
        %2119 = vmatprep.subr.mxu0 0.0
        %2120 = vmatpush1.msra.mxu0 0.0
        %2121 = vmatprep.subr.mxu0 0.0
        %2122 = vmatpush1.msra.mxu0 0.0
        %2123 = vmatprep.subr.mxu0 0.0
        %2124 = vmatpush1.msra.mxu0 0.0
        %2125 = vmatprep.subr.mxu0 0.0
        %2126 = vmatpush1.msra.mxu0 0.0
        %2127 = vmatprep.subr.mxu0 0.0
        %2128 = vmatpush1.msra.mxu0 0.0
        %2129 = vmatprep.subr.mxu0 0.0
        %2130 = vmatpush1.msra.mxu0 0.0
        %2131 = vmatprep.subr.mxu0 0.0
        %2132 = vmatpush1.msra.mxu0 0.0
        %2133 = vmatprep.subr.mxu0 0.0
        %2134 = vmatpush1.msra.mxu0 0.0
        %2135 = vmatprep.subr.mxu0 0.0
        %2136 = vmatpush1.msra.mxu0 0.0
        %2137 = vmatprep.subr.mxu0 0.0
        %2138 = vmatpush1.msra.mxu0 0.0
        %2139 = vmatprep.subr.mxu0 0.0
        %2140 = vmatpush1.msra.mxu0 0.0
        %2141 = vmatprep.subr.mxu0 0.0
        %2142 = vmatpush1.msra.mxu0 0.0
        %2143 = vmatprep.subr.mxu0 0.0
        %2144 = vmatpush1.msra.mxu0 0.0
        %2145 = vmatprep.subr.mxu0 0.0
        %2146 = vmatpush1.msra.mxu0 0.0
        %2147 = vmatprep.subr.mxu0 0.0
        %2148 = vmatpush1.msra.mxu0 0.0
        %2149 = vmatprep.mubr.f32.mxu0 0.0
        %2150 = vmatmul.mubr.f32.gmra.mrb[0].mxu0 %v2074
        %v2151 = vpop.f32.mrb[0].mxu0
        %v2152 = vadd.f32 0.0, %v2151
        %v2153 = vpop.f32.mrb[0].mxu0
        %v2154 = vadd.f32 0.0, %v2153
        %2155 = vmatprep.mubr.f32.mxu0 0.0
        %2156 = vmatmul.mubr.f32.gmra.mrb[0].mxu0 %v2077
        %v2157 = vpop.f32.mrb[0].mxu0
        %v2158 = vadd.f32 0.0, %v2157
        %v2159 = vpop.f32.mrb[0].mxu0
        %v2160 = vadd.f32 0.0, %v2159
        %2161 = vdwg.mxu0
        %v2162 = vadd.f32 %v2044, %v2152
        %v2163 = vadd.f32 %v2045, %v2154
        %v2164 = vadd.f32 %v2046, %v2158
        %v2165 = vadd.f32 %v2047, %v2160
        %v2166 = vld [vmem:[%s6] sm:$0x3]
        %v2168 = vlaneseq
        %v2169 = vshrl.u32 %v2168, 7
        %v2170 = vsub.s32 0, %v2169
        %v2171 = vrot.slane %v2166, %v2170
        %v2172 = vlaneseq
        %v2173 = vshrl.u32 %v2172, 7
        %v2174 = vsub.s32 1, %v2173
        %v2175 = vrot.slane %v2166, %v2174
        %v2178 = vadd.f32 %v2162, %v2171
        %v2179 = vadd.f32 %v2163, %v2175
        %v2180 = vadd.f32 %v2164, %v2171
        %v2181 = vadd.f32 %v2165, %v2175
        %v2182 = vmax.f32 %v2178, 0.0
        %v2183 = vmax.f32 %v2179, 0.0
        %v2184 = vmax.f32 %v2180, 0.0
        %v2185 = vmax.f32 %v2181, 0.0
        %v2186 = vld [vmem:[%s7] sm:$0x1f]
        %vm2187 = vcmask 80896
        %v2189 = vsel %vm2187, %v2186, 0
        %vm2191 = vcmask 1041408
        %v2193 = vsel %vm2191, %v2184, 0
        %v2196 = vsel %vm2191, %v2185, 0
        %2198 = vmatprep.subr.mxu0 %v2183
        %2199 = vmatpush1.msra.mxu0 %v2182
        %2200 = vmatprep.subr.mxu0 %v2196
        %2201 = vmatpush1.msra.mxu0 %v2193
        %2202 = vmatprep.subr.mxu0 0.0
        %2203 = vmatpush1.msra.mxu0 0.0
        %2204 = vmatprep.subr.mxu0 0.0
        %2205 = vmatpush1.msra.mxu0 0.0
        %2206 = vmatprep.subr.mxu0 0.0
        %2207 = vmatpush1.msra.mxu0 0.0
        %2208 = vmatprep.subr.mxu0 0.0
        %2209 = vmatpush1.msra.mxu0 0.0
        %2210 = vmatprep.subr.mxu0 0.0
        %2211 = vmatpush1.msra.mxu0 0.0
        %2212 = vmatprep.subr.mxu0 0.0
        %2213 = vmatpush1.msra.mxu0 0.0
        %2214 = vmatprep.subr.mxu0 0.0
        %2215 = vmatpush1.msra.mxu0 0.0
        %2216 = vmatprep.subr.mxu0 0.0
        %2217 = vmatpush1.msra.mxu0 0.0
        %2218 = vmatprep.subr.mxu0 0.0
        %2219 = vmatpush1.msra.mxu0 0.0
        %2220 = vmatprep.subr.mxu0 0.0
        %2221 = vmatpush1.msra.mxu0 0.0
        %2222 = vmatprep.subr.mxu0 0.0
        %2223 = vmatpush1.msra.mxu0 0.0
        %2224 = vmatprep.subr.mxu0 0.0
        %2225 = vmatpush1.msra.mxu0 0.0
        %2226 = vmatprep.subr.mxu0 0.0
        %2227 = vmatpush1.msra.mxu0 0.0
        %2228 = vmatprep.subr.mxu0 0.0
        %2229 = vmatpush1.msra.mxu0 0.0
        %2230 = vmatprep.subr.mxu0 0.0
        %2231 = vmatpush1.msra.mxu0 0.0
        %2232 = vmatprep.subr.mxu0 0.0
        %2233 = vmatpush1.msra.mxu0 0.0
        %2234 = vmatprep.subr.mxu0 0.0
        %2235 = vmatpush1.msra.mxu0 0.0
        %2236 = vmatprep.subr.mxu0 0.0
        %2237 = vmatpush1.msra.mxu0 0.0
        %2238 = vmatprep.subr.mxu0 0.0
        %2239 = vmatpush1.msra.mxu0 0.0
        %2240 = vmatprep.subr.mxu0 0.0
        %2241 = vmatpush1.msra.mxu0 0.0
        %2242 = vmatprep.subr.mxu0 0.0
        %2243 = vmatpush1.msra.mxu0 0.0
        %2244 = vmatprep.subr.mxu0 0.0
        %2245 = vmatpush1.msra.mxu0 0.0
        %2246 = vmatprep.subr.mxu0 0.0
        %2247 = vmatpush1.msra.mxu0 0.0
        %2248 = vmatprep.subr.mxu0 0.0
        %2249 = vmatpush1.msra.mxu0 0.0
        %2250 = vmatprep.subr.mxu0 0.0
        %2251 = vmatpush1.msra.mxu0 0.0
        %2252 = vmatprep.subr.mxu0 0.0
        %2253 = vmatpush1.msra.mxu0 0.0
        %2254 = vmatprep.subr.mxu0 0.0
        %2255 = vmatpush1.msra.mxu0 0.0
        %2256 = vmatprep.subr.mxu0 0.0
        %2257 = vmatpush1.msra.mxu0 0.0
        %2258 = vmatprep.subr.mxu0 0.0
        %2259 = vmatpush1.msra.mxu0 0.0
        %2260 = vmatprep.subr.mxu0 0.0
        %2261 = vmatpush1.msra.mxu0 0.0
        %2262 = vmatprep.mubr.f32.mxu0 0.0
        %2263 = vmatmul.mubr.f32.gmra.mrb[0].mxu0 %v2189
        %v2264 = vpop.f32.mrb[0].mxu0
        %v2265 = vadd.f32 0.0, %v2264
        %v2266 = vpop.f32.mrb[0].mxu0
        %v2267 = vadd.f32 0.0, %v2266
        %2268 = vdwg.mxu0
        %s2269 = scalar_lea.vmem %s7, 8
        %v2270 = vld [vmem:[%s2269] sm:$0x1f]
        %v2272 = vsel %vm2187, %v2270, 0
        %2274 = vmatprep.subr.mxu0 %v2183
        %2275 = vmatpush1.msra.mxu0 %v2182
        %2276 = vmatprep.subr.mxu0 %v2196
        %2277 = vmatpush1.msra.mxu0 %v2193
        %2278 = vmatprep.subr.mxu0 0.0
        %2279 = vmatpush1.msra.mxu0 0.0
        %2280 = vmatprep.subr.mxu0 0.0
        %2281 = vmatpush1.msra.mxu0 0.0
        %2282 = vmatprep.subr.mxu0 0.0
        %2283 = vmatpush1.msra.mxu0 0.0
        %2284 = vmatprep.subr.mxu0 0.0
        %2285 = vmatpush1.msra.mxu0 0.0
        %2286 = vmatprep.subr.mxu0 0.0
        %2287 = vmatpush1.msra.mxu0 0.0
        %2288 = vmatprep.subr.mxu0 0.0
        %2289 = vmatpush1.msra.mxu0 0.0
        %2290 = vmatprep.subr.mxu0 0.0
        %2291 = vmatpush1.msra.mxu0 0.0
        %2292 = vmatprep.subr.mxu0 0.0
        %2293 = vmatpush1.msra.mxu0 0.0
        %2294 = vmatprep.subr.mxu0 0.0
        %2295 = vmatpush1.msra.mxu0 0.0
        %2296 = vmatprep.subr.mxu0 0.0
        %2297 = vmatpush1.msra.mxu0 0.0
        %2298 = vmatprep.subr.mxu0 0.0
        %2299 = vmatpush1.msra.mxu0 0.0
        %2300 = vmatprep.subr.mxu0 0.0
        %2301 = vmatpush1.msra.mxu0 0.0
        %2302 = vmatprep.subr.mxu0 0.0
        %2303 = vmatpush1.msra.mxu0 0.0
        %2304 = vmatprep.subr.mxu0 0.0
        %2305 = vmatpush1.msra.mxu0 0.0
        %2306 = vmatprep.subr.mxu0 0.0
        %2307 = vmatpush1.msra.mxu0 0.0
        %2308 = vmatprep.subr.mxu0 0.0
        %2309 = vmatpush1.msra.mxu0 0.0
        %2310 = vmatprep.subr.mxu0 0.0
        %2311 = vmatpush1.msra.mxu0 0.0
        %2312 = vmatprep.subr.mxu0 0.0
        %2313 = vmatpush1.msra.mxu0 0.0
        %2314 = vmatprep.subr.mxu0 0.0
        %2315 = vmatpush1.msra.mxu0 0.0
        %2316 = vmatprep.subr.mxu0 0.0
        %2317 = vmatpush1.msra.mxu0 0.0
        %2318 = vmatprep.subr.mxu0 0.0
        %2319 = vmatpush1.msra.mxu0 0.0
        %2320 = vmatprep.subr.mxu0 0.0
        %2321 = vmatpush1.msra.mxu0 0.0
        %2322 = vmatprep.subr.mxu0 0.0
        %2323 = vmatpush1.msra.mxu0 0.0
        %2324 = vmatprep.subr.mxu0 0.0
        %2325 = vmatpush1.msra.mxu0 0.0
        %2326 = vmatprep.subr.mxu0 0.0
        %2327 = vmatpush1.msra.mxu0 0.0
        %2328 = vmatprep.subr.mxu0 0.0
        %2329 = vmatpush1.msra.mxu0 0.0
        %2330 = vmatprep.subr.mxu0 0.0
        %2331 = vmatpush1.msra.mxu0 0.0
        %2332 = vmatprep.subr.mxu0 0.0
        %2333 = vmatpush1.msra.mxu0 0.0
        %2334 = vmatprep.subr.mxu0 0.0
        %2335 = vmatpush1.msra.mxu0 0.0
        %2336 = vmatprep.subr.mxu0 0.0
        %2337 = vmatpush1.msra.mxu0 0.0
        %2338 = vmatprep.mubr.f32.mxu0 0.0
        %2339 = vmatmul.mubr.f32.gmra.mrb[0].mxu0 %v2272
        %v2340 = vpop.f32.mrb[0].mxu0
        %v2341 = vadd.f32 0.0, %v2340
        %v2342 = vpop.f32.mrb[0].mxu0
        %v2343 = vadd.f32 0.0, %v2342
        %2344 = vdwg.mxu0
        %v2345 = vmax.f32 %v2265, %v2341
        %v2346 = vmax.f32 %v2267, %v2343
        %v2347 = vld [vmem:[%s8] sm:$0xff]
        %v2348 = vld [vmem:[%s8 + $0x8] sm:$0xff]
        %v2349 = vld [vmem:[%s8 + $0x10] sm:$0xff]
        %v2350 = vld [vmem:[%s8 + $0x18] sm:$0xff]
        %v2351 = vld [vmem:[%s8 + $0x20] sm:$0xff]
        %v2352 = vld [vmem:[%s8 + $0x28] sm:$0xff]
        %v2353 = vld [vmem:[%s8 + $0x30] sm:$0xff]
        %v2354 = vld [vmem:[%s8 + $0x38] sm:$0xff]
        %v2355 = vld [vmem:[%s8 + $0x40] sm:$0xff]
        %v2356 = vld [vmem:[%s8 + $0x48] sm:$0xff]
        %v2357 = vld [vmem:[%s8 + $0x50] sm:$0xff]
        %v2358 = vld [vmem:[%s8 + $0x58] sm:$0xff]
        %v2359 = vld [vmem:[%s8 + $0x60] sm:$0xff]
        %v2360 = vld [vmem:[%s8 + $0x68] sm:$0xff]
        %v2361 = vld [vmem:[%s8 + $0x70] sm:$0xff]
        %v2362 = vld [vmem:[%s8 + $0x78] sm:$0xff]
        %v2363 = vld [vmem:[%s8 + $0x80] sm:$0xff]
        %v2364 = vld [vmem:[%s8 + $0x88] sm:$0xff]
        %v2365 = vld [vmem:[%s8 + $0x90] sm:$0xff]
        %v2366 = vld [vmem:[%s8 + $0x98] sm:$0xff]
        %vm2367 = vcmask 261120
        %v2369 = vsel %vm2367, %v2346, 0
        %2371 = vmatprep.subr.mxu0 0.0
        %2372 = vmatpush1.msra.mxu0 %v2347
        %2373 = vmatprep.subr.mxu0 0.0
        %2374 = vmatpush1.msra.mxu0 %v2348
        %2375 = vmatprep.subr.mxu0 0.0
        %2376 = vmatpush1.msra.mxu0 %v2349
        %2377 = vmatprep.subr.mxu0 0.0
        %2378 = vmatpush1.msra.mxu0 %v2350
        %2379 = vmatprep.subr.mxu0 0.0
        %2380 = vmatpush1.msra.mxu0 %v2351
        %2381 = vmatprep.subr.mxu0 0.0
        %2382 = vmatpush1.msra.mxu0 %v2352
        %2383 = vmatprep.subr.mxu0 0.0
        %2384 = vmatpush1.msra.mxu0 %v2353
        %2385 = vmatprep.subr.mxu0 0.0
        %2386 = vmatpush1.msra.mxu0 %v2354
        %2387 = vmatprep.subr.mxu0 0.0
        %2388 = vmatpush1.msra.mxu0 %v2355
        %2389 = vmatprep.subr.mxu0 0.0
        %2390 = vmatpush1.msra.mxu0 %v2356
        %2391 = vmatprep.subr.mxu0 0.0
        %2392 = vmatpush1.msra.mxu0 %v2357
        %2393 = vmatprep.subr.mxu0 0.0
        %2394 = vmatpush1.msra.mxu0 %v2358
        %2395 = vmatprep.subr.mxu0 0.0
        %2396 = vmatpush1.msra.mxu0 %v2359
        %2397 = vmatprep.subr.mxu0 0.0
        %2398 = vmatpush1.msra.mxu0 %v2360
        %2399 = vmatprep.subr.mxu0 0.0
        %2400 = vmatpush1.msra.mxu0 %v2361
        %2401 = vmatprep.subr.mxu0 0.0
        %2402 = vmatpush1.msra.mxu0 %v2362
        %2403 = vmatprep.subr.mxu0 0.0
        %2404 = vmatpush1.msra.mxu0 %v2363
        %2405 = vmatprep.subr.mxu0 0.0
        %2406 = vmatpush1.msra.mxu0 %v2364
        %2407 = vmatprep.subr.mxu0 0.0
        %2408 = vmatpush1.msra.mxu0 %v2365
        %2409 = vmatprep.subr.mxu0 0.0
        %2410 = vmatpush1.msra.mxu0 %v2366
        %2411 = vmatprep.subr.mxu0 0.0
        %2412 = vmatpush1.msra.mxu0 0.0
        %2413 = vmatprep.subr.mxu0 0.0
        %2414 = vmatpush1.msra.mxu0 0.0
        %2415 = vmatprep.subr.mxu0 0.0
        %2416 = vmatpush1.msra.mxu0 0.0
        %2417 = vmatprep.subr.mxu0 0.0
        %2418 = vmatpush1.msra.mxu0 0.0
        %2419 = vmatprep.subr.mxu0 0.0
        %2420 = vmatpush1.msra.mxu0 0.0
        %2421 = vmatprep.subr.mxu0 0.0
        %2422 = vmatpush1.msra.mxu0 0.0
        %2423 = vmatprep.subr.mxu0 0.0
        %2424 = vmatpush1.msra.mxu0 0.0
        %2425 = vmatprep.subr.mxu0 0.0
        %2426 = vmatpush1.msra.mxu0 0.0
        %2427 = vmatprep.subr.mxu0 0.0
        %2428 = vmatpush1.msra.mxu0 0.0
        %2429 = vmatprep.subr.mxu0 0.0
        %2430 = vmatpush1.msra.mxu0 0.0
        %2431 = vmatprep.subr.mxu0 0.0
        %2432 = vmatpush1.msra.mxu0 0.0
        %2433 = vmatprep.subr.mxu0 0.0
        %2434 = vmatpush1.msra.mxu0 0.0
        %2435 = vmatprep.mubr.f32.mxu0 %v2369
        %2436 = vmatmul.mubr.f32.gmra.mrb[0].mxu0 %v2345
        %v2437 = vpop.f32.mrb[0].mxu0
        %v2438 = vadd.f32 0.0, %v2437
        %v2439 = vpop.f32.mrb[0].mxu0
        %2440 = vdwg.mxu0
        %s2441 = scalar_lea.vmem %s8, 160
        %v2442 = vld [vmem:[%s2441] sm:$0xff]
        %v2443 = vld [vmem:[%s2441 + $0x8] sm:$0xff]
        %v2444 = vld [vmem:[%s2441 + $0x10] sm:$0xff]
        %v2445 = vld [vmem:[%s2441 + $0x18] sm:$0xff]
        %v2446 = vld [vmem:[%s2441 + $0x20] sm:$0xff]
        %v2447 = vld [vmem:[%s2441 + $0x28] sm:$0xff]
        %v2448 = vld [vmem:[%s2441 + $0x30] sm:$0xff]
        %v2449 = vld [vmem:[%s2441 + $0x38] sm:$0xff]
        %v2450 = vld [vmem:[%s2441 + $0x40] sm:$0xff]
        %v2451 = vld [vmem:[%s2441 + $0x48] sm:$0xff]
        %v2452 = vld [vmem:[%s2441 + $0x50] sm:$0xff]
        %v2453 = vld [vmem:[%s2441 + $0x58] sm:$0xff]
        %v2454 = vld [vmem:[%s2441 + $0x60] sm:$0xff]
        %v2455 = vld [vmem:[%s2441 + $0x68] sm:$0xff]
        %v2456 = vld [vmem:[%s2441 + $0x70] sm:$0xff]
        %v2457 = vld [vmem:[%s2441 + $0x78] sm:$0xff]
        %v2458 = vld [vmem:[%s2441 + $0x80] sm:$0xff]
        %v2459 = vld [vmem:[%s2441 + $0x88] sm:$0xff]
        %v2460 = vld [vmem:[%s2441 + $0x90] sm:$0xff]
        %v2461 = vld [vmem:[%s2441 + $0x98] sm:$0xff]
        %2462 = vmatprep.subr.mxu0 0.0
        %2463 = vmatpush1.msra.mxu0 %v2442
        %2464 = vmatprep.subr.mxu0 0.0
        %2465 = vmatpush1.msra.mxu0 %v2443
        %2466 = vmatprep.subr.mxu0 0.0
        %2467 = vmatpush1.msra.mxu0 %v2444
        %2468 = vmatprep.subr.mxu0 0.0
        %2469 = vmatpush1.msra.mxu0 %v2445
        %2470 = vmatprep.subr.mxu0 0.0
        %2471 = vmatpush1.msra.mxu0 %v2446
        %2472 = vmatprep.subr.mxu0 0.0
        %2473 = vmatpush1.msra.mxu0 %v2447
        %2474 = vmatprep.subr.mxu0 0.0
        %2475 = vmatpush1.msra.mxu0 %v2448
        %2476 = vmatprep.subr.mxu0 0.0
        %2477 = vmatpush1.msra.mxu0 %v2449
        %2478 = vmatprep.subr.mxu0 0.0
        %2479 = vmatpush1.msra.mxu0 %v2450
        %2480 = vmatprep.subr.mxu0 0.0
        %2481 = vmatpush1.msra.mxu0 %v2451
        %2482 = vmatprep.subr.mxu0 0.0
        %2483 = vmatpush1.msra.mxu0 %v2452
        %2484 = vmatprep.subr.mxu0 0.0
        %2485 = vmatpush1.msra.mxu0 %v2453
        %2486 = vmatprep.subr.mxu0 0.0
        %2487 = vmatpush1.msra.mxu0 %v2454
        %2488 = vmatprep.subr.mxu0 0.0
        %2489 = vmatpush1.msra.mxu0 %v2455
        %2490 = vmatprep.subr.mxu0 0.0
        %2491 = vmatpush1.msra.mxu0 %v2456
        %2492 = vmatprep.subr.mxu0 0.0
        %2493 = vmatpush1.msra.mxu0 %v2457
        %2494 = vmatprep.subr.mxu0 0.0
        %2495 = vmatpush1.msra.mxu0 %v2458
        %2496 = vmatprep.subr.mxu0 0.0
        %2497 = vmatpush1.msra.mxu0 %v2459
        %2498 = vmatprep.subr.mxu0 0.0
        %2499 = vmatpush1.msra.mxu0 %v2460
        %2500 = vmatprep.subr.mxu0 0.0
        %2501 = vmatpush1.msra.mxu0 %v2461
        %2502 = vmatprep.subr.mxu0 0.0
        %2503 = vmatpush1.msra.mxu0 0.0
        %2504 = vmatprep.subr.mxu0 0.0
        %2505 = vmatpush1.msra.mxu0 0.0
        %2506 = vmatprep.subr.mxu0 0.0
        %2507 = vmatpush1.msra.mxu0 0.0
        %2508 = vmatprep.subr.mxu0 0.0
        %2509 = vmatpush1.msra.mxu0 0.0
        %2510 = vmatprep.subr.mxu0 0.0
        %2511 = vmatpush1.msra.mxu0 0.0
        %2512 = vmatprep.subr.mxu0 0.0
        %2513 = vmatpush1.msra.mxu0 0.0
        %2514 = vmatprep.subr.mxu0 0.0
        %2515 = vmatpush1.msra.mxu0 0.0
        %2516 = vmatprep.subr.mxu0 0.0
        %2517 = vmatpush1.msra.mxu0 0.0
        %2518 = vmatprep.subr.mxu0 0.0
        %2519 = vmatpush1.msra.mxu0 0.0
        %2520 = vmatprep.subr.mxu0 0.0
        %2521 = vmatpush1.msra.mxu0 0.0
        %2522 = vmatprep.subr.mxu0 0.0
        %2523 = vmatpush1.msra.mxu0 0.0
        %2524 = vmatprep.subr.mxu0 0.0
        %2525 = vmatpush1.msra.mxu0 0.0
        %2526 = vmatprep.mubr.f32.mxu0 %v2369
        %2527 = vmatmul.mubr.f32.gmra.mrb[0].mxu0 %v2345
        %v2528 = vpop.f32.mrb[0].mxu0
        %v2529 = vadd.f32 0.0, %v2528
        %v2530 = vpop.f32.mrb[0].mxu0
        %2531 = vdwg.mxu0
        %v2532 = vmax.f32 %v2438, %v2529
        %vm2533 = vcmask 651264
        %2534 = vst.msk [vmem:[#allocation3] sm:$0x1f] %vm2533, %v2532
        %v2535 = vld [vmem:[#allocation3] sm:$0x1]
        %v2536 = vld [vmem:[%s9] sm:$0xff]
        %v2537 = vld [vmem:[%s9 + $0x8] sm:$0xff]
        %v2538 = vld [vmem:[%s9 + $0x10] sm:$0xff]
        %v2539 = vld [vmem:[%s9 + $0x18] sm:$0xff]
        %v2540 = vld [vmem:[%s9 + $0x20] sm:$0xff]
        %v2541 = vld [vmem:[%s9 + $0x28] sm:$0xff]
        %v2542 = vld [vmem:[%s9 + $0x30] sm:$0xff]
        %v2543 = vld [vmem:[%s9 + $0x38] sm:$0xff]
        %v2544 = vld [vmem:[%s9 + $0x40] sm:$0xff]
        %v2545 = vld [vmem:[%s9 + $0x48] sm:$0xff]
        %v2546 = vld [vmem:[#allocation3 + $0x1] sm:$0x1]
        %s2547 = scalar_lea.vmem %s9, 80
        %v2548 = vld [vmem:[%s2547] sm:$0xff]
        %v2549 = vld [vmem:[%s2547 + $0x8] sm:$0xff]
        %v2550 = vld [vmem:[%s2547 + $0x10] sm:$0xff]
        %v2551 = vld [vmem:[%s2547 + $0x18] sm:$0xff]
        %v2552 = vld [vmem:[%s2547 + $0x20] sm:$0xff]
        %v2553 = vld [vmem:[%s2547 + $0x28] sm:$0xff]
        %v2554 = vld [vmem:[%s2547 + $0x30] sm:$0xff]
        %v2555 = vld [vmem:[%s2547 + $0x38] sm:$0xff]
        %v2556 = vld [vmem:[%s2547 + $0x40] sm:$0xff]
        %v2557 = vld [vmem:[%s2547 + $0x48] sm:$0xff]
        %vm2558 = vcmask 654336
        %v2560 = vsel %vm2558, %v2546, 0
        %2562 = vmatprep.subr.mxu0 0.0
        %2563 = vmatpush1.msra.mxu0 %v2548
        %2564 = vmatprep.subr.mxu0 0.0
        %2565 = vmatpush1.msra.mxu0 %v2549
        %2566 = vmatprep.subr.mxu0 0.0
        %2567 = vmatpush1.msra.mxu0 %v2550
        %2568 = vmatprep.subr.mxu0 0.0
        %2569 = vmatpush1.msra.mxu0 %v2551
        %2570 = vmatprep.subr.mxu0 0.0
        %2571 = vmatpush1.msra.mxu0 %v2552
        %2572 = vmatprep.subr.mxu0 0.0
        %2573 = vmatpush1.msra.mxu0 %v2553
        %2574 = vmatprep.subr.mxu0 0.0
        %2575 = vmatpush1.msra.mxu0 %v2554
        %2576 = vmatprep.subr.mxu0 0.0
        %2577 = vmatpush1.msra.mxu0 %v2555
        %2578 = vmatprep.subr.mxu0 0.0
        %2579 = vmatpush1.msra.mxu0 %v2556
        %2580 = vmatprep.subr.mxu0 0.0
        %2581 = vmatpush1.msra.mxu0 %v2557
        %2582 = vmatprep.subr.mxu0 0.0
        %2583 = vmatpush1.msra.mxu0 0.0
        %2584 = vmatprep.subr.mxu0 0.0
        %2585 = vmatpush1.msra.mxu0 0.0
        %2586 = vmatprep.subr.mxu0 0.0
        %2587 = vmatpush1.msra.mxu0 0.0
        %2588 = vmatprep.subr.mxu0 0.0
        %2589 = vmatpush1.msra.mxu0 0.0
        %2590 = vmatprep.subr.mxu0 0.0
        %2591 = vmatpush1.msra.mxu0 0.0
        %2592 = vmatprep.subr.mxu0 0.0
        %2593 = vmatpush1.msra.mxu0 0.0
        %2594 = vmatprep.subr.mxu0 0.0
        %2595 = vmatpush1.msra.mxu0 0.0
        %2596 = vmatprep.subr.mxu0 0.0
        %2597 = vmatpush1.msra.mxu0 0.0
        %2598 = vmatprep.subr.mxu0 0.0
        %2599 = vmatpush1.msra.mxu0 0.0
        %2600 = vmatprep.subr.mxu0 0.0
        %2601 = vmatpush1.msra.mxu0 0.0
        %2602 = vmatprep.subr.mxu0 0.0
        %2603 = vmatpush1.msra.mxu0 0.0
        %2604 = vmatprep.subr.mxu0 0.0
        %2605 = vmatpush1.msra.mxu0 0.0
        %2606 = vmatprep.subr.mxu0 0.0
        %2607 = vmatpush1.msra.mxu0 0.0
        %2608 = vmatprep.subr.mxu0 0.0
        %2609 = vmatpush1.msra.mxu0 0.0
        %2610 = vmatprep.subr.mxu0 0.0
        %2611 = vmatpush1.msra.mxu0 0.0
        %2612 = vmatprep.subr.mxu0 0.0
        %2613 = vmatpush1.msra.mxu0 0.0
        %2614 = vmatprep.subr.mxu0 0.0
        %2615 = vmatpush1.msra.mxu0 0.0
        %2616 = vmatprep.subr.mxu0 0.0
        %2617 = vmatpush1.msra.mxu0 0.0
        %2618 = vmatprep.subr.mxu0 0.0
        %2619 = vmatpush1.msra.mxu0 0.0
        %2620 = vmatprep.subr.mxu0 0.0
        %2621 = vmatpush1.msra.mxu0 0.0
        %2622 = vmatprep.subr.mxu0 0.0
        %2623 = vmatpush1.msra.mxu0 0.0
        %2624 = vmatprep.subr.mxu0 0.0
        %2625 = vmatpush1.msra.mxu0 0.0
        %2626 = vmatprep.mubr.f32.mxu0 0.0
        %2627 = vmatmul.mubr.f32.gmra.mrb[0].mxu0 %v2560
        %v2628 = vpop.f32.mrb[0].mxu0
        %v2629 = vadd.f32 0.0, %v2628
        %v2630 = vpop.f32.mrb[0].mxu0
        %2631 = vdwg.mxu0
        %v2633 = vsel %vm2558, %v2535, 0
        %2635 = vmatprep.subr.mxu0 0.0
        %2636 = vmatpush1.msra.mxu0 %v2536
        %2637 = vmatprep.subr.mxu0 0.0
        %2638 = vmatpush1.msra.mxu0 %v2537
        %2639 = vmatprep.subr.mxu0 0.0
        %2640 = vmatpush1.msra.mxu0 %v2538
        %2641 = vmatprep.subr.mxu0 0.0
        %2642 = vmatpush1.msra.mxu0 %v2539
        %2643 = vmatprep.subr.mxu0 0.0
        %2644 = vmatpush1.msra.mxu0 %v2540
        %2645 = vmatprep.subr.mxu0 0.0
        %2646 = vmatpush1.msra.mxu0 %v2541
        %2647 = vmatprep.subr.mxu0 0.0
        %2648 = vmatpush1.msra.mxu0 %v2542
        %2649 = vmatprep.subr.mxu0 0.0
        %2650 = vmatpush1.msra.mxu0 %v2543
        %2651 = vmatprep.subr.mxu0 0.0
        %2652 = vmatpush1.msra.mxu0 %v2544
        %2653 = vmatprep.subr.mxu0 0.0
        %2654 = vmatpush1.msra.mxu0 %v2545
        %2655 = vmatprep.subr.mxu0 0.0
        %2656 = vmatpush1.msra.mxu0 0.0
        %2657 = vmatprep.subr.mxu0 0.0
        %2658 = vmatpush1.msra.mxu0 0.0
        %2659 = vmatprep.subr.mxu0 0.0
        %2660 = vmatpush1.msra.mxu0 0.0
        %2661 = vmatprep.subr.mxu0 0.0
        %2662 = vmatpush1.msra.mxu0 0.0
        %2663 = vmatprep.subr.mxu0 0.0
        %2664 = vmatpush1.msra.mxu0 0.0
        %2665 = vmatprep.subr.mxu0 0.0
        %2666 = vmatpush1.msra.mxu0 0.0
        %2667 = vmatprep.subr.mxu0 0.0
        %2668 = vmatpush1.msra.mxu0 0.0
        %2669 = vmatprep.subr.mxu0 0.0
        %2670 = vmatpush1.msra.mxu0 0.0
        %2671 = vmatprep.subr.mxu0 0.0
        %2672 = vmatpush1.msra.mxu0 0.0
        %2673 = vmatprep.subr.mxu0 0.0
        %2674 = vmatpush1.msra.mxu0 0.0
        %2675 = vmatprep.subr.mxu0 0.0
        %2676 = vmatpush1.msra.mxu0 0.0
        %2677 = vmatprep.subr.mxu0 0.0
        %2678 = vmatpush1.msra.mxu0 0.0
        %2679 = vmatprep.subr.mxu0 0.0
        %2680 = vmatpush1.msra.mxu0 0.0
        %2681 = vmatprep.subr.mxu0 0.0
        %2682 = vmatpush1.msra.mxu0 0.0
        %2683 = vmatprep.subr.mxu0 0.0
        %2684 = vmatpush1.msra.mxu0 0.0
        %2685 = vmatprep.subr.mxu0 0.0
        %2686 = vmatpush1.msra.mxu0 0.0
        %2687 = vmatprep.subr.mxu0 0.0
        %2688 = vmatpush1.msra.mxu0 0.0
        %2689 = vmatprep.subr.mxu0 0.0
        %2690 = vmatpush1.msra.mxu0 0.0
        %2691 = vmatprep.subr.mxu0 0.0
        %2692 = vmatpush1.msra.mxu0 0.0
        %2693 = vmatprep.subr.mxu0 0.0
        %2694 = vmatpush1.msra.mxu0 0.0
        %2695 = vmatprep.subr.mxu0 0.0
        %2696 = vmatpush1.msra.mxu0 0.0
        %2697 = vmatprep.subr.mxu0 0.0
        %2698 = vmatpush1.msra.mxu0 0.0
        %2699 = vmatprep.mubr.f32.mxu0 0.0
        %2700 = vmatmul.mubr.f32.gmra.mrb[0].mxu0 %v2633
        %v2701 = vpop.f32.mrb[0].mxu0
        %v2702 = vadd.f32 %v2629, %v2701
        %v2703 = vpop.f32.mrb[0].mxu0
        %2704 = vdwg.mxu0
        %v2705 = vld [vmem:[#allocation3 + $0x2] sm:$0x1]
        %s2706 = scalar_lea.vmem %s9, 160
        %v2707 = vld [vmem:[%s2706] sm:$0xff]
        %v2708 = vld [vmem:[%s2706 + $0x8] sm:$0xff]
        %v2709 = vld [vmem:[%s2706 + $0x10] sm:$0xff]
        %v2710 = vld [vmem:[%s2706 + $0x18] sm:$0xff]
        %v2711 = vld [vmem:[%s2706 + $0x20] sm:$0xff]
        %v2712 = vld [vmem:[%s2706 + $0x28] sm:$0xff]
        %v2713 = vld [vmem:[%s2706 + $0x30] sm:$0xff]
        %v2714 = vld [vmem:[%s2706 + $0x38] sm:$0xff]
        %v2715 = vld [vmem:[%s2706 + $0x40] sm:$0xff]
        %v2716 = vld [vmem:[%s2706 + $0x48] sm:$0xff]
        %v2718 = vsel %vm2558, %v2705, 0
        %2720 = vmatprep.subr.mxu0 0.0
        %2721 = vmatpush1.msra.mxu0 %v2707
        %2722 = vmatprep.subr.mxu0 0.0
        %2723 = vmatpush1.msra.mxu0 %v2708
        %2724 = vmatprep.subr.mxu0 0.0
        %2725 = vmatpush1.msra.mxu0 %v2709
        %2726 = vmatprep.subr.mxu0 0.0
        %2727 = vmatpush1.msra.mxu0 %v2710
        %2728 = vmatprep.subr.mxu0 0.0
        %2729 = vmatpush1.msra.mxu0 %v2711
        %2730 = vmatprep.subr.mxu0 0.0
        %2731 = vmatpush1.msra.mxu0 %v2712
        %2732 = vmatprep.subr.mxu0 0.0
        %2733 = vmatpush1.msra.mxu0 %v2713
        %2734 = vmatprep.subr.mxu0 0.0
        %2735 = vmatpush1.msra.mxu0 %v2714
        %2736 = vmatprep.subr.mxu0 0.0
        %2737 = vmatpush1.msra.mxu0 %v2715
        %2738 = vmatprep.subr.mxu0 0.0
        %2739 = vmatpush1.msra.mxu0 %v2716
        %2740 = vmatprep.subr.mxu0 0.0
        %2741 = vmatpush1.msra.mxu0 0.0
        %2742 = vmatprep.subr.mxu0 0.0
        %2743 = vmatpush1.msra.mxu0 0.0
        %2744 = vmatprep.subr.mxu0 0.0
        %2745 = vmatpush1.msra.mxu0 0.0
        %2746 = vmatprep.subr.mxu0 0.0
        %2747 = vmatpush1.msra.mxu0 0.0
        %2748 = vmatprep.subr.mxu0 0.0
        %2749 = vmatpush1.msra.mxu0 0.0
        %2750 = vmatprep.subr.mxu0 0.0
        %2751 = vmatpush1.msra.mxu0 0.0
        %2752 = vmatprep.subr.mxu0 0.0
        %2753 = vmatpush1.msra.mxu0 0.0
        %2754 = vmatprep.subr.mxu0 0.0
        %2755 = vmatpush1.msra.mxu0 0.0
        %2756 = vmatprep.subr.mxu0 0.0
        %2757 = vmatpush1.msra.mxu0 0.0
        %2758 = vmatprep.subr.mxu0 0.0
        %2759 = vmatpush1.msra.mxu0 0.0
        %2760 = vmatprep.subr.mxu0 0.0
        %2761 = vmatpush1.msra.mxu0 0.0
        %2762 = vmatprep.subr.mxu0 0.0
        %2763 = vmatpush1.msra.mxu0 0.0
        %2764 = vmatprep.subr.mxu0 0.0
        %2765 = vmatpush1.msra.mxu0 0.0
        %2766 = vmatprep.subr.mxu0 0.0
        %2767 = vmatpush1.msra.mxu0 0.0
        %2768 = vmatprep.subr.mxu0 0.0
        %2769 = vmatpush1.msra.mxu0 0.0
        %2770 = vmatprep.subr.mxu0 0.0
        %2771 = vmatpush1.msra.mxu0 0.0
        %2772 = vmatprep.subr.mxu0 0.0
        %2773 = vmatpush1.msra.mxu0 0.0
        %2774 = vmatprep.subr.mxu0 0.0
        %2775 = vmatpush1.msra.mxu0 0.0
        %2776 = vmatprep.subr.mxu0 0.0
        %2777 = vmatpush1.msra.mxu0 0.0
        %2778 = vmatprep.subr.mxu0 0.0
        %2779 = vmatpush1.msra.mxu0 0.0
        %2780 = vmatprep.subr.mxu0 0.0
        %2781 = vmatpush1.msra.mxu0 0.0
        %2782 = vmatprep.subr.mxu0 0.0
        %2783 = vmatpush1.msra.mxu0 0.0
        %2784 = vmatprep.mubr.f32.mxu0 0.0
        %2785 = vmatmul.mubr.f32.gmra.mrb[0].mxu0 %v2718
        %v2786 = vpop.f32.mrb[0].mxu0
        %v2787 = vadd.f32 0.0, %v2786
        %v2788 = vpop.f32.mrb[0].mxu0
        %2789 = vdwg.mxu0
        %v2790 = vadd.f32 %v2702, %v2787
        %v2791 = vld [vmem:[#allocation3 + $0x3] sm:$0x1]
        %s2792 = scalar_lea.vmem %s9, 240
        %v2793 = vld [vmem:[%s2792] sm:$0xff]
        %v2794 = vld [vmem:[%s2792 + $0x8] sm:$0xff]
        %v2795 = vld [vmem:[%s2792 + $0x10] sm:$0xff]
        %v2796 = vld [vmem:[%s2792 + $0x18] sm:$0xff]
        %v2797 = vld [vmem:[%s2792 + $0x20] sm:$0xff]
        %v2798 = vld [vmem:[%s2792 + $0x28] sm:$0xff]
        %v2799 = vld [vmem:[%s2792 + $0x30] sm:$0xff]
        %v2800 = vld [vmem:[%s2792 + $0x38] sm:$0xff]
        %v2801 = vld [vmem:[%s2792 + $0x40] sm:$0xff]
        %v2802 = vld [vmem:[%s2792 + $0x48] sm:$0xff]
        %v2804 = vsel %vm2558, %v2791, 0
        %2806 = vmatprep.subr.mxu0 0.0
        %2807 = vmatpush1.msra.mxu0 %v2793
        %2808 = vmatprep.subr.mxu0 0.0
        %2809 = vmatpush1.msra.mxu0 %v2794
        %2810 = vmatprep.subr.mxu0 0.0
        %2811 = vmatpush1.msra.mxu0 %v2795
        %2812 = vmatprep.subr.mxu0 0.0
        %2813 = vmatpush1.msra.mxu0 %v2796
        %2814 = vmatprep.subr.mxu0 0.0
        %2815 = vmatpush1.msra.mxu0 %v2797
        %2816 = vmatprep.subr.mxu0 0.0
        %2817 = vmatpush1.msra.mxu0 %v2798
        %2818 = vmatprep.subr.mxu0 0.0
        %2819 = vmatpush1.msra.mxu0 %v2799
        %2820 = vmatprep.subr.mxu0 0.0
        %2821 = vmatpush1.msra.mxu0 %v2800
        %2822 = vmatprep.subr.mxu0 0.0
        %2823 = vmatpush1.msra.mxu0 %v2801
        %2824 = vmatprep.subr.mxu0 0.0
        %2825 = vmatpush1.msra.mxu0 %v2802
        %2826 = vmatprep.subr.mxu0 0.0
        %2827 = vmatpush1.msra.mxu0 0.0
        %2828 = vmatprep.subr.mxu0 0.0
        %2829 = vmatpush1.msra.mxu0 0.0
        %2830 = vmatprep.subr.mxu0 0.0
        %2831 = vmatpush1.msra.mxu0 0.0
        %2832 = vmatprep.subr.mxu0 0.0
        %2833 = vmatpush1.msra.mxu0 0.0
        %2834 = vmatprep.subr.mxu0 0.0
        %2835 = vmatpush1.msra.mxu0 0.0
        %2836 = vmatprep.subr.mxu0 0.0
        %2837 = vmatpush1.msra.mxu0 0.0
        %2838 = vmatprep.subr.mxu0 0.0
        %2839 = vmatpush1.msra.mxu0 0.0
        %2840 = vmatprep.subr.mxu0 0.0
        %2841 = vmatpush1.msra.mxu0 0.0
        %2842 = vmatprep.subr.mxu0 0.0
        %2843 = vmatpush1.msra.mxu0 0.0
        %2844 = vmatprep.subr.mxu0 0.0
        %2845 = vmatpush1.msra.mxu0 0.0
        %2846 = vmatprep.subr.mxu0 0.0
        %2847 = vmatpush1.msra.mxu0 0.0
        %2848 = vmatprep.subr.mxu0 0.0
        %2849 = vmatpush1.msra.mxu0 0.0
        %2850 = vmatprep.subr.mxu0 0.0
        %2851 = vmatpush1.msra.mxu0 0.0
        %2852 = vmatprep.subr.mxu0 0.0
        %2853 = vmatpush1.msra.mxu0 0.0
        %2854 = vmatprep.subr.mxu0 0.0
        %2855 = vmatpush1.msra.mxu0 0.0
        %2856 = vmatprep.subr.mxu0 0.0
        %2857 = vmatpush1.msra.mxu0 0.0
        %2858 = vmatprep.subr.mxu0 0.0
        %2859 = vmatpush1.msra.mxu0 0.0
        %2860 = vmatprep.subr.mxu0 0.0
        %2861 = vmatpush1.msra.mxu0 0.0
        %2862 = vmatprep.subr.mxu0 0.0
        %2863 = vmatpush1.msra.mxu0 0.0
        %2864 = vmatprep.subr.mxu0 0.0
        %2865 = vmatpush1.msra.mxu0 0.0
        %2866 = vmatprep.subr.mxu0 0.0
        %2867 = vmatpush1.msra.mxu0 0.0
        %2868 = vmatprep.subr.mxu0 0.0
        %2869 = vmatpush1.msra.mxu0 0.0
        %2870 = vmatprep.mubr.f32.mxu0 0.0
        %2871 = vmatmul.mubr.f32.gmra.mrb[0].mxu0 %v2804
        %v2872 = vpop.f32.mrb[0].mxu0
        %v2873 = vadd.f32 0.0, %v2872
        %v2874 = vpop.f32.mrb[0].mxu0
        %2875 = vdwg.mxu0
        %v2876 = vadd.f32 %v2790, %v2873
        %v2877 = vld [vmem:[#allocation3 + $0x4] sm:$0x1]
        %s2878 = scalar_lea.vmem %s9, 320
        %v2879 = vld [vmem:[%s2878] sm:$0xff]
        %v2880 = vld [vmem:[%s2878 + $0x8] sm:$0xff]
        %v2881 = vld [vmem:[%s2878 + $0x10] sm:$0xff]
        %v2882 = vld [vmem:[%s2878 + $0x18] sm:$0xff]
        %v2883 = vld [vmem:[%s2878 + $0x20] sm:$0xff]
        %v2884 = vld [vmem:[%s2878 + $0x28] sm:$0xff]
        %v2885 = vld [vmem:[%s2878 + $0x30] sm:$0xff]
        %v2886 = vld [vmem:[%s2878 + $0x38] sm:$0xff]
        %v2887 = vld [vmem:[%s2878 + $0x40] sm:$0xff]
        %v2888 = vld [vmem:[%s2878 + $0x48] sm:$0xff]
        %v2890 = vsel %vm2558, %v2877, 0
        %2892 = vmatprep.subr.mxu0 0.0
        %2893 = vmatpush1.msra.mxu0 %v2879
        %2894 = vmatprep.subr.mxu0 0.0
        %2895 = vmatpush1.msra.mxu0 %v2880
        %2896 = vmatprep.subr.mxu0 0.0
        %2897 = vmatpush1.msra.mxu0 %v2881
        %2898 = vmatprep.subr.mxu0 0.0
        %2899 = vmatpush1.msra.mxu0 %v2882
        %2900 = vmatprep.subr.mxu0 0.0
        %2901 = vmatpush1.msra.mxu0 %v2883
        %2902 = vmatprep.subr.mxu0 0.0
        %2903 = vmatpush1.msra.mxu0 %v2884
        %2904 = vmatprep.subr.mxu0 0.0
        %2905 = vmatpush1.msra.mxu0 %v2885
        %2906 = vmatprep.subr.mxu0 0.0
        %2907 = vmatpush1.msra.mxu0 %v2886
        %2908 = vmatprep.subr.mxu0 0.0
        %2909 = vmatpush1.msra.mxu0 %v2887
        %2910 = vmatprep.subr.mxu0 0.0
        %2911 = vmatpush1.msra.mxu0 %v2888
        %2912 = vmatprep.subr.mxu0 0.0
        %2913 = vmatpush1.msra.mxu0 0.0
        %2914 = vmatprep.subr.mxu0 0.0
        %2915 = vmatpush1.msra.mxu0 0.0
        %2916 = vmatprep.subr.mxu0 0.0
        %2917 = vmatpush1.msra.mxu0 0.0
        %2918 = vmatprep.subr.mxu0 0.0
        %2919 = vmatpush1.msra.mxu0 0.0
        %2920 = vmatprep.subr.mxu0 0.0
        %2921 = vmatpush1.msra.mxu0 0.0
        %2922 = vmatprep.subr.mxu0 0.0
        %2923 = vmatpush1.msra.mxu0 0.0
        %2924 = vmatprep.subr.mxu0 0.0
        %2925 = vmatpush1.msra.mxu0 0.0
        %2926 = vmatprep.subr.mxu0 0.0
        %2927 = vmatpush1.msra.mxu0 0.0
        %2928 = vmatprep.subr.mxu0 0.0
        %2929 = vmatpush1.msra.mxu0 0.0
        %2930 = vmatprep.subr.mxu0 0.0
        %2931 = vmatpush1.msra.mxu0 0.0
        %2932 = vmatprep.subr.mxu0 0.0
        %2933 = vmatpush1.msra.mxu0 0.0
        %2934 = vmatprep.subr.mxu0 0.0
        %2935 = vmatpush1.msra.mxu0 0.0
        %2936 = vmatprep.subr.mxu0 0.0
        %2937 = vmatpush1.msra.mxu0 0.0
        %2938 = vmatprep.subr.mxu0 0.0
        %2939 = vmatpush1.msra.mxu0 0.0
        %2940 = vmatprep.subr.mxu0 0.0
        %2941 = vmatpush1.msra.mxu0 0.0
        %2942 = vmatprep.subr.mxu0 0.0
        %2943 = vmatpush1.msra.mxu0 0.0
        %2944 = vmatprep.subr.mxu0 0.0
        %2945 = vmatpush1.msra.mxu0 0.0
        %2946 = vmatprep.subr.mxu0 0.0
        %2947 = vmatpush1.msra.mxu0 0.0
        %2948 = vmatprep.subr.mxu0 0.0
        %2949 = vmatpush1.msra.mxu0 0.0
        %2950 = vmatprep.subr.mxu0 0.0
        %2951 = vmatpush1.msra.mxu0 0.0
        %2952 = vmatprep.subr.mxu0 0.0
        %2953 = vmatpush1.msra.mxu0 0.0
        %2954 = vmatprep.subr.mxu0 0.0
        %2955 = vmatpush1.msra.mxu0 0.0
        %2956 = vmatprep.mubr.f32.mxu0 0.0
        %2957 = vmatmul.mubr.f32.gmra.mrb[0].mxu0 %v2890
        %v2958 = vpop.f32.mrb[0].mxu0
        %v2959 = vadd.f32 0.0, %v2958
        %v2960 = vpop.f32.mrb[0].mxu0
        %2961 = vdwg.mxu0
        %v2962 = vadd.f32 %v2876, %v2959
        %v2963 = vld [vmem:[%s10] sm:$0x1]
        %v2964 = vadd.f32 %v2962, %v2963
        %v2965 = vmax.f32 %v2964, 0.0
        %v2966 = vld [vmem:[%s11] sm:$0xff]
        %v2967 = vld [vmem:[%s11 + $0x8] sm:$0xff]
        %v2968 = vld [vmem:[%s11 + $0x10] sm:$0xff]
        %v2969 = vld [vmem:[%s11 + $0x18] sm:$0xff]
        %v2970 = vld [vmem:[%s11 + $0x20] sm:$0xff]
        %v2971 = vld [vmem:[%s11 + $0x28] sm:$0xff]
        %v2972 = vld [vmem:[%s11 + $0x30] sm:$0xff]
        %v2973 = vld [vmem:[%s11 + $0x38] sm:$0xff]
        %v2974 = vld [vmem:[%s11 + $0x40] sm:$0xff]
        %v2975 = vld [vmem:[%s11 + $0x48] sm:$0xff]
        %v2976 = vld [vmem:[%s11 + $0x50] sm:$0xff]
        %v2977 = vld [vmem:[%s11 + $0x58] sm:$0xff]
        %v2978 = vld [vmem:[%s11 + $0x60] sm:$0xff]
        %v2979 = vld [vmem:[%s11 + $0x68] sm:$0xff]
        %v2980 = vld [vmem:[%s11 + $0x70] sm:$0xff]
        %v2981 = vld [vmem:[%s12] sm:$0x1]
        %vm2982 = vcmask 982016
        %v2984 = vsel %vm2982, %v2965, 0
        %2986 = vmatprep.subr.mxu0 0.0
        %2987 = vmatpush1.msra.mxu0 %v2966
        %2988 = vmatprep.subr.mxu0 0.0
        %2989 = vmatpush1.msra.mxu0 %v2967
        %2990 = vmatprep.subr.mxu0 0.0
        %2991 = vmatpush1.msra.mxu0 %v2968
        %2992 = vmatprep.subr.mxu0 0.0
        %2993 = vmatpush1.msra.mxu0 %v2969
        %2994 = vmatprep.subr.mxu0 0.0
        %2995 = vmatpush1.msra.mxu0 %v2970
        %2996 = vmatprep.subr.mxu0 0.0
        %2997 = vmatpush1.msra.mxu0 %v2971
        %2998 = vmatprep.subr.mxu0 0.0
        %2999 = vmatpush1.msra.mxu0 %v2972
        %3000 = vmatprep.subr.mxu0 0.0
        %3001 = vmatpush1.msra.mxu0 %v2973
        %3002 = vmatprep.subr.mxu0 0.0
        %3003 = vmatpush1.msra.mxu0 %v2974
        %3004 = vmatprep.subr.mxu0 0.0
        %3005 = vmatpush1.msra.mxu0 %v2975
        %3006 = vmatprep.subr.mxu0 0.0
        %3007 = vmatpush1.msra.mxu0 %v2976
        %3008 = vmatprep.subr.mxu0 0.0
        %3009 = vmatpush1.msra.mxu0 %v2977
        %3010 = vmatprep.subr.mxu0 0.0
        %3011 = vmatpush1.msra.mxu0 %v2978
        %3012 = vmatprep.subr.mxu0 0.0
        %3013 = vmatpush1.msra.mxu0 %v2979
        %3014 = vmatprep.subr.mxu0 0.0
        %3015 = vmatpush1.msra.mxu0 %v2980
        %3016 = vmatprep.subr.mxu0 0.0
        %3017 = vmatpush1.msra.mxu0 0.0
        %3018 = vmatprep.subr.mxu0 0.0
        %3019 = vmatpush1.msra.mxu0 0.0
        %3020 = vmatprep.subr.mxu0 0.0
        %3021 = vmatpush1.msra.mxu0 0.0
        %3022 = vmatprep.subr.mxu0 0.0
        %3023 = vmatpush1.msra.mxu0 0.0
        %3024 = vmatprep.subr.mxu0 0.0
        %3025 = vmatpush1.msra.mxu0 0.0
        %3026 = vmatprep.subr.mxu0 0.0
        %3027 = vmatpush1.msra.mxu0 0.0
        %3028 = vmatprep.subr.mxu0 0.0
        %3029 = vmatpush1.msra.mxu0 0.0
        %3030 = vmatprep.subr.mxu0 0.0
        %3031 = vmatpush1.msra.mxu0 0.0
        %3032 = vmatprep.subr.mxu0 0.0
        %3033 = vmatpush1.msra.mxu0 0.0
        %3034 = vmatprep.subr.mxu0 0.0
        %3035 = vmatpush1.msra.mxu0 0.0
        %3036 = vmatprep.subr.mxu0 0.0
        %3037 = vmatpush1.msra.mxu0 0.0
        %3038 = vmatprep.subr.mxu0 0.0
        %3039 = vmatpush1.msra.mxu0 0.0
        %3040 = vmatprep.subr.mxu0 0.0
        %3041 = vmatpush1.msra.mxu0 0.0
        %3042 = vmatprep.subr.mxu0 0.0
        %3043 = vmatpush1.msra.mxu0 0.0
        %3044 = vmatprep.subr.mxu0 0.0
        %3045 = vmatpush1.msra.mxu0 0.0
        %3046 = vmatprep.subr.mxu0 0.0
        %3047 = vmatpush1.msra.mxu0 0.0
        %3048 = vmatprep.subr.mxu0 0.0
        %3049 = vmatpush1.msra.mxu0 0.0
        %3050 = vmatprep.mubr.f32.mxu0 0.0
        %3051 = vmatmul.mubr.f32.gmra.mrb[0].mxu0 %v2984
        %v3052 = vpop.f32.mrb[0].mxu0
        %v3053 = vadd.f32 %v2981, %v3052
        %v3054 = vpop.f32.mrb[0].mxu0
        %3055 = vdwg.mxu0
        %v3056 = vmax.f32 %v3053, 0.0
        %v3057 = vld [vmem:[%s13] sm:$0xff]
        %v3058 = vld [vmem:[%s13 + $0x8] sm:$0xff]
        %v3059 = vld [vmem:[%s13 + $0x10] sm:$0xff]
        %v3060 = vld [vmem:[%s13 + $0x18] sm:$0xff]
        %v3061 = vld [vmem:[%s13 + $0x20] sm:$0xff]
        %v3062 = vld [vmem:[%s13 + $0x28] sm:$0xff]
        %v3063 = vld [vmem:[%s13 + $0x30] sm:$0xff]
        %v3064 = vld [vmem:[%s13 + $0x38] sm:$0xff]
        %v3065 = vld [vmem:[%s13 + $0x40] sm:$0xff]
        %v3066 = vld [vmem:[%s13 + $0x48] sm:$0xff]
        %v3067 = vld [vmem:[%s13 + $0x50] sm:$0xf]
        %v3068 = vld [vmem:[%s14] sm:$0x1]
        %v3070 = vsel %vm1581, %v3056, 0
        %v3073 = vsel %vm1205, %v3067, 0
        %3075 = vmatprep.subr.mxu0 0.0
        %3076 = vmatpush1.msra.mxu0 %v3057
        %3077 = vmatprep.subr.mxu0 0.0
        %3078 = vmatpush1.msra.mxu0 %v3058
        %3079 = vmatprep.subr.mxu0 0.0
        %3080 = vmatpush1.msra.mxu0 %v3059
        %3081 = vmatprep.subr.mxu0 0.0
        %3082 = vmatpush1.msra.mxu0 %v3060
        %3083 = vmatprep.subr.mxu0 0.0
        %3084 = vmatpush1.msra.mxu0 %v3061
        %3085 = vmatprep.subr.mxu0 0.0
        %3086 = vmatpush1.msra.mxu0 %v3062
        %3087 = vmatprep.subr.mxu0 0.0
        %3088 = vmatpush1.msra.mxu0 %v3063
        %3089 = vmatprep.subr.mxu0 0.0
        %3090 = vmatpush1.msra.mxu0 %v3064
        %3091 = vmatprep.subr.mxu0 0.0
        %3092 = vmatpush1.msra.mxu0 %v3065
        %3093 = vmatprep.subr.mxu0 0.0
        %3094 = vmatpush1.msra.mxu0 %v3066
        %3095 = vmatprep.subr.mxu0 0.0
        %3096 = vmatpush1.msra.mxu0 %v3073
        %3097 = vmatprep.subr.mxu0 0.0
        %3098 = vmatpush1.msra.mxu0 0.0
        %3099 = vmatprep.subr.mxu0 0.0
        %3100 = vmatpush1.msra.mxu0 0.0
        %3101 = vmatprep.subr.mxu0 0.0
        %3102 = vmatpush1.msra.mxu0 0.0
        %3103 = vmatprep.subr.mxu0 0.0
        %3104 = vmatpush1.msra.mxu0 0.0
        %3105 = vmatprep.subr.mxu0 0.0
        %3106 = vmatpush1.msra.mxu0 0.0
        %3107 = vmatprep.subr.mxu0 0.0
        %3108 = vmatpush1.msra.mxu0 0.0
        %3109 = vmatprep.subr.mxu0 0.0
        %3110 = vmatpush1.msra.mxu0 0.0
        %3111 = vmatprep.subr.mxu0 0.0
        %3112 = vmatpush1.msra.mxu0 0.0
        %3113 = vmatprep.subr.mxu0 0.0
        %3114 = vmatpush1.msra.mxu0 0.0
        %3115 = vmatprep.subr.mxu0 0.0
        %3116 = vmatpush1.msra.mxu0 0.0
        %3117 = vmatprep.subr.mxu0 0.0
        %3118 = vmatpush1.msra.mxu0 0.0
        %3119 = vmatprep.subr.mxu0 0.0
        %3120 = vmatpush1.msra.mxu0 0.0
        %3121 = vmatprep.subr.mxu0 0.0
        %3122 = vmatpush1.msra.mxu0 0.0
        %3123 = vmatprep.subr.mxu0 0.0
        %3124 = vmatpush1.msra.mxu0 0.0
        %3125 = vmatprep.subr.mxu0 0.0
        %3126 = vmatpush1.msra.mxu0 0.0
        %3127 = vmatprep.subr.mxu0 0.0
        %3128 = vmatpush1.msra.mxu0 0.0
        %3129 = vmatprep.subr.mxu0 0.0
        %3130 = vmatpush1.msra.mxu0 0.0
        %3131 = vmatprep.subr.mxu0 0.0
        %3132 = vmatpush1.msra.mxu0 0.0
        %3133 = vmatprep.subr.mxu0 0.0
        %3134 = vmatpush1.msra.mxu0 0.0
        %3135 = vmatprep.subr.mxu0 0.0
        %3136 = vmatpush1.msra.mxu0 0.0
        %3137 = vmatprep.subr.mxu0 0.0
        %3138 = vmatpush1.msra.mxu0 0.0
        %3139 = vmatprep.mubr.f32.mxu0 0.0
        %3140 = vmatmul.mubr.f32.gmra.mrb[0].mxu0 %v3070
        %v3141 = vpop.f32.mrb[0].mxu0
        %v3142 = vadd.f32 %v3068, %v3141
        %v3143 = vpop.f32.mrb[0].mxu0
        %3144 = vdwg.mxu0
        %vm3145 = vcmask 73728
        %3146 = vst.msk [vmem:[%s487] sm:$0x1] %vm3145, %v3142
        %s3147 = sand.u32 %s357, 1
        %s3148 = scalar_lea.sflag [#allocation5], %s3147
        %s3149 = sand.u32 %s357, 1
        %s3150 = scalar_lea.vmem [#allocation4], %s3149
        // Predicated region
        $region81: #{simple_cnn_forward.1} parent=79 // pred_check
          %p3151 = pneg %p367
        $region82: #{simple_cnn_forward.1} parent=79 // pred_check_branch
          %3153 = sbr.rel (%p3151) target = $region84
        $region83: #{simple_cnn_forward.1} parent=79 // pred_region
          %s3155 = ssub.s32 16, 16
          %3156 = vsyncadd %s3148, %s3155
          %s3157 = smul.addr %s29, 16
          %s3158 = scalar_lea.hbm %s15, %s3157
          %s3160 = sshll.u32 %s3150, 4
          %s3161 = int_to_ptr.vmem [resolvable:$true] %s3160
          %3163 = dma.vmem_to_hbm [thread:$0]  %s3161, 16, %s3158, %s3148
        $region84: #{simple_cnn_forward.1} parent=79 // pred_fallthru
          _
      $region80: #{simple_cnn_forward.1} parent=5 // pred_fallthru
        _
      %p3164 = scmp.le.s32.totalorder 2, %s24
      // Predicated region
      $region85: #{simple_cnn_forward.1} parent=5 // pred_check
        %p3165 = pneg %p3164
      $region86: #{simple_cnn_forward.1} parent=5 // pred_check_branch
        %3167 = sbr.rel (%p3165) target = $region88
      $region87: #{simple_cnn_forward.1} parent=5 // pred_region
        %s3168 = ssub.s32 %s24, 2
        // Predicated region
        $region89: #{simple_cnn_forward.1} parent=87 // pred_check
          %p3169 = pneg %p373
        $region90: #{simple_cnn_forward.1} parent=87 // pred_check_branch
          %3171 = sbr.rel (%p3169) target = $region92
        $region91: #{simple_cnn_forward.1} parent=87 // pred_region
          %s3172 = sand.u32 %s358, 1
          %s3173 = scalar_lea.sflag [#allocation5], %s3172
          %s3174 = sand.u32 %s358, 1
          %s3175 = scalar_lea.vmem [#allocation4], %s3174
          %3176 = dma.done %s3173, 16
        $region92: #{simple_cnn_forward.1} parent=87 // pred_fallthru
          _
      $region88: #{simple_cnn_forward.1} parent=5 // pred_fallthru
        _
    $region6: #{simple_cnn_forward.1} parent=1 // loop_footer
      %s28 = sadd.s32 1, %s24
    $region7: #{simple_cnn_forward.1} parent=1 // loop_footer_branch
      %23 = sbr.rel target = $region3
    $region8: #{simple_cnn_forward.1} parent=1 // loop_exit
      _
    %3177 = vsyncpa [#allocation5], 1
    %s3178 = scalar_lea.sflag [#allocation5], 1
    %3179 = vsyncpa %s3178, 1

</llo_original>
